<compile_context>
chip_gen: v7x
topology: tpu7x:2x2x1
jax: 0.10.0
libtpu: 0.0.40
codegen_flags: <defaults>
</compile_context>

<pallas_src>
import functools

import jax
import jax.numpy as jnp
from jax import lax
from jax.experimental import pallas as pl
from jax.experimental.pallas import tpu as pltpu


# ----------------------------------------------------------------------------
# Pallas kernel: one bidirectional LSTM layer, both directions per grid step.
# Gate order matches PyTorch: [i, f, g, o].
# ----------------------------------------------------------------------------
def _bilstm_kernel(gin_f_ref, gin_r_ref, whh_ref, out_f_ref, out_r_ref, cN_ref,
                   h_sc, c_sc, *, unroll):
    """One grid step = one time-chunk, BOTH directions.

    gin_f_ref: (chunk, B, 4H) f32  forward preactivations x@W_ih^T + b, time order.
    gin_r_ref: (chunk, B, 4H) f32  reverse preactivations; BlockSpec already delivers the
                                   time-reversed chunk, walked backwards with static chunk-1-s.
    whh_ref:   (2H, 8H) bf16       block-diagonal [[Whh_f^T, 0], [0, Whh_r^T]].
    out_f/out_r_ref: (chunk, B, H) f32 per-direction hidden outputs.
    cN_ref:    (B, 2H) f32         resident final cell state [c_fwd | c_rev].
    h_sc/c_sc: (B, 2H) f32         recurrent state carried across chunks.
    """
    c = pl.program_id(0)
    chunk = gin_f_ref.shape[0]
    H = out_f_ref.shape[-1]

    @pl.when(c == 0)
    def _():
        h_sc[...] = jnp.zeros_like(h_sc)
        c_sc[...] = jnp.zeros_like(c_sc)

    w_hh = whh_ref[...]                      # resident (same block every step), load once

    def cell(sig, th, c_prev):
        # Slices of already-activated full slabs (i/f/o from sigmoid, g from tanh).
        i_g = sig[:, 0 * H:1 * H]
        f_g = sig[:, 1 * H:2 * H]
        g_g = th[:, 2 * H:3 * H]
        o_g = sig[:, 3 * H:4 * H]
        c_new = f_g * c_prev + i_g * g_g
        h_new = o_g * jnp.tanh(c_new)
        return h_new, c_new

    def step(s, carry):
        h, c_state = carry                   # (B, 2H) f32 each
        # One block-diagonal MXU pass covers both directions: (B,2H) x (2H,8H), N = 256.
        gates_hh = jnp.dot(h.astype(jnp.bfloat16), w_hh,
                           preferred_element_type=jnp.float32)          # (B, 8H) f32
        g_f = gin_f_ref[s] + gates_hh[:, :4 * H]            # lane-aligned 128-wide slices
        g_r = gin_r_ref[chunk - 1 - s] + gates_hh[:, 4 * H:]
        # Full-slab activations, then slice (no masked sub-slice EUP passes).
        h_f, c_f = cell(jax.nn.sigmoid(g_f), jnp.tanh(g_f), c_state[:, :H])
        h_r, c_r = cell(jax.nn.sigmoid(g_r), jnp.tanh(g_r), c_state[:, H:])
        out_f_ref[s] = h_f
        out_r_ref[chunk - 1 - s] = h_r
        return (jnp.concatenate([h_f, h_r], axis=-1),
                jnp.concatenate([c_f, c_r], axis=-1))

    h_fin, c_fin = lax.fori_loop(0, chunk, step, (h_sc[...], c_sc[...]),
                                 unroll=unroll)
    h_sc[...] = h_fin
    c_sc[...] = c_fin

    @pl.when(c == pl.num_programs(0) - 1)
    def _():
        cN_ref[...] = c_fin


def bilstm_layer(gin_f, gin_r, whh, chunk):
    """Both directions of one LSTM layer in a single Pallas kernel.

    gin_f, gin_r: (Tp, B, 4H) f32 precomputed preactivations per direction (Tp = nc*chunk).
    whh:          (2H, 8H) bf16 block-diagonal recurrent weight.
    Returns out_f, out_r (Tp, B, H) f32 and cN (B, 2H) f32.
    """
    Tp, B, G = gin_f.shape
    H = G // 4
    nc = Tp // chunk
    unroll = True if chunk <= 32 else 8       # partial unroll for big chunks (code size)

    kernel = functools.partial(_bilstm_kernel, unroll=unroll)
    out_f, out_r, cN = pl.pallas_call(
        kernel,
        out_shape=(jax.ShapeDtypeStruct((Tp, B, H), jnp.float32),
                   jax.ShapeDtypeStruct((Tp, B, H), jnp.float32),
                   jax.ShapeDtypeStruct((B, 2 * H), jnp.float32)),
        grid_spec=pltpu.PrefetchScalarGridSpec(
            num_scalar_prefetch=0,
            grid=(nc,),
            in_specs=[
                pl.BlockSpec((chunk, B, G), lambda c: (c, 0, 0)),
                pl.BlockSpec((chunk, B, G), lambda c: (nc - 1 - c, 0, 0)),  # time-reversed
                pl.BlockSpec((2 * H, 8 * H), lambda c: (0, 0)),             # resident
            ],
            out_specs=[
                pl.BlockSpec((chunk, B, H), lambda c: (c, 0, 0)),
                pl.BlockSpec((chunk, B, H), lambda c: (nc - 1 - c, 0, 0)),  # time-reversed
                pl.BlockSpec((B, 2 * H), lambda c: (0, 0)),                 # resident cN
            ],
            scratch_shapes=[pltpu.VMEM((B, 2 * H), jnp.float32),
                            pltpu.VMEM((B, 2 * H), jnp.float32)]),
        compiler_params=pltpu.CompilerParams(
            dimension_semantics=("arbitrary",),       # chunk axis carries the recurrence
            vmem_limit_bytes=32 * 1024 * 1024),
    )(gin_f, gin_r, whh)
    return out_f, out_r, cN


# ----------------------------------------------------------------------------
# Glue: chunk sizing, time padding, fused input projection, layer stacking.
# ----------------------------------------------------------------------------
def _pick_chunk(T, B, H, *, vmem_budget_bytes=16 * 1024 * 1024, cap=512):
    """Largest time-chunk whose double-buffered streaming blocks fit the budget.

    Streaming bytes per unit of chunk (x2 double buffering):
      gin_f + gin_r : 2 * B * 4H * 4 (f32);   out_f + out_r : 2 * B * H * 4 (f32).
    16 MiB is ~half the 32 MiB scoped VMEM default and safe on v7x (64 MiB physical).
    """
    per_unit = 2 * (2 * B * 4 * H * 4 + 2 * B * H * 4)
    chunk = int(max(8, min(cap, vmem_budget_bytes // max(per_unit, 1))))
    return max(1, min(chunk, T))


def _identity_gate_pad(n, B, H, dtype):
    # Gate preactivations that make an LSTM step the identity on c and keep h ~ 0:
    # i = sigmoid(-40) (exact 0 contribution since g = tanh(0) = 0), f = sigmoid(40) = 1.0
    # exactly in f32, o = sigmoid(-40).  Padded fwd tail preserves c bit-exactly; padded rev
    # warm-up keeps (h, c) at exactly zero.
    row = jnp.concatenate([jnp.full((H,), -40.0, dtype), jnp.full((H,), 40.0, dtype),
                           jnp.zeros((H,), dtype), jnp.full((H,), -40.0, dtype)])
    return jnp.broadcast_to(row, (n, B, 4 * H))


def init_encoder_params(key, vocab_size, pad_idx, emb_dim, hidden_dim, n_layers):
    params = {}
    key, k_emb = jax.random.split(key)
    emb = jax.random.normal(k_emb, (vocab_size, emb_dim), jnp.float32)
    emb = emb.at[pad_idx].set(0.0)            # padding_idx row is zero
    params["embedding"] = emb

    bound = float(1.0 / (hidden_dim ** 0.5))
    for l in range(n_layers):
        in_size = emb_dim if l == 0 else 2 * hidden_dim
        for suffix in ("", "_reverse"):
            for name, shape in (("weight_ih", (4 * hidden_dim, in_size)),
                                ("weight_hh", (4 * hidden_dim, hidden_dim)),
                                ("bias_ih", (4 * hidden_dim,)),
                                ("bias_hh", (4 * hidden_dim,))):
                key, sub = jax.random.split(key)
                params[f"{name}_l{l}{suffix}"] = jax.random.uniform(
                    sub, shape, jnp.float32, -bound, bound)
    return params


def encoder_forward(src, params, n_layers, hidden_dim, *, chunk=None):
    T, B = src.shape
    H = hidden_dim

    # Embedding lookup (XLA gather glue).
    # TODO(synk): nn.Dropout treated as identity (eval-mode semantics); training-mode dropout
    # would need pltpu PRNG masks between layers.
    x = params["embedding"][src].astype(jnp.float32)            # (T, B, E)

    # Pad batch to a sublane multiple of 8; padded rows never mix with real rows.
    Bp = ((B + 7) // 8) * 8
    if Bp != B:
        x = jnp.pad(x, ((0, 0), (0, Bp - B), (0, 0)))

    if chunk is None:
        chunk = _pick_chunk(T, Bp, H)
    else:
        chunk = max(1, min(int(chunk), T))
    Tp = ((T + chunk - 1) // chunk) * chunk                     # pad T to a chunk multiple

    hiddens, cells = [], []
    for l in range(n_layers):
        # Fused input projection: both directions in ONE bf16 einsum (N = 8H), f32 accumulate.
        w_f, w_r = params[f"weight_ih_l{l}"], params[f"weight_ih_l{l}_reverse"]
        b_f = params[f"bias_ih_l{l}"] + params[f"bias_hh_l{l}"]
        b_r = params[f"bias_ih_l{l}_reverse"] + params[f"bias_hh_l{l}_reverse"]
        w_ih = jnp.concatenate([w_f, w_r], axis=0).T.astype(jnp.bfloat16)   # (in, 8H)
        bias = jnp.concatenate([b_f, b_r], axis=0).astype(jnp.float32)      # (8H,)
        gin = jnp.einsum('tbk,kg->tbg', x.astype(jnp.bfloat16), w_ih,
                         preferred_element_type=jnp.float32) + bias          # (T, Bp, 8H) f32
        gin_f, gin_r = gin[..., :4 * H], gin[..., 4 * H:]

        if Tp != T:
            pad = _identity_gate_pad(Tp - T, Bp, H, jnp.float32)
            gin_f = jnp.concatenate([gin_f, pad], axis=0)
            gin_r = jnp.concatenate([gin_r, pad], axis=0)

        # Block-diagonal recurrent weight: one (B,2H) x (2H,8H) MXU pass per timestep.
        whh_f = params[f"weight_hh_l{l}"].T                     # (H, 4H)
        whh_r = params[f"weight_hh_l{l}_reverse"].T
        z = jnp.zeros((H, 4 * H), jnp.float32)
        whh = jnp.concatenate([jnp.concatenate([whh_f, z], axis=1),
                               jnp.concatenate([z, whh_r], axis=1)],
                              axis=0).astype(jnp.bfloat16)      # (2H, 8H)

        out_f, out_r, cN = bilstm_layer(gin_f, gin_r, whh, chunk)
        out_f, out_r = out_f[:T], out_r[:T]
        hiddens += [out_f[T - 1], out_r[0]]                     # final hidden states
        cells += [cN[:, :H], cN[:, H:]]                         # final cell states
        x = jnp.concatenate([out_f, out_r], axis=-1)            # (T, Bp, 2H) next-layer input

    outputs = x                                                 # top layer only (torch)
    hidden = jnp.stack(hiddens, axis=0)                         # (n_layers*2, Bp, H)
    cell = jnp.stack(cells, axis=0)
    return outputs[:, :B], hidden[:, :B], cell[:, :B]


# ----------------------------------------------------------------------------
# Pure-JAX reference (lax.scan), same numerics (bf16 MXU operands, f32 math).
# ----------------------------------------------------------------------------
def _ref_bilstm_dir(x, w_ih, w_hh, bias, reverse):
    T, B, _ = x.shape
    H = w_hh.shape[1]
    gin = jnp.einsum('tbk,kg->tbg', x.astype(jnp.bfloat16),
                     w_ih.T.astype(jnp.bfloat16),
                     preferred_element_type=jnp.float32) + bias
    if reverse:
        gin = gin[::-1]
    whh_t = w_hh.T.astype(jnp.bfloat16)

    def step(carry, g):
        h, c = carry
        gates = g + jnp.dot(h.astype(jnp.bfloat16), whh_t,
                            preferred_element_type=jnp.float32)
        i = jax.nn.sigmoid(gates[:, 0 * H:1 * H])
        f = jax.nn.sigmoid(gates[:, 1 * H:2 * H])
        gg = jnp.tanh(gates[:, 2 * H:3 * H])
        o = jax.nn.sigmoid(gates[:, 3 * H:4 * H])
        c = f * c + i * gg
        h = o * jnp.tanh(c)
        return (h, c), h

    init = (jnp.zeros((B, H), jnp.float32), jnp.zeros((B, H), jnp.float32))
    (hN, cN), hs = lax.scan(step, init, gin)
    if reverse:
        hs = hs[::-1]
    return hs, hN, cN


def encoder_forward_ref(src, params, n_layers, hidden_dim):
    x = params["embedding"][src].astype(jnp.float32)
    hiddens, cells = [], []
    for l in range(n_layers):
        outs = []
        for d, suffix in enumerate(("", "_reverse")):
            w_ih = params[f"weight_ih_l{l}{suffix}"]
            w_hh = params[f"weight_hh_l{l}{suffix}"]
            bias = params[f"bias_ih_l{l}{suffix}"] + params[f"bias_hh_l{l}{suffix}"]
            hs, hN, cN = _ref_bilstm_dir(x, w_ih, w_hh, bias, reverse=(d == 1))
            outs.append(hs)
            hiddens.append(hN)
            cells.append(cN)
        x = jnp.concatenate(outs, axis=-1)
    return x, jnp.stack(hiddens, axis=0), jnp.stack(cells, axis=0)


if __name__ == "__main__":
    vocab_size = 20
    pad_idx = 1
    emb_dim = 32
    hidden_dim = 32            # 4H = 128 -> lane-aligned gate slabs, 8H = 256 fused
    n_layers = 2
    seq_len = 16
    batch = 4                  # exercises the batch-padding path (padded to 8)

    key = jax.random.PRNGKey(0)
    key, k_src = jax.random.split(key)
    src = jax.random.randint(k_src, (seq_len, batch), 0, vocab_size, jnp.int32)
    params = init_encoder_params(key, vocab_size, pad_idx, emb_dim, hidden_dim, n_layers)

    ref = jax.jit(functools.partial(encoder_forward_ref,
                                    n_layers=n_layers, hidden_dim=hidden_dim))

    # Run 1: auto chunk (single chunk covers the whole sequence).
    fwd = jax.jit(functools.partial(encoder_forward,
                                    n_layers=n_layers, hidden_dim=hidden_dim))
    outputs, hidden, cell = fwd(src, params)
    jax.block_until_ready((outputs, hidden, cell))
    assert outputs.shape == (seq_len, batch, 2 * hidden_dim)
    assert hidden.shape == (n_layers * 2, batch, hidden_dim)
    assert cell.shape == (n_layers * 2, batch, hidden_dim)
    ro, rh, rc = ref(src, params)
    for a, b in ((outputs, ro), (hidden, rh), (cell, rc)):
        assert bool(jnp.all(jnp.isfinite(a)))
        assert float(jnp.max(jnp.abs(a - b))) < 1e-2, float(jnp.max(jnp.abs(a - b)))

    # Run 2: odd T with a forced small chunk -> exercises multi-chunk recurrence,
    # reversed index maps across chunks, and identity-gate time padding.
    src2 = src[:13]
    fwd2 = jax.jit(functools.partial(encoder_forward, n_layers=n_layers,
                                     hidden_dim=hidden_dim, chunk=8))
    o2, h2, c2 = fwd2(src2, params)
    jax.block_until_ready((o2, h2, c2))
    ro2, rh2, rc2 = ref(src2, params)
    for a, b in ((o2, ro2), (h2, rh2), (c2, rc2)):
        assert bool(jnp.all(jnp.isfinite(a)))
        assert float(jnp.max(jnp.abs(a - b))) < 1e-2, float(jnp.max(jnp.abs(a - b)))

    print("KERNEL_OK")
</pallas_src>

<mosaic_0001>
module attributes {stable_mosaic.version = 11 : i64} {
  func.func @_bilstm_kernel(%arg0: i32, %arg1: memref<16x8x128xf32, #tpu.memory_space<vmem>>, %arg2: memref<16x8x128xf32, #tpu.memory_space<vmem>>, %arg3: memref<64x256xbf16, #tpu.memory_space<vmem>>, %arg4: memref<16x8x32xf32, #tpu.memory_space<vmem>>, %arg5: memref<16x8x32xf32, #tpu.memory_space<vmem>>, %arg6: memref<8x64xf32, #tpu.memory_space<vmem>>, %arg7: memref<8x64xf32, #tpu.memory_space<vmem>>, %arg8: memref<8x64xf32, #tpu.memory_space<vmem>>) attributes {dimension_semantics = [#tpu.dimension_semantics<arbitrary>], iteration_bounds = array<i64: 1>, scalar_prefetch = 0 : i64, scratch_operands = 2 : i64, tpu.core_type = #tpu.core_type<tc>, window_params = [{transform_indices = @transform_0, window_bounds = array<i64: 16, 8, 128>}, {transform_indices = @transform_1, window_bounds = array<i64: 16, 8, 128>}, {pipeline_mode = #tpu.pipeline_mode<synchronous>, transform_indices = @transform_2, window_bounds = array<i64: 64, 256>}, {transform_indices = @transform_3, window_bounds = array<i64: 16, 8, 32>}, {transform_indices = @transform_4, window_bounds = array<i64: 16, 8, 32>}, {pipeline_mode = #tpu.pipeline_mode<synchronous>, transform_indices = @transform_5, window_bounds = array<i64: 8, 64>}]} {
    %c0_i32 = arith.constant 0 : i32
    %0 = arith.cmpi eq, %arg0, %c0_i32 : i32
    %1 = arith.extui %0 : i1 to i32
    %c0_i32_0 = arith.constant 0 : i32
    %2 = arith.cmpi ne, %1, %c0_i32_0 : i32
    scf.if %2 {
      %cst_220 = arith.constant 0.000000e+00 : f32
      %907 = vector.broadcast %cst_220 : f32 to vector<8x64xf32>
      %c0_221 = arith.constant 0 : index
      %c0_222 = arith.constant 0 : index
      %908 = vector.load %arg7[%c0_221, %c0_222] : memref<8x64xf32, #tpu.memory_space<vmem>>, vector<8x64xf32>
      tpu.vector_store %arg7[%c0_221, %c0_222], %907 {strides = array<i32>} : memref<8x64xf32, #tpu.memory_space<vmem>>, vector<8x64xf32>,
      %cst_223 = arith.constant 0.000000e+00 : f32
      %909 = vector.broadcast %cst_223 : f32 to vector<8x64xf32>
      %c0_224 = arith.constant 0 : index
      %c0_225 = arith.constant 0 : index
      %910 = vector.load %arg8[%c0_224, %c0_225] : memref<8x64xf32, #tpu.memory_space<vmem>>, vector<8x64xf32>
      tpu.vector_store %arg8[%c0_224, %c0_225], %909 {strides = array<i32>} : memref<8x64xf32, #tpu.memory_space<vmem>>, vector<8x64xf32>,
    } else {
    }
    %c0 = arith.constant 0 : index
    %c0_1 = arith.constant 0 : index
    %3 = vector.load %arg3[%c0, %c0_1] : memref<64x256xbf16, #tpu.memory_space<vmem>>, vector<64x256xbf16>
    %c0_2 = arith.constant 0 : index
    %c0_3 = arith.constant 0 : index
    %4 = vector.load %arg7[%c0_2, %c0_3] : memref<8x64xf32, #tpu.memory_space<vmem>>, vector<8x64xf32>
    %c0_4 = arith.constant 0 : index
    %c0_5 = arith.constant 0 : index
    %5 = vector.load %arg8[%c0_4, %c0_5] : memref<8x64xf32, #tpu.memory_space<vmem>>, vector<8x64xf32>
    %c0_i32_6 = arith.constant 0 : i32
    %6 = arith.truncf %4 : vector<8x64xf32> to vector<8x64xbf16>
    %cst = arith.constant dense<0.000000e+00> : vector<8x256xf32>
    %7 = tpu.matmul %6, %3, %cst {dimension_numbers = #tpu.dot_dimension_numbers<[1], [0], [0], [1], [0, 0, 1, 1], [], []>} : vector<8x64xbf16>, vector<64x256xbf16>, vector<8x256xf32> -> vector<8x256xf32>
    %8 = arith.index_cast %c0_i32_6 : i32 to index
    %c0_7 = arith.constant 0 : index
    %c0_8 = arith.constant 0 : index
    %9 = vector.load %arg1[%8, %c0_7, %c0_8] : memref<16x8x128xf32, #tpu.memory_space<vmem>>, vector<1x8x128xf32>
    %10 = vector.shape_cast %9 : vector<1x8x128xf32> to vector<8x128xf32>
    %11 = vector.extract_strided_slice %7 {offsets = [0, 0], sizes = [8, 128], strides = [1, 1]} : vector<8x256xf32> to vector<8x128xf32>
    %12 = arith.addf %10, %11 : vector<8x128xf32>
    %c15_i32 = arith.constant 15 : i32
    %13 = arith.subi %c15_i32, %c0_i32_6 : i32
    %14 = arith.index_cast %13 : i32 to index
    %c0_9 = arith.constant 0 : index
    %c0_10 = arith.constant 0 : index
    %15 = vector.load %arg2[%14, %c0_9, %c0_10] : memref<16x8x128xf32, #tpu.memory_space<vmem>>, vector<1x8x128xf32>
    %16 = vector.shape_cast %15 : vector<1x8x128xf32> to vector<8x128xf32>
    %17 = vector.extract_strided_slice %7 {offsets = [0, 128], sizes = [8, 128], strides = [1, 1]} : vector<8x256xf32> to vector<8x128xf32>
    %18 = arith.addf %16, %17 : vector<8x128xf32>
    %19 = arith.negf %12 : vector<8x128xf32>
    %20 = math.exp %19 : vector<8x128xf32>
    %cst_11 = arith.constant 1.000000e+00 : f32
    %21 = vector.broadcast %cst_11 : f32 to vector<8x128xf32>
    %22 = arith.addf %21, %20 : vector<8x128xf32>
    %23 = arith.divf %21, %22 : vector<8x128xf32>
    %24 = math.tanh %12 : vector<8x128xf32>
    %25 = vector.extract_strided_slice %5 {offsets = [0, 0], sizes = [8, 32], strides = [1, 1]} : vector<8x64xf32> to vector<8x32xf32>
    %26 = vector.extract_strided_slice %23 {offsets = [0, 0], sizes = [8, 32], strides = [1, 1]} : vector<8x128xf32> to vector<8x32xf32>
    %27 = vector.extract_strided_slice %23 {offsets = [0, 32], sizes = [8, 32], strides = [1, 1]} : vector<8x128xf32> to vector<8x32xf32>
    %28 = vector.extract_strided_slice %24 {offsets = [0, 64], sizes = [8, 32], strides = [1, 1]} : vector<8x128xf32> to vector<8x32xf32>
    %29 = vector.extract_strided_slice %23 {offsets = [0, 96], sizes = [8, 32], strides = [1, 1]} : vector<8x128xf32> to vector<8x32xf32>
    %30 = arith.mulf %27, %25 : vector<8x32xf32>
    %31 = arith.mulf %26, %28 : vector<8x32xf32>
    %32 = arith.addf %30, %31 : vector<8x32xf32>
    %33 = math.tanh %32 : vector<8x32xf32>
    %34 = arith.mulf %29, %33 : vector<8x32xf32>
    %35 = arith.negf %18 : vector<8x128xf32>
    %36 = math.exp %35 : vector<8x128xf32>
    %cst_12 = arith.constant 1.000000e+00 : f32
    %37 = vector.broadcast %cst_12 : f32 to vector<8x128xf32>
    %38 = arith.addf %37, %36 : vector<8x128xf32>
    %39 = arith.divf %37, %38 : vector<8x128xf32>
    %40 = math.tanh %18 : vector<8x128xf32>
    %41 = vector.extract_strided_slice %5 {offsets = [0, 32], sizes = [8, 32], strides = [1, 1]} : vector<8x64xf32> to vector<8x32xf32>
    %42 = vector.extract_strided_slice %39 {offsets = [0, 0], sizes = [8, 32], strides = [1, 1]} : vector<8x128xf32> to vector<8x32xf32>
    %43 = vector.extract_strided_slice %39 {offsets = [0, 32], sizes = [8, 32], strides = [1, 1]} : vector<8x128xf32> to vector<8x32xf32>
    %44 = vector.extract_strided_slice %40 {offsets = [0, 64], sizes = [8, 32], strides = [1, 1]} : vector<8x128xf32> to vector<8x32xf32>
    %45 = vector.extract_strided_slice %39 {offsets = [0, 96], sizes = [8, 32], strides = [1, 1]} : vector<8x128xf32> to vector<8x32xf32>
    %46 = arith.mulf %43, %41 : vector<8x32xf32>
    %47 = arith.mulf %42, %44 : vector<8x32xf32>
    %48 = arith.addf %46, %47 : vector<8x32xf32>
    %49 = math.tanh %48 : vector<8x32xf32>
    %50 = arith.mulf %45, %49 : vector<8x32xf32>
    %51 = arith.index_cast %c0_i32_6 : i32 to index
    %c0_13 = arith.constant 0 : index
    %c0_14 = arith.constant 0 : index
    %52 = vector.load %arg4[%51, %c0_13, %c0_14] : memref<16x8x32xf32, #tpu.memory_space<vmem>>, vector<1x8x32xf32>
    %53 = vector.shape_cast %52 : vector<1x8x32xf32> to vector<8x32xf32>
    %54 = vector.shape_cast %34 : vector<8x32xf32> to vector<1x8x32xf32>
    tpu.vector_store %arg4[%51, %c0_13, %c0_14], %54 {strides = array<i32>} : memref<16x8x32xf32, #tpu.memory_space<vmem>>, vector<1x8x32xf32>,
    %c15_i32_15 = arith.constant 15 : i32
    %55 = arith.subi %c15_i32_15, %c0_i32_6 : i32
    %56 = arith.index_cast %55 : i32 to index
    %c0_16 = arith.constant 0 : index
    %c0_17 = arith.constant 0 : index
    %57 = vector.load %arg5[%56, %c0_16, %c0_17] : memref<16x8x32xf32, #tpu.memory_space<vmem>>, vector<1x8x32xf32>
    %58 = vector.shape_cast %57 : vector<1x8x32xf32> to vector<8x32xf32>
    %59 = vector.shape_cast %50 : vector<8x32xf32> to vector<1x8x32xf32>
    tpu.vector_store %arg5[%56, %c0_16, %c0_17], %59 {strides = array<i32>} : memref<16x8x32xf32, #tpu.memory_space<vmem>>, vector<1x8x32xf32>,
    %60 = tpu.concatenate %34, %50 in 1 : vector<8x32xf32>, vector<8x32xf32> -> vector<8x64xf32>
    %61 = tpu.concatenate %32, %48 in 1 : vector<8x32xf32>, vector<8x32xf32> -> vector<8x64xf32>
    %c1_i32 = arith.constant 1 : i32
    %62 = arith.truncf %60 : vector<8x64xf32> to vector<8x64xbf16>
    %cst_18 = arith.constant dense<0.000000e+00> : vector<8x256xf32>
    %63 = tpu.matmul %62, %3, %cst_18 {dimension_numbers = #tpu.dot_dimension_numbers<[1], [0], [0], [1], [0, 0, 1, 1], [], []>} : vector<8x64xbf16>, vector<64x256xbf16>, vector<8x256xf32> -> vector<8x256xf32>
    %64 = arith.index_cast %c1_i32 : i32 to index
    %c0_19 = arith.constant 0 : index
    %c0_20 = arith.constant 0 : index
    %65 = vector.load %arg1[%64, %c0_19, %c0_20] : memref<16x8x128xf32, #tpu.memory_space<vmem>>, vector<1x8x128xf32>
    %66 = vector.shape_cast %65 : vector<1x8x128xf32> to vector<8x128xf32>
    %67 = vector.extract_strided_slice %63 {offsets = [0, 0], sizes = [8, 128], strides = [1, 1]} : vector<8x256xf32> to vector<8x128xf32>
    %68 = arith.addf %66, %67 : vector<8x128xf32>
    %c15_i32_21 = arith.constant 15 : i32
    %69 = arith.subi %c15_i32_21, %c1_i32 : i32
    %70 = arith.index_cast %69 : i32 to index
    %c0_22 = arith.constant 0 : index
    %c0_23 = arith.constant 0 : index
    %71 = vector.load %arg2[%70, %c0_22, %c0_23] : memref<16x8x128xf32, #tpu.memory_space<vmem>>, vector<1x8x128xf32>
    %72 = vector.shape_cast %71 : vector<1x8x128xf32> to vector<8x128xf32>
    %73 = vector.extract_strided_slice %63 {offsets = [0, 128], sizes = [8, 128], strides = [1, 1]} : vector<8x256xf32> to vector<8x128xf32>
    %74 = arith.addf %72, %73 : vector<8x128xf32>
    %75 = arith.negf %68 : vector<8x128xf32>
    %76 = math.exp %75 : vector<8x128xf32>
    %cst_24 = arith.constant 1.000000e+00 : f32
    %77 = vector.broadcast %cst_24 : f32 to vector<8x128xf32>
    %78 = arith.addf %77, %76 : vector<8x128xf32>
    %79 = arith.divf %77, %78 : vector<8x128xf32>
    %80 = math.tanh %68 : vector<8x128xf32>
    %81 = vector.extract_strided_slice %61 {offsets = [0, 0], sizes = [8, 32], strides = [1, 1]} : vector<8x64xf32> to vector<8x32xf32>
    %82 = vector.extract_strided_slice %79 {offsets = [0, 0], sizes = [8, 32], strides = [1, 1]} : vector<8x128xf32> to vector<8x32xf32>
    %83 = vector.extract_strided_slice %79 {offsets = [0, 32], sizes = [8, 32], strides = [1, 1]} : vector<8x128xf32> to vector<8x32xf32>
    %84 = vector.extract_strided_slice %80 {offsets = [0, 64], sizes = [8, 32], strides = [1, 1]} : vector<8x128xf32> to vector<8x32xf32>
    %85 = vector.extract_strided_slice %79 {offsets = [0, 96], sizes = [8, 32], strides = [1, 1]} : vector<8x128xf32> to vector<8x32xf32>
    %86 = arith.mulf %83, %81 : vector<8x32xf32>
    %87 = arith.mulf %82, %84 : vector<8x32xf32>
    %88 = arith.addf %86, %87 : vector<8x32xf32>
    %89 = math.tanh %88 : vector<8x32xf32>
    %90 = arith.mulf %85, %89 : vector<8x32xf32>
    %91 = arith.negf %74 : vector<8x128xf32>
    %92 = math.exp %91 : vector<8x128xf32>
    %cst_25 = arith.constant 1.000000e+00 : f32
    %93 = vector.broadcast %cst_25 : f32 to vector<8x128xf32>
    %94 = arith.addf %93, %92 : vector<8x128xf32>
    %95 = arith.divf %93, %94 : vector<8x128xf32>
    %96 = math.tanh %74 : vector<8x128xf32>
    %97 = vector.extract_strided_slice %61 {offsets = [0, 32], sizes = [8, 32], strides = [1, 1]} : vector<8x64xf32> to vector<8x32xf32>
    %98 = vector.extract_strided_slice %95 {offsets = [0, 0], sizes = [8, 32], strides = [1, 1]} : vector<8x128xf32> to vector<8x32xf32>
    %99 = vector.extract_strided_slice %95 {offsets = [0, 32], sizes = [8, 32], strides = [1, 1]} : vector<8x128xf32> to vector<8x32xf32>
    %100 = vector.extract_strided_slice %96 {offsets = [0, 64], sizes = [8, 32], strides = [1, 1]} : vector<8x128xf32> to vector<8x32xf32>
    %101 = vector.extract_strided_slice %95 {offsets = [0, 96], sizes = [8, 32], strides = [1, 1]} : vector<8x128xf32> to vector<8x32xf32>
    %102 = arith.mulf %99, %97 : vector<8x32xf32>
    %103 = arith.mulf %98, %100 : vector<8x32xf32>
    %104 = arith.addf %102, %103 : vector<8x32xf32>
    %105 = math.tanh %104 : vector<8x32xf32>
    %106 = arith.mulf %101, %105 : vector<8x32xf32>
    %107 = arith.index_cast %c1_i32 : i32 to index
    %c0_26 = arith.constant 0 : index
    %c0_27 = arith.constant 0 : index
    %108 = vector.load %arg4[%107, %c0_26, %c0_27] : memref<16x8x32xf32, #tpu.memory_space<vmem>>, vector<1x8x32xf32>
    %109 = vector.shape_cast %108 : vector<1x8x32xf32> to vector<8x32xf32>
    %110 = vector.shape_cast %90 : vector<8x32xf32> to vector<1x8x32xf32>
    tpu.vector_store %arg4[%107, %c0_26, %c0_27], %110 {strides = array<i32>} : memref<16x8x32xf32, #tpu.memory_space<vmem>>, vector<1x8x32xf32>,
    %c15_i32_28 = arith.constant 15 : i32
    %111 = arith.subi %c15_i32_28, %c1_i32 : i32
    %112 = arith.index_cast %111 : i32 to index
    %c0_29 = arith.constant 0 : index
    %c0_30 = arith.constant 0 : index
    %113 = vector.load %arg5[%112, %c0_29, %c0_30] : memref<16x8x32xf32, #tpu.memory_space<vmem>>, vector<1x8x32xf32>
    %114 = vector.shape_cast %113 : vector<1x8x32xf32> to vector<8x32xf32>
    %115 = vector.shape_cast %106 : vector<8x32xf32> to vector<1x8x32xf32>
    tpu.vector_store %arg5[%112, %c0_29, %c0_30], %115 {strides = array<i32>} : memref<16x8x32xf32, #tpu.memory_space<vmem>>, vector<1x8x32xf32>,
    %116 = tpu.concatenate %90, %106 in 1 : vector<8x32xf32>, vector<8x32xf32> -> vector<8x64xf32>
    %117 = tpu.concatenate %88, %104 in 1 : vector<8x32xf32>, vector<8x32xf32> -> vector<8x64xf32>
    %c2_i32 = arith.constant 2 : i32
    %118 = arith.truncf %116 : vector<8x64xf32> to vector<8x64xbf16>
    %cst_31 = arith.constant dense<0.000000e+00> : vector<8x256xf32>
    %119 = tpu.matmul %118, %3, %cst_31 {dimension_numbers = #tpu.dot_dimension_numbers<[1], [0], [0], [1], [0, 0, 1, 1], [], []>} : vector<8x64xbf16>, vector<64x256xbf16>, vector<8x256xf32> -> vector<8x256xf32>
    %120 = arith.index_cast %c2_i32 : i32 to index
    %c0_32 = arith.constant 0 : index
    %c0_33 = arith.constant 0 : index
    %121 = vector.load %arg1[%120, %c0_32, %c0_33] : memref<16x8x128xf32, #tpu.memory_space<vmem>>, vector<1x8x128xf32>
    %122 = vector.shape_cast %121 : vector<1x8x128xf32> to vector<8x128xf32>
    %123 = vector.extract_strided_slice %119 {offsets = [0, 0], sizes = [8, 128], strides = [1, 1]} : vector<8x256xf32> to vector<8x128xf32>
    %124 = arith.addf %122, %123 : vector<8x128xf32>
    %c15_i32_34 = arith.constant 15 : i32
    %125 = arith.subi %c15_i32_34, %c2_i32 : i32
    %126 = arith.index_cast %125 : i32 to index
    %c0_35 = arith.constant 0 : index
    %c0_36 = arith.constant 0 : index
    %127 = vector.load %arg2[%126, %c0_35, %c0_36] : memref<16x8x128xf32, #tpu.memory_space<vmem>>, vector<1x8x128xf32>
    %128 = vector.shape_cast %127 : vector<1x8x128xf32> to vector<8x128xf32>
    %129 = vector.extract_strided_slice %119 {offsets = [0, 128], sizes = [8, 128], strides = [1, 1]} : vector<8x256xf32> to vector<8x128xf32>
    %130 = arith.addf %128, %129 : vector<8x128xf32>
    %131 = arith.negf %124 : vector<8x128xf32>
    %132 = math.exp %131 : vector<8x128xf32>
    %cst_37 = arith.constant 1.000000e+00 : f32
    %133 = vector.broadcast %cst_37 : f32 to vector<8x128xf32>
    %134 = arith.addf %133, %132 : vector<8x128xf32>
    %135 = arith.divf %133, %134 : vector<8x128xf32>
    %136 = math.tanh %124 : vector<8x128xf32>
    %137 = vector.extract_strided_slice %117 {offsets = [0, 0], sizes = [8, 32], strides = [1, 1]} : vector<8x64xf32> to vector<8x32xf32>
    %138 = vector.extract_strided_slice %135 {offsets = [0, 0], sizes = [8, 32], strides = [1, 1]} : vector<8x128xf32> to vector<8x32xf32>
    %139 = vector.extract_strided_slice %135 {offsets = [0, 32], sizes = [8, 32], strides = [1, 1]} : vector<8x128xf32> to vector<8x32xf32>
    %140 = vector.extract_strided_slice %136 {offsets = [0, 64], sizes = [8, 32], strides = [1, 1]} : vector<8x128xf32> to vector<8x32xf32>
    %141 = vector.extract_strided_slice %135 {offsets = [0, 96], sizes = [8, 32], strides = [1, 1]} : vector<8x128xf32> to vector<8x32xf32>
    %142 = arith.mulf %139, %137 : vector<8x32xf32>
    %143 = arith.mulf %138, %140 : vector<8x32xf32>
    %144 = arith.addf %142, %143 : vector<8x32xf32>
    %145 = math.tanh %144 : vector<8x32xf32>
    %146 = arith.mulf %141, %145 : vector<8x32xf32>
    %147 = arith.negf %130 : vector<8x128xf32>
    %148 = math.exp %147 : vector<8x128xf32>
    %cst_38 = arith.constant 1.000000e+00 : f32
    %149 = vector.broadcast %cst_38 : f32 to vector<8x128xf32>
    %150 = arith.addf %149, %148 : vector<8x128xf32>
    %151 = arith.divf %149, %150 : vector<8x128xf32>
    %152 = math.tanh %130 : vector<8x128xf32>
    %153 = vector.extract_strided_slice %117 {offsets = [0, 32], sizes = [8, 32], strides = [1, 1]} : vector<8x64xf32> to vector<8x32xf32>
    %154 = vector.extract_strided_slice %151 {offsets = [0, 0], sizes = [8, 32], strides = [1, 1]} : vector<8x128xf32> to vector<8x32xf32>
    %155 = vector.extract_strided_slice %151 {offsets = [0, 32], sizes = [8, 32], strides = [1, 1]} : vector<8x128xf32> to vector<8x32xf32>
    %156 = vector.extract_strided_slice %152 {offsets = [0, 64], sizes = [8, 32], strides = [1, 1]} : vector<8x128xf32> to vector<8x32xf32>
    %157 = vector.extract_strided_slice %151 {offsets = [0, 96], sizes = [8, 32], strides = [1, 1]} : vector<8x128xf32> to vector<8x32xf32>
    %158 = arith.mulf %155, %153 : vector<8x32xf32>
    %159 = arith.mulf %154, %156 : vector<8x32xf32>
    %160 = arith.addf %158, %159 : vector<8x32xf32>
    %161 = math.tanh %160 : vector<8x32xf32>
    %162 = arith.mulf %157, %161 : vector<8x32xf32>
    %163 = arith.index_cast %c2_i32 : i32 to index
    %c0_39 = arith.constant 0 : index
    %c0_40 = arith.constant 0 : index
    %164 = vector.load %arg4[%163, %c0_39, %c0_40] : memref<16x8x32xf32, #tpu.memory_space<vmem>>, vector<1x8x32xf32>
    %165 = vector.shape_cast %164 : vector<1x8x32xf32> to vector<8x32xf32>
    %166 = vector.shape_cast %146 : vector<8x32xf32> to vector<1x8x32xf32>
    tpu.vector_store %arg4[%163, %c0_39, %c0_40], %166 {strides = array<i32>} : memref<16x8x32xf32, #tpu.memory_space<vmem>>, vector<1x8x32xf32>,
    %c15_i32_41 = arith.constant 15 : i32
    %167 = arith.subi %c15_i32_41, %c2_i32 : i32
    %168 = arith.index_cast %167 : i32 to index
    %c0_42 = arith.constant 0 : index
    %c0_43 = arith.constant 0 : index
    %169 = vector.load %arg5[%168, %c0_42, %c0_43] : memref<16x8x32xf32, #tpu.memory_space<vmem>>, vector<1x8x32xf32>
    %170 = vector.shape_cast %169 : vector<1x8x32xf32> to vector<8x32xf32>
    %171 = vector.shape_cast %162 : vector<8x32xf32> to vector<1x8x32xf32>
    tpu.vector_store %arg5[%168, %c0_42, %c0_43], %171 {strides = array<i32>} : memref<16x8x32xf32, #tpu.memory_space<vmem>>, vector<1x8x32xf32>,
    %172 = tpu.concatenate %146, %162 in 1 : vector<8x32xf32>, vector<8x32xf32> -> vector<8x64xf32>
    %173 = tpu.concatenate %144, %160 in 1 : vector<8x32xf32>, vector<8x32xf32> -> vector<8x64xf32>
    %c3_i32 = arith.constant 3 : i32
    %174 = arith.truncf %172 : vector<8x64xf32> to vector<8x64xbf16>
    %cst_44 = arith.constant dense<0.000000e+00> : vector<8x256xf32>
    %175 = tpu.matmul %174, %3, %cst_44 {dimension_numbers = #tpu.dot_dimension_numbers<[1], [0], [0], [1], [0, 0, 1, 1], [], []>} : vector<8x64xbf16>, vector<64x256xbf16>, vector<8x256xf32> -> vector<8x256xf32>
    %176 = arith.index_cast %c3_i32 : i32 to index
    %c0_45 = arith.constant 0 : index
    %c0_46 = arith.constant 0 : index
    %177 = vector.load %arg1[%176, %c0_45, %c0_46] : memref<16x8x128xf32, #tpu.memory_space<vmem>>, vector<1x8x128xf32>
    %178 = vector.shape_cast %177 : vector<1x8x128xf32> to vector<8x128xf32>
    %179 = vector.extract_strided_slice %175 {offsets = [0, 0], sizes = [8, 128], strides = [1, 1]} : vector<8x256xf32> to vector<8x128xf32>
    %180 = arith.addf %178, %179 : vector<8x128xf32>
    %c15_i32_47 = arith.constant 15 : i32
    %181 = arith.subi %c15_i32_47, %c3_i32 : i32
    %182 = arith.index_cast %181 : i32 to index
    %c0_48 = arith.constant 0 : index
    %c0_49 = arith.constant 0 : index
    %183 = vector.load %arg2[%182, %c0_48, %c0_49] : memref<16x8x128xf32, #tpu.memory_space<vmem>>, vector<1x8x128xf32>
    %184 = vector.shape_cast %183 : vector<1x8x128xf32> to vector<8x128xf32>
    %185 = vector.extract_strided_slice %175 {offsets = [0, 128], sizes = [8, 128], strides = [1, 1]} : vector<8x256xf32> to vector<8x128xf32>
    %186 = arith.addf %184, %185 : vector<8x128xf32>
    %187 = arith.negf %180 : vector<8x128xf32>
    %188 = math.exp %187 : vector<8x128xf32>
    %cst_50 = arith.constant 1.000000e+00 : f32
    %189 = vector.broadcast %cst_50 : f32 to vector<8x128xf32>
    %190 = arith.addf %189, %188 : vector<8x128xf32>
    %191 = arith.divf %189, %190 : vector<8x128xf32>
    %192 = math.tanh %180 : vector<8x128xf32>
    %193 = vector.extract_strided_slice %173 {offsets = [0, 0], sizes = [8, 32], strides = [1, 1]} : vector<8x64xf32> to vector<8x32xf32>
    %194 = vector.extract_strided_slice %191 {offsets = [0, 0], sizes = [8, 32], strides = [1, 1]} : vector<8x128xf32> to vector<8x32xf32>
    %195 = vector.extract_strided_slice %191 {offsets = [0, 32], sizes = [8, 32], strides = [1, 1]} : vector<8x128xf32> to vector<8x32xf32>
    %196 = vector.extract_strided_slice %192 {offsets = [0, 64], sizes = [8, 32], strides = [1, 1]} : vector<8x128xf32> to vector<8x32xf32>
    %197 = vector.extract_strided_slice %191 {offsets = [0, 96], sizes = [8, 32], strides = [1, 1]} : vector<8x128xf32> to vector<8x32xf32>
    %198 = arith.mulf %195, %193 : vector<8x32xf32>
    %199 = arith.mulf %194, %196 : vector<8x32xf32>
    %200 = arith.addf %198, %199 : vector<8x32xf32>
    %201 = math.tanh %200 : vector<8x32xf32>
    %202 = arith.mulf %197, %201 : vector<8x32xf32>
    %203 = arith.negf %186 : vector<8x128xf32>
    %204 = math.exp %203 : vector<8x128xf32>
    %cst_51 = arith.constant 1.000000e+00 : f32
    %205 = vector.broadcast %cst_51 : f32 to vector<8x128xf32>
    %206 = arith.addf %205, %204 : vector<8x128xf32>
    %207 = arith.divf %205, %206 : vector<8x128xf32>
    %208 = math.tanh %186 : vector<8x128xf32>
    %209 = vector.extract_strided_slice %173 {offsets = [0, 32], sizes = [8, 32], strides = [1, 1]} : vector<8x64xf32> to vector<8x32xf32>
    %210 = vector.extract_strided_slice %207 {offsets = [0, 0], sizes = [8, 32], strides = [1, 1]} : vector<8x128xf32> to vector<8x32xf32>
    %211 = vector.extract_strided_slice %207 {offsets = [0, 32], sizes = [8, 32], strides = [1, 1]} : vector<8x128xf32> to vector<8x32xf32>
    %212 = vector.extract_strided_slice %208 {offsets = [0, 64], sizes = [8, 32], strides = [1, 1]} : vector<8x128xf32> to vector<8x32xf32>
    %213 = vector.extract_strided_slice %207 {offsets = [0, 96], sizes = [8, 32], strides = [1, 1]} : vector<8x128xf32> to vector<8x32xf32>
    %214 = arith.mulf %211, %209 : vector<8x32xf32>
    %215 = arith.mulf %210, %212 : vector<8x32xf32>
    %216 = arith.addf %214, %215 : vector<8x32xf32>
    %217 = math.tanh %216 : vector<8x32xf32>
    %218 = arith.mulf %213, %217 : vector<8x32xf32>
    %219 = arith.index_cast %c3_i32 : i32 to index
    %c0_52 = arith.constant 0 : index
    %c0_53 = arith.constant 0 : index
    %220 = vector.load %arg4[%219, %c0_52, %c0_53] : memref<16x8x32xf32, #tpu.memory_space<vmem>>, vector<1x8x32xf32>
    %221 = vector.shape_cast %220 : vector<1x8x32xf32> to vector<8x32xf32>
    %222 = vector.shape_cast %202 : vector<8x32xf32> to vector<1x8x32xf32>
    tpu.vector_store %arg4[%219, %c0_52, %c0_53], %222 {strides = array<i32>} : memref<16x8x32xf32, #tpu.memory_space<vmem>>, vector<1x8x32xf32>,
    %c15_i32_54 = arith.constant 15 : i32
    %223 = arith.subi %c15_i32_54, %c3_i32 : i32
    %224 = arith.index_cast %223 : i32 to index
    %c0_55 = arith.constant 0 : index
    %c0_56 = arith.constant 0 : index
    %225 = vector.load %arg5[%224, %c0_55, %c0_56] : memref<16x8x32xf32, #tpu.memory_space<vmem>>, vector<1x8x32xf32>
    %226 = vector.shape_cast %225 : vector<1x8x32xf32> to vector<8x32xf32>
    %227 = vector.shape_cast %218 : vector<8x32xf32> to vector<1x8x32xf32>
    tpu.vector_store %arg5[%224, %c0_55, %c0_56], %227 {strides = array<i32>} : memref<16x8x32xf32, #tpu.memory_space<vmem>>, vector<1x8x32xf32>,
    %228 = tpu.concatenate %202, %218 in 1 : vector<8x32xf32>, vector<8x32xf32> -> vector<8x64xf32>
    %229 = tpu.concatenate %200, %216 in 1 : vector<8x32xf32>, vector<8x32xf32> -> vector<8x64xf32>
    %c4_i32 = arith.constant 4 : i32
    %230 = arith.truncf %228 : vector<8x64xf32> to vector<8x64xbf16>
    %cst_57 = arith.constant dense<0.000000e+00> : vector<8x256xf32>
    %231 = tpu.matmul %230, %3, %cst_57 {dimension_numbers = #tpu.dot_dimension_numbers<[1], [0], [0], [1], [0, 0, 1, 1], [], []>} : vector<8x64xbf16>, vector<64x256xbf16>, vector<8x256xf32> -> vector<8x256xf32>
    %232 = arith.index_cast %c4_i32 : i32 to index
    %c0_58 = arith.constant 0 : index
    %c0_59 = arith.constant 0 : index
    %233 = vector.load %arg1[%232, %c0_58, %c0_59] : memref<16x8x128xf32, #tpu.memory_space<vmem>>, vector<1x8x128xf32>
    %234 = vector.shape_cast %233 : vector<1x8x128xf32> to vector<8x128xf32>
    %235 = vector.extract_strided_slice %231 {offsets = [0, 0], sizes = [8, 128], strides = [1, 1]} : vector<8x256xf32> to vector<8x128xf32>
    %236 = arith.addf %234, %235 : vector<8x128xf32>
    %c15_i32_60 = arith.constant 15 : i32
    %237 = arith.subi %c15_i32_60, %c4_i32 : i32
    %238 = arith.index_cast %237 : i32 to index
    %c0_61 = arith.constant 0 : index
    %c0_62 = arith.constant 0 : index
    %239 = vector.load %arg2[%238, %c0_61, %c0_62] : memref<16x8x128xf32, #tpu.memory_space<vmem>>, vector<1x8x128xf32>
    %240 = vector.shape_cast %239 : vector<1x8x128xf32> to vector<8x128xf32>
    %241 = vector.extract_strided_slice %231 {offsets = [0, 128], sizes = [8, 128], strides = [1, 1]} : vector<8x256xf32> to vector<8x128xf32>
    %242 = arith.addf %240, %241 : vector<8x128xf32>
    %243 = arith.negf %236 : vector<8x128xf32>
    %244 = math.exp %243 : vector<8x128xf32>
    %cst_63 = arith.constant 1.000000e+00 : f32
    %245 = vector.broadcast %cst_63 : f32 to vector<8x128xf32>
    %246 = arith.addf %245, %244 : vector<8x128xf32>
    %247 = arith.divf %245, %246 : vector<8x128xf32>
    %248 = math.tanh %236 : vector<8x128xf32>
    %249 = vector.extract_strided_slice %229 {offsets = [0, 0], sizes = [8, 32], strides = [1, 1]} : vector<8x64xf32> to vector<8x32xf32>
    %250 = vector.extract_strided_slice %247 {offsets = [0, 0], sizes = [8, 32], strides = [1, 1]} : vector<8x128xf32> to vector<8x32xf32>
    %251 = vector.extract_strided_slice %247 {offsets = [0, 32], sizes = [8, 32], strides = [1, 1]} : vector<8x128xf32> to vector<8x32xf32>
    %252 = vector.extract_strided_slice %248 {offsets = [0, 64], sizes = [8, 32], strides = [1, 1]} : vector<8x128xf32> to vector<8x32xf32>
    %253 = vector.extract_strided_slice %247 {offsets = [0, 96], sizes = [8, 32], strides = [1, 1]} : vector<8x128xf32> to vector<8x32xf32>
    %254 = arith.mulf %251, %249 : vector<8x32xf32>
    %255 = arith.mulf %250, %252 : vector<8x32xf32>
    %256 = arith.addf %254, %255 : vector<8x32xf32>
    %257 = math.tanh %256 : vector<8x32xf32>
    %258 = arith.mulf %253, %257 : vector<8x32xf32>
    %259 = arith.negf %242 : vector<8x128xf32>
    %260 = math.exp %259 : vector<8x128xf32>
    %cst_64 = arith.constant 1.000000e+00 : f32
    %261 = vector.broadcast %cst_64 : f32 to vector<8x128xf32>
    %262 = arith.addf %261, %260 : vector<8x128xf32>
    %263 = arith.divf %261, %262 : vector<8x128xf32>
    %264 = math.tanh %242 : vector<8x128xf32>
    %265 = vector.extract_strided_slice %229 {offsets = [0, 32], sizes = [8, 32], strides = [1, 1]} : vector<8x64xf32> to vector<8x32xf32>
    %266 = vector.extract_strided_slice %263 {offsets = [0, 0], sizes = [8, 32], strides = [1, 1]} : vector<8x128xf32> to vector<8x32xf32>
    %267 = vector.extract_strided_slice %263 {offsets = [0, 32], sizes = [8, 32], strides = [1, 1]} : vector<8x128xf32> to vector<8x32xf32>
    %268 = vector.extract_strided_slice %264 {offsets = [0, 64], sizes = [8, 32], strides = [1, 1]} : vector<8x128xf32> to vector<8x32xf32>
    %269 = vector.extract_strided_slice %263 {offsets = [0, 96], sizes = [8, 32], strides = [1, 1]} : vector<8x128xf32> to vector<8x32xf32>
    %270 = arith.mulf %267, %265 : vector<8x32xf32>
    %271 = arith.mulf %266, %268 : vector<8x32xf32>
    %272 = arith.addf %270, %271 : vector<8x32xf32>
    %273 = math.tanh %272 : vector<8x32xf32>
    %274 = arith.mulf %269, %273 : vector<8x32xf32>
    %275 = arith.index_cast %c4_i32 : i32 to index
    %c0_65 = arith.constant 0 : index
    %c0_66 = arith.constant 0 : index
    %276 = vector.load %arg4[%275, %c0_65, %c0_66] : memref<16x8x32xf32, #tpu.memory_space<vmem>>, vector<1x8x32xf32>
    %277 = vector.shape_cast %276 : vector<1x8x32xf32> to vector<8x32xf32>
    %278 = vector.shape_cast %258 : vector<8x32xf32> to vector<1x8x32xf32>
    tpu.vector_store %arg4[%275, %c0_65, %c0_66], %278 {strides = array<i32>} : memref<16x8x32xf32, #tpu.memory_space<vmem>>, vector<1x8x32xf32>,
    %c15_i32_67 = arith.constant 15 : i32
    %279 = arith.subi %c15_i32_67, %c4_i32 : i32
    %280 = arith.index_cast %279 : i32 to index
    %c0_68 = arith.constant 0 : index
    %c0_69 = arith.constant 0 : index
    %281 = vector.load %arg5[%280, %c0_68, %c0_69] : memref<16x8x32xf32, #tpu.memory_space<vmem>>, vector<1x8x32xf32>
    %282 = vector.shape_cast %281 : vector<1x8x32xf32> to vector<8x32xf32>
    %283 = vector.shape_cast %274 : vector<8x32xf32> to vector<1x8x32xf32>
    tpu.vector_store %arg5[%280, %c0_68, %c0_69], %283 {strides = array<i32>} : memref<16x8x32xf32, #tpu.memory_space<vmem>>, vector<1x8x32xf32>,
    %284 = tpu.concatenate %258, %274 in 1 : vector<8x32xf32>, vector<8x32xf32> -> vector<8x64xf32>
    %285 = tpu.concatenate %256, %272 in 1 : vector<8x32xf32>, vector<8x32xf32> -> vector<8x64xf32>
    %c5_i32 = arith.constant 5 : i32
    %286 = arith.truncf %284 : vector<8x64xf32> to vector<8x64xbf16>
    %cst_70 = arith.constant dense<0.000000e+00> : vector<8x256xf32>
    %287 = tpu.matmul %286, %3, %cst_70 {dimension_numbers = #tpu.dot_dimension_numbers<[1], [0], [0], [1], [0, 0, 1, 1], [], []>} : vector<8x64xbf16>, vector<64x256xbf16>, vector<8x256xf32> -> vector<8x256xf32>
    %288 = arith.index_cast %c5_i32 : i32 to index
    %c0_71 = arith.constant 0 : index
    %c0_72 = arith.constant 0 : index
    %289 = vector.load %arg1[%288, %c0_71, %c0_72] : memref<16x8x128xf32, #tpu.memory_space<vmem>>, vector<1x8x128xf32>
    %290 = vector.shape_cast %289 : vector<1x8x128xf32> to vector<8x128xf32>
    %291 = vector.extract_strided_slice %287 {offsets = [0, 0], sizes = [8, 128], strides = [1, 1]} : vector<8x256xf32> to vector<8x128xf32>
    %292 = arith.addf %290, %291 : vector<8x128xf32>
    %c15_i32_73 = arith.constant 15 : i32
    %293 = arith.subi %c15_i32_73, %c5_i32 : i32
    %294 = arith.index_cast %293 : i32 to index
    %c0_74 = arith.constant 0 : index
    %c0_75 = arith.constant 0 : index
    %295 = vector.load %arg2[%294, %c0_74, %c0_75] : memref<16x8x128xf32, #tpu.memory_space<vmem>>, vector<1x8x128xf32>
    %296 = vector.shape_cast %295 : vector<1x8x128xf32> to vector<8x128xf32>
    %297 = vector.extract_strided_slice %287 {offsets = [0, 128], sizes = [8, 128], strides = [1, 1]} : vector<8x256xf32> to vector<8x128xf32>
    %298 = arith.addf %296, %297 : vector<8x128xf32>
    %299 = arith.negf %292 : vector<8x128xf32>
    %300 = math.exp %299 : vector<8x128xf32>
    %cst_76 = arith.constant 1.000000e+00 : f32
    %301 = vector.broadcast %cst_76 : f32 to vector<8x128xf32>
    %302 = arith.addf %301, %300 : vector<8x128xf32>
    %303 = arith.divf %301, %302 : vector<8x128xf32>
    %304 = math.tanh %292 : vector<8x128xf32>
    %305 = vector.extract_strided_slice %285 {offsets = [0, 0], sizes = [8, 32], strides = [1, 1]} : vector<8x64xf32> to vector<8x32xf32>
    %306 = vector.extract_strided_slice %303 {offsets = [0, 0], sizes = [8, 32], strides = [1, 1]} : vector<8x128xf32> to vector<8x32xf32>
    %307 = vector.extract_strided_slice %303 {offsets = [0, 32], sizes = [8, 32], strides = [1, 1]} : vector<8x128xf32> to vector<8x32xf32>
    %308 = vector.extract_strided_slice %304 {offsets = [0, 64], sizes = [8, 32], strides = [1, 1]} : vector<8x128xf32> to vector<8x32xf32>
    %309 = vector.extract_strided_slice %303 {offsets = [0, 96], sizes = [8, 32], strides = [1, 1]} : vector<8x128xf32> to vector<8x32xf32>
    %310 = arith.mulf %307, %305 : vector<8x32xf32>
    %311 = arith.mulf %306, %308 : vector<8x32xf32>
    %312 = arith.addf %310, %311 : vector<8x32xf32>
    %313 = math.tanh %312 : vector<8x32xf32>
    %314 = arith.mulf %309, %313 : vector<8x32xf32>
    %315 = arith.negf %298 : vector<8x128xf32>
    %316 = math.exp %315 : vector<8x128xf32>
    %cst_77 = arith.constant 1.000000e+00 : f32
    %317 = vector.broadcast %cst_77 : f32 to vector<8x128xf32>
    %318 = arith.addf %317, %316 : vector<8x128xf32>
    %319 = arith.divf %317, %318 : vector<8x128xf32>
    %320 = math.tanh %298 : vector<8x128xf32>
    %321 = vector.extract_strided_slice %285 {offsets = [0, 32], sizes = [8, 32], strides = [1, 1]} : vector<8x64xf32> to vector<8x32xf32>
    %322 = vector.extract_strided_slice %319 {offsets = [0, 0], sizes = [8, 32], strides = [1, 1]} : vector<8x128xf32> to vector<8x32xf32>
    %323 = vector.extract_strided_slice %319 {offsets = [0, 32], sizes = [8, 32], strides = [1, 1]} : vector<8x128xf32> to vector<8x32xf32>
    %324 = vector.extract_strided_slice %320 {offsets = [0, 64], sizes = [8, 32], strides = [1, 1]} : vector<8x128xf32> to vector<8x32xf32>
    %325 = vector.extract_strided_slice %319 {offsets = [0, 96], sizes = [8, 32], strides = [1, 1]} : vector<8x128xf32> to vector<8x32xf32>
    %326 = arith.mulf %323, %321 : vector<8x32xf32>
    %327 = arith.mulf %322, %324 : vector<8x32xf32>
    %328 = arith.addf %326, %327 : vector<8x32xf32>
    %329 = math.tanh %328 : vector<8x32xf32>
    %330 = arith.mulf %325, %329 : vector<8x32xf32>
    %331 = arith.index_cast %c5_i32 : i32 to index
    %c0_78 = arith.constant 0 : index
    %c0_79 = arith.constant 0 : index
    %332 = vector.load %arg4[%331, %c0_78, %c0_79] : memref<16x8x32xf32, #tpu.memory_space<vmem>>, vector<1x8x32xf32>
    %333 = vector.shape_cast %332 : vector<1x8x32xf32> to vector<8x32xf32>
    %334 = vector.shape_cast %314 : vector<8x32xf32> to vector<1x8x32xf32>
    tpu.vector_store %arg4[%331, %c0_78, %c0_79], %334 {strides = array<i32>} : memref<16x8x32xf32, #tpu.memory_space<vmem>>, vector<1x8x32xf32>,
    %c15_i32_80 = arith.constant 15 : i32
    %335 = arith.subi %c15_i32_80, %c5_i32 : i32
    %336 = arith.index_cast %335 : i32 to index
    %c0_81 = arith.constant 0 : index
    %c0_82 = arith.constant 0 : index
    %337 = vector.load %arg5[%336, %c0_81, %c0_82] : memref<16x8x32xf32, #tpu.memory_space<vmem>>, vector<1x8x32xf32>
    %338 = vector.shape_cast %337 : vector<1x8x32xf32> to vector<8x32xf32>
    %339 = vector.shape_cast %330 : vector<8x32xf32> to vector<1x8x32xf32>
    tpu.vector_store %arg5[%336, %c0_81, %c0_82], %339 {strides = array<i32>} : memref<16x8x32xf32, #tpu.memory_space<vmem>>, vector<1x8x32xf32>,
    %340 = tpu.concatenate %314, %330 in 1 : vector<8x32xf32>, vector<8x32xf32> -> vector<8x64xf32>
    %341 = tpu.concatenate %312, %328 in 1 : vector<8x32xf32>, vector<8x32xf32> -> vector<8x64xf32>
    %c6_i32 = arith.constant 6 : i32
    %342 = arith.truncf %340 : vector<8x64xf32> to vector<8x64xbf16>
    %cst_83 = arith.constant dense<0.000000e+00> : vector<8x256xf32>
    %343 = tpu.matmul %342, %3, %cst_83 {dimension_numbers = #tpu.dot_dimension_numbers<[1], [0], [0], [1], [0, 0, 1, 1], [], []>} : vector<8x64xbf16>, vector<64x256xbf16>, vector<8x256xf32> -> vector<8x256xf32>
    %344 = arith.index_cast %c6_i32 : i32 to index
    %c0_84 = arith.constant 0 : index
    %c0_85 = arith.constant 0 : index
    %345 = vector.load %arg1[%344, %c0_84, %c0_85] : memref<16x8x128xf32, #tpu.memory_space<vmem>>, vector<1x8x128xf32>
    %346 = vector.shape_cast %345 : vector<1x8x128xf32> to vector<8x128xf32>
    %347 = vector.extract_strided_slice %343 {offsets = [0, 0], sizes = [8, 128], strides = [1, 1]} : vector<8x256xf32> to vector<8x128xf32>
    %348 = arith.addf %346, %347 : vector<8x128xf32>
    %c15_i32_86 = arith.constant 15 : i32
    %349 = arith.subi %c15_i32_86, %c6_i32 : i32
    %350 = arith.index_cast %349 : i32 to index
    %c0_87 = arith.constant 0 : index
    %c0_88 = arith.constant 0 : index
    %351 = vector.load %arg2[%350, %c0_87, %c0_88] : memref<16x8x128xf32, #tpu.memory_space<vmem>>, vector<1x8x128xf32>
    %352 = vector.shape_cast %351 : vector<1x8x128xf32> to vector<8x128xf32>
    %353 = vector.extract_strided_slice %343 {offsets = [0, 128], sizes = [8, 128], strides = [1, 1]} : vector<8x256xf32> to vector<8x128xf32>
    %354 = arith.addf %352, %353 : vector<8x128xf32>
    %355 = arith.negf %348 : vector<8x128xf32>
    %356 = math.exp %355 : vector<8x128xf32>
    %cst_89 = arith.constant 1.000000e+00 : f32
    %357 = vector.broadcast %cst_89 : f32 to vector<8x128xf32>
    %358 = arith.addf %357, %356 : vector<8x128xf32>
    %359 = arith.divf %357, %358 : vector<8x128xf32>
    %360 = math.tanh %348 : vector<8x128xf32>
    %361 = vector.extract_strided_slice %341 {offsets = [0, 0], sizes = [8, 32], strides = [1, 1]} : vector<8x64xf32> to vector<8x32xf32>
    %362 = vector.extract_strided_slice %359 {offsets = [0, 0], sizes = [8, 32], strides = [1, 1]} : vector<8x128xf32> to vector<8x32xf32>
    %363 = vector.extract_strided_slice %359 {offsets = [0, 32], sizes = [8, 32], strides = [1, 1]} : vector<8x128xf32> to vector<8x32xf32>
    %364 = vector.extract_strided_slice %360 {offsets = [0, 64], sizes = [8, 32], strides = [1, 1]} : vector<8x128xf32> to vector<8x32xf32>
    %365 = vector.extract_strided_slice %359 {offsets = [0, 96], sizes = [8, 32], strides = [1, 1]} : vector<8x128xf32> to vector<8x32xf32>
    %366 = arith.mulf %363, %361 : vector<8x32xf32>
    %367 = arith.mulf %362, %364 : vector<8x32xf32>
    %368 = arith.addf %366, %367 : vector<8x32xf32>
    %369 = math.tanh %368 : vector<8x32xf32>
    %370 = arith.mulf %365, %369 : vector<8x32xf32>
    %371 = arith.negf %354 : vector<8x128xf32>
    %372 = math.exp %371 : vector<8x128xf32>
    %cst_90 = arith.constant 1.000000e+00 : f32
    %373 = vector.broadcast %cst_90 : f32 to vector<8x128xf32>
    %374 = arith.addf %373, %372 : vector<8x128xf32>
    %375 = arith.divf %373, %374 : vector<8x128xf32>
    %376 = math.tanh %354 : vector<8x128xf32>
    %377 = vector.extract_strided_slice %341 {offsets = [0, 32], sizes = [8, 32], strides = [1, 1]} : vector<8x64xf32> to vector<8x32xf32>
    %378 = vector.extract_strided_slice %375 {offsets = [0, 0], sizes = [8, 32], strides = [1, 1]} : vector<8x128xf32> to vector<8x32xf32>
    %379 = vector.extract_strided_slice %375 {offsets = [0, 32], sizes = [8, 32], strides = [1, 1]} : vector<8x128xf32> to vector<8x32xf32>
    %380 = vector.extract_strided_slice %376 {offsets = [0, 64], sizes = [8, 32], strides = [1, 1]} : vector<8x128xf32> to vector<8x32xf32>
    %381 = vector.extract_strided_slice %375 {offsets = [0, 96], sizes = [8, 32], strides = [1, 1]} : vector<8x128xf32> to vector<8x32xf32>
    %382 = arith.mulf %379, %377 : vector<8x32xf32>
    %383 = arith.mulf %378, %380 : vector<8x32xf32>
    %384 = arith.addf %382, %383 : vector<8x32xf32>
    %385 = math.tanh %384 : vector<8x32xf32>
    %386 = arith.mulf %381, %385 : vector<8x32xf32>
    %387 = arith.index_cast %c6_i32 : i32 to index
    %c0_91 = arith.constant 0 : index
    %c0_92 = arith.constant 0 : index
    %388 = vector.load %arg4[%387, %c0_91, %c0_92] : memref<16x8x32xf32, #tpu.memory_space<vmem>>, vector<1x8x32xf32>
    %389 = vector.shape_cast %388 : vector<1x8x32xf32> to vector<8x32xf32>
    %390 = vector.shape_cast %370 : vector<8x32xf32> to vector<1x8x32xf32>
    tpu.vector_store %arg4[%387, %c0_91, %c0_92], %390 {strides = array<i32>} : memref<16x8x32xf32, #tpu.memory_space<vmem>>, vector<1x8x32xf32>,
    %c15_i32_93 = arith.constant 15 : i32
    %391 = arith.subi %c15_i32_93, %c6_i32 : i32
    %392 = arith.index_cast %391 : i32 to index
    %c0_94 = arith.constant 0 : index
    %c0_95 = arith.constant 0 : index
    %393 = vector.load %arg5[%392, %c0_94, %c0_95] : memref<16x8x32xf32, #tpu.memory_space<vmem>>, vector<1x8x32xf32>
    %394 = vector.shape_cast %393 : vector<1x8x32xf32> to vector<8x32xf32>
    %395 = vector.shape_cast %386 : vector<8x32xf32> to vector<1x8x32xf32>
    tpu.vector_store %arg5[%392, %c0_94, %c0_95], %395 {strides = array<i32>} : memref<16x8x32xf32, #tpu.memory_space<vmem>>, vector<1x8x32xf32>,
    %396 = tpu.concatenate %370, %386 in 1 : vector<8x32xf32>, vector<8x32xf32> -> vector<8x64xf32>
    %397 = tpu.concatenate %368, %384 in 1 : vector<8x32xf32>, vector<8x32xf32> -> vector<8x64xf32>
    %c7_i32 = arith.constant 7 : i32
    %398 = arith.truncf %396 : vector<8x64xf32> to vector<8x64xbf16>
    %cst_96 = arith.constant dense<0.000000e+00> : vector<8x256xf32>
    %399 = tpu.matmul %398, %3, %cst_96 {dimension_numbers = #tpu.dot_dimension_numbers<[1], [0], [0], [1], [0, 0, 1, 1], [], []>} : vector<8x64xbf16>, vector<64x256xbf16>, vector<8x256xf32> -> vector<8x256xf32>
    %400 = arith.index_cast %c7_i32 : i32 to index
    %c0_97 = arith.constant 0 : index
    %c0_98 = arith.constant 0 : index
    %401 = vector.load %arg1[%400, %c0_97, %c0_98] : memref<16x8x128xf32, #tpu.memory_space<vmem>>, vector<1x8x128xf32>
    %402 = vector.shape_cast %401 : vector<1x8x128xf32> to vector<8x128xf32>
    %403 = vector.extract_strided_slice %399 {offsets = [0, 0], sizes = [8, 128], strides = [1, 1]} : vector<8x256xf32> to vector<8x128xf32>
    %404 = arith.addf %402, %403 : vector<8x128xf32>
    %c15_i32_99 = arith.constant 15 : i32
    %405 = arith.subi %c15_i32_99, %c7_i32 : i32
    %406 = arith.index_cast %405 : i32 to index
    %c0_100 = arith.constant 0 : index
    %c0_101 = arith.constant 0 : index
    %407 = vector.load %arg2[%406, %c0_100, %c0_101] : memref<16x8x128xf32, #tpu.memory_space<vmem>>, vector<1x8x128xf32>
    %408 = vector.shape_cast %407 : vector<1x8x128xf32> to vector<8x128xf32>
    %409 = vector.extract_strided_slice %399 {offsets = [0, 128], sizes = [8, 128], strides = [1, 1]} : vector<8x256xf32> to vector<8x128xf32>
    %410 = arith.addf %408, %409 : vector<8x128xf32>
    %411 = arith.negf %404 : vector<8x128xf32>
    %412 = math.exp %411 : vector<8x128xf32>
    %cst_102 = arith.constant 1.000000e+00 : f32
    %413 = vector.broadcast %cst_102 : f32 to vector<8x128xf32>
    %414 = arith.addf %413, %412 : vector<8x128xf32>
    %415 = arith.divf %413, %414 : vector<8x128xf32>
    %416 = math.tanh %404 : vector<8x128xf32>
    %417 = vector.extract_strided_slice %397 {offsets = [0, 0], sizes = [8, 32], strides = [1, 1]} : vector<8x64xf32> to vector<8x32xf32>
    %418 = vector.extract_strided_slice %415 {offsets = [0, 0], sizes = [8, 32], strides = [1, 1]} : vector<8x128xf32> to vector<8x32xf32>
    %419 = vector.extract_strided_slice %415 {offsets = [0, 32], sizes = [8, 32], strides = [1, 1]} : vector<8x128xf32> to vector<8x32xf32>
    %420 = vector.extract_strided_slice %416 {offsets = [0, 64], sizes = [8, 32], strides = [1, 1]} : vector<8x128xf32> to vector<8x32xf32>
    %421 = vector.extract_strided_slice %415 {offsets = [0, 96], sizes = [8, 32], strides = [1, 1]} : vector<8x128xf32> to vector<8x32xf32>
    %422 = arith.mulf %419, %417 : vector<8x32xf32>
    %423 = arith.mulf %418, %420 : vector<8x32xf32>
    %424 = arith.addf %422, %423 : vector<8x32xf32>
    %425 = math.tanh %424 : vector<8x32xf32>
    %426 = arith.mulf %421, %425 : vector<8x32xf32>
    %427 = arith.negf %410 : vector<8x128xf32>
    %428 = math.exp %427 : vector<8x128xf32>
    %cst_103 = arith.constant 1.000000e+00 : f32
    %429 = vector.broadcast %cst_103 : f32 to vector<8x128xf32>
    %430 = arith.addf %429, %428 : vector<8x128xf32>
    %431 = arith.divf %429, %430 : vector<8x128xf32>
    %432 = math.tanh %410 : vector<8x128xf32>
    %433 = vector.extract_strided_slice %397 {offsets = [0, 32], sizes = [8, 32], strides = [1, 1]} : vector<8x64xf32> to vector<8x32xf32>
    %434 = vector.extract_strided_slice %431 {offsets = [0, 0], sizes = [8, 32], strides = [1, 1]} : vector<8x128xf32> to vector<8x32xf32>
    %435 = vector.extract_strided_slice %431 {offsets = [0, 32], sizes = [8, 32], strides = [1, 1]} : vector<8x128xf32> to vector<8x32xf32>
    %436 = vector.extract_strided_slice %432 {offsets = [0, 64], sizes = [8, 32], strides = [1, 1]} : vector<8x128xf32> to vector<8x32xf32>
    %437 = vector.extract_strided_slice %431 {offsets = [0, 96], sizes = [8, 32], strides = [1, 1]} : vector<8x128xf32> to vector<8x32xf32>
    %438 = arith.mulf %435, %433 : vector<8x32xf32>
    %439 = arith.mulf %434, %436 : vector<8x32xf32>
    %440 = arith.addf %438, %439 : vector<8x32xf32>
    %441 = math.tanh %440 : vector<8x32xf32>
    %442 = arith.mulf %437, %441 : vector<8x32xf32>
    %443 = arith.index_cast %c7_i32 : i32 to index
    %c0_104 = arith.constant 0 : index
    %c0_105 = arith.constant 0 : index
    %444 = vector.load %arg4[%443, %c0_104, %c0_105] : memref<16x8x32xf32, #tpu.memory_space<vmem>>, vector<1x8x32xf32>
    %445 = vector.shape_cast %444 : vector<1x8x32xf32> to vector<8x32xf32>
    %446 = vector.shape_cast %426 : vector<8x32xf32> to vector<1x8x32xf32>
    tpu.vector_store %arg4[%443, %c0_104, %c0_105], %446 {strides = array<i32>} : memref<16x8x32xf32, #tpu.memory_space<vmem>>, vector<1x8x32xf32>,
    %c15_i32_106 = arith.constant 15 : i32
    %447 = arith.subi %c15_i32_106, %c7_i32 : i32
    %448 = arith.index_cast %447 : i32 to index
    %c0_107 = arith.constant 0 : index
    %c0_108 = arith.constant 0 : index
    %449 = vector.load %arg5[%448, %c0_107, %c0_108] : memref<16x8x32xf32, #tpu.memory_space<vmem>>, vector<1x8x32xf32>
    %450 = vector.shape_cast %449 : vector<1x8x32xf32> to vector<8x32xf32>
    %451 = vector.shape_cast %442 : vector<8x32xf32> to vector<1x8x32xf32>
    tpu.vector_store %arg5[%448, %c0_107, %c0_108], %451 {strides = array<i32>} : memref<16x8x32xf32, #tpu.memory_space<vmem>>, vector<1x8x32xf32>,
    %452 = tpu.concatenate %426, %442 in 1 : vector<8x32xf32>, vector<8x32xf32> -> vector<8x64xf32>
    %453 = tpu.concatenate %424, %440 in 1 : vector<8x32xf32>, vector<8x32xf32> -> vector<8x64xf32>
    %c8_i32 = arith.constant 8 : i32
    %454 = arith.truncf %452 : vector<8x64xf32> to vector<8x64xbf16>
    %cst_109 = arith.constant dense<0.000000e+00> : vector<8x256xf32>
    %455 = tpu.matmul %454, %3, %cst_109 {dimension_numbers = #tpu.dot_dimension_numbers<[1], [0], [0], [1], [0, 0, 1, 1], [], []>} : vector<8x64xbf16>, vector<64x256xbf16>, vector<8x256xf32> -> vector<8x256xf32>
    %456 = arith.index_cast %c8_i32 : i32 to index
    %c0_110 = arith.constant 0 : index
    %c0_111 = arith.constant 0 : index
    %457 = vector.load %arg1[%456, %c0_110, %c0_111] : memref<16x8x128xf32, #tpu.memory_space<vmem>>, vector<1x8x128xf32>
    %458 = vector.shape_cast %457 : vector<1x8x128xf32> to vector<8x128xf32>
    %459 = vector.extract_strided_slice %455 {offsets = [0, 0], sizes = [8, 128], strides = [1, 1]} : vector<8x256xf32> to vector<8x128xf32>
    %460 = arith.addf %458, %459 : vector<8x128xf32>
    %c15_i32_112 = arith.constant 15 : i32
    %461 = arith.subi %c15_i32_112, %c8_i32 : i32
    %462 = arith.index_cast %461 : i32 to index
    %c0_113 = arith.constant 0 : index
    %c0_114 = arith.constant 0 : index
    %463 = vector.load %arg2[%462, %c0_113, %c0_114] : memref<16x8x128xf32, #tpu.memory_space<vmem>>, vector<1x8x128xf32>
    %464 = vector.shape_cast %463 : vector<1x8x128xf32> to vector<8x128xf32>
    %465 = vector.extract_strided_slice %455 {offsets = [0, 128], sizes = [8, 128], strides = [1, 1]} : vector<8x256xf32> to vector<8x128xf32>
    %466 = arith.addf %464, %465 : vector<8x128xf32>
    %467 = arith.negf %460 : vector<8x128xf32>
    %468 = math.exp %467 : vector<8x128xf32>
    %cst_115 = arith.constant 1.000000e+00 : f32
    %469 = vector.broadcast %cst_115 : f32 to vector<8x128xf32>
    %470 = arith.addf %469, %468 : vector<8x128xf32>
    %471 = arith.divf %469, %470 : vector<8x128xf32>
    %472 = math.tanh %460 : vector<8x128xf32>
    %473 = vector.extract_strided_slice %453 {offsets = [0, 0], sizes = [8, 32], strides = [1, 1]} : vector<8x64xf32> to vector<8x32xf32>
    %474 = vector.extract_strided_slice %471 {offsets = [0, 0], sizes = [8, 32], strides = [1, 1]} : vector<8x128xf32> to vector<8x32xf32>
    %475 = vector.extract_strided_slice %471 {offsets = [0, 32], sizes = [8, 32], strides = [1, 1]} : vector<8x128xf32> to vector<8x32xf32>
    %476 = vector.extract_strided_slice %472 {offsets = [0, 64], sizes = [8, 32], strides = [1, 1]} : vector<8x128xf32> to vector<8x32xf32>
    %477 = vector.extract_strided_slice %471 {offsets = [0, 96], sizes = [8, 32], strides = [1, 1]} : vector<8x128xf32> to vector<8x32xf32>
    %478 = arith.mulf %475, %473 : vector<8x32xf32>
    %479 = arith.mulf %474, %476 : vector<8x32xf32>
    %480 = arith.addf %478, %479 : vector<8x32xf32>
    %481 = math.tanh %480 : vector<8x32xf32>
    %482 = arith.mulf %477, %481 : vector<8x32xf32>
    %483 = arith.negf %466 : vector<8x128xf32>
    %484 = math.exp %483 : vector<8x128xf32>
    %cst_116 = arith.constant 1.000000e+00 : f32
    %485 = vector.broadcast %cst_116 : f32 to vector<8x128xf32>
    %486 = arith.addf %485, %484 : vector<8x128xf32>
    %487 = arith.divf %485, %486 : vector<8x128xf32>
    %488 = math.tanh %466 : vector<8x128xf32>
    %489 = vector.extract_strided_slice %453 {offsets = [0, 32], sizes = [8, 32], strides = [1, 1]} : vector<8x64xf32> to vector<8x32xf32>
    %490 = vector.extract_strided_slice %487 {offsets = [0, 0], sizes = [8, 32], strides = [1, 1]} : vector<8x128xf32> to vector<8x32xf32>
    %491 = vector.extract_strided_slice %487 {offsets = [0, 32], sizes = [8, 32], strides = [1, 1]} : vector<8x128xf32> to vector<8x32xf32>
    %492 = vector.extract_strided_slice %488 {offsets = [0, 64], sizes = [8, 32], strides = [1, 1]} : vector<8x128xf32> to vector<8x32xf32>
    %493 = vector.extract_strided_slice %487 {offsets = [0, 96], sizes = [8, 32], strides = [1, 1]} : vector<8x128xf32> to vector<8x32xf32>
    %494 = arith.mulf %491, %489 : vector<8x32xf32>
    %495 = arith.mulf %490, %492 : vector<8x32xf32>
    %496 = arith.addf %494, %495 : vector<8x32xf32>
    %497 = math.tanh %496 : vector<8x32xf32>
    %498 = arith.mulf %493, %497 : vector<8x32xf32>
    %499 = arith.index_cast %c8_i32 : i32 to index
    %c0_117 = arith.constant 0 : index
    %c0_118 = arith.constant 0 : index
    %500 = vector.load %arg4[%499, %c0_117, %c0_118] : memref<16x8x32xf32, #tpu.memory_space<vmem>>, vector<1x8x32xf32>
    %501 = vector.shape_cast %500 : vector<1x8x32xf32> to vector<8x32xf32>
    %502 = vector.shape_cast %482 : vector<8x32xf32> to vector<1x8x32xf32>
    tpu.vector_store %arg4[%499, %c0_117, %c0_118], %502 {strides = array<i32>} : memref<16x8x32xf32, #tpu.memory_space<vmem>>, vector<1x8x32xf32>,
    %c15_i32_119 = arith.constant 15 : i32
    %503 = arith.subi %c15_i32_119, %c8_i32 : i32
    %504 = arith.index_cast %503 : i32 to index
    %c0_120 = arith.constant 0 : index
    %c0_121 = arith.constant 0 : index
    %505 = vector.load %arg5[%504, %c0_120, %c0_121] : memref<16x8x32xf32, #tpu.memory_space<vmem>>, vector<1x8x32xf32>
    %506 = vector.shape_cast %505 : vector<1x8x32xf32> to vector<8x32xf32>
    %507 = vector.shape_cast %498 : vector<8x32xf32> to vector<1x8x32xf32>
    tpu.vector_store %arg5[%504, %c0_120, %c0_121], %507 {strides = array<i32>} : memref<16x8x32xf32, #tpu.memory_space<vmem>>, vector<1x8x32xf32>,
    %508 = tpu.concatenate %482, %498 in 1 : vector<8x32xf32>, vector<8x32xf32> -> vector<8x64xf32>
    %509 = tpu.concatenate %480, %496 in 1 : vector<8x32xf32>, vector<8x32xf32> -> vector<8x64xf32>
    %c9_i32 = arith.constant 9 : i32
    %510 = arith.truncf %508 : vector<8x64xf32> to vector<8x64xbf16>
    %cst_122 = arith.constant dense<0.000000e+00> : vector<8x256xf32>
    %511 = tpu.matmul %510, %3, %cst_122 {dimension_numbers = #tpu.dot_dimension_numbers<[1], [0], [0], [1], [0, 0, 1, 1], [], []>} : vector<8x64xbf16>, vector<64x256xbf16>, vector<8x256xf32> -> vector<8x256xf32>
    %512 = arith.index_cast %c9_i32 : i32 to index
    %c0_123 = arith.constant 0 : index
    %c0_124 = arith.constant 0 : index
    %513 = vector.load %arg1[%512, %c0_123, %c0_124] : memref<16x8x128xf32, #tpu.memory_space<vmem>>, vector<1x8x128xf32>
    %514 = vector.shape_cast %513 : vector<1x8x128xf32> to vector<8x128xf32>
    %515 = vector.extract_strided_slice %511 {offsets = [0, 0], sizes = [8, 128], strides = [1, 1]} : vector<8x256xf32> to vector<8x128xf32>
    %516 = arith.addf %514, %515 : vector<8x128xf32>
    %c15_i32_125 = arith.constant 15 : i32
    %517 = arith.subi %c15_i32_125, %c9_i32 : i32
    %518 = arith.index_cast %517 : i32 to index
    %c0_126 = arith.constant 0 : index
    %c0_127 = arith.constant 0 : index
    %519 = vector.load %arg2[%518, %c0_126, %c0_127] : memref<16x8x128xf32, #tpu.memory_space<vmem>>, vector<1x8x128xf32>
    %520 = vector.shape_cast %519 : vector<1x8x128xf32> to vector<8x128xf32>
    %521 = vector.extract_strided_slice %511 {offsets = [0, 128], sizes = [8, 128], strides = [1, 1]} : vector<8x256xf32> to vector<8x128xf32>
    %522 = arith.addf %520, %521 : vector<8x128xf32>
    %523 = arith.negf %516 : vector<8x128xf32>
    %524 = math.exp %523 : vector<8x128xf32>
    %cst_128 = arith.constant 1.000000e+00 : f32
    %525 = vector.broadcast %cst_128 : f32 to vector<8x128xf32>
    %526 = arith.addf %525, %524 : vector<8x128xf32>
    %527 = arith.divf %525, %526 : vector<8x128xf32>
    %528 = math.tanh %516 : vector<8x128xf32>
    %529 = vector.extract_strided_slice %509 {offsets = [0, 0], sizes = [8, 32], strides = [1, 1]} : vector<8x64xf32> to vector<8x32xf32>
    %530 = vector.extract_strided_slice %527 {offsets = [0, 0], sizes = [8, 32], strides = [1, 1]} : vector<8x128xf32> to vector<8x32xf32>
    %531 = vector.extract_strided_slice %527 {offsets = [0, 32], sizes = [8, 32], strides = [1, 1]} : vector<8x128xf32> to vector<8x32xf32>
    %532 = vector.extract_strided_slice %528 {offsets = [0, 64], sizes = [8, 32], strides = [1, 1]} : vector<8x128xf32> to vector<8x32xf32>
    %533 = vector.extract_strided_slice %527 {offsets = [0, 96], sizes = [8, 32], strides = [1, 1]} : vector<8x128xf32> to vector<8x32xf32>
    %534 = arith.mulf %531, %529 : vector<8x32xf32>
    %535 = arith.mulf %530, %532 : vector<8x32xf32>
    %536 = arith.addf %534, %535 : vector<8x32xf32>
    %537 = math.tanh %536 : vector<8x32xf32>
    %538 = arith.mulf %533, %537 : vector<8x32xf32>
    %539 = arith.negf %522 : vector<8x128xf32>
    %540 = math.exp %539 : vector<8x128xf32>
    %cst_129 = arith.constant 1.000000e+00 : f32
    %541 = vector.broadcast %cst_129 : f32 to vector<8x128xf32>
    %542 = arith.addf %541, %540 : vector<8x128xf32>
    %543 = arith.divf %541, %542 : vector<8x128xf32>
    %544 = math.tanh %522 : vector<8x128xf32>
    %545 = vector.extract_strided_slice %509 {offsets = [0, 32], sizes = [8, 32], strides = [1, 1]} : vector<8x64xf32> to vector<8x32xf32>
    %546 = vector.extract_strided_slice %543 {offsets = [0, 0], sizes = [8, 32], strides = [1, 1]} : vector<8x128xf32> to vector<8x32xf32>
    %547 = vector.extract_strided_slice %543 {offsets = [0, 32], sizes = [8, 32], strides = [1, 1]} : vector<8x128xf32> to vector<8x32xf32>
    %548 = vector.extract_strided_slice %544 {offsets = [0, 64], sizes = [8, 32], strides = [1, 1]} : vector<8x128xf32> to vector<8x32xf32>
    %549 = vector.extract_strided_slice %543 {offsets = [0, 96], sizes = [8, 32], strides = [1, 1]} : vector<8x128xf32> to vector<8x32xf32>
    %550 = arith.mulf %547, %545 : vector<8x32xf32>
    %551 = arith.mulf %546, %548 : vector<8x32xf32>
    %552 = arith.addf %550, %551 : vector<8x32xf32>
    %553 = math.tanh %552 : vector<8x32xf32>
    %554 = arith.mulf %549, %553 : vector<8x32xf32>
    %555 = arith.index_cast %c9_i32 : i32 to index
    %c0_130 = arith.constant 0 : index
    %c0_131 = arith.constant 0 : index
    %556 = vector.load %arg4[%555, %c0_130, %c0_131] : memref<16x8x32xf32, #tpu.memory_space<vmem>>, vector<1x8x32xf32>
    %557 = vector.shape_cast %556 : vector<1x8x32xf32> to vector<8x32xf32>
    %558 = vector.shape_cast %538 : vector<8x32xf32> to vector<1x8x32xf32>
    tpu.vector_store %arg4[%555, %c0_130, %c0_131], %558 {strides = array<i32>} : memref<16x8x32xf32, #tpu.memory_space<vmem>>, vector<1x8x32xf32>,
    %c15_i32_132 = arith.constant 15 : i32
    %559 = arith.subi %c15_i32_132, %c9_i32 : i32
    %560 = arith.index_cast %559 : i32 to index
    %c0_133 = arith.constant 0 : index
    %c0_134 = arith.constant 0 : index
    %561 = vector.load %arg5[%560, %c0_133, %c0_134] : memref<16x8x32xf32, #tpu.memory_space<vmem>>, vector<1x8x32xf32>
    %562 = vector.shape_cast %561 : vector<1x8x32xf32> to vector<8x32xf32>
    %563 = vector.shape_cast %554 : vector<8x32xf32> to vector<1x8x32xf32>
    tpu.vector_store %arg5[%560, %c0_133, %c0_134], %563 {strides = array<i32>} : memref<16x8x32xf32, #tpu.memory_space<vmem>>, vector<1x8x32xf32>,
    %564 = tpu.concatenate %538, %554 in 1 : vector<8x32xf32>, vector<8x32xf32> -> vector<8x64xf32>
    %565 = tpu.concatenate %536, %552 in 1 : vector<8x32xf32>, vector<8x32xf32> -> vector<8x64xf32>
    %c10_i32 = arith.constant 10 : i32
    %566 = arith.truncf %564 : vector<8x64xf32> to vector<8x64xbf16>
    %cst_135 = arith.constant dense<0.000000e+00> : vector<8x256xf32>
    %567 = tpu.matmul %566, %3, %cst_135 {dimension_numbers = #tpu.dot_dimension_numbers<[1], [0], [0], [1], [0, 0, 1, 1], [], []>} : vector<8x64xbf16>, vector<64x256xbf16>, vector<8x256xf32> -> vector<8x256xf32>
    %568 = arith.index_cast %c10_i32 : i32 to index
    %c0_136 = arith.constant 0 : index
    %c0_137 = arith.constant 0 : index
    %569 = vector.load %arg1[%568, %c0_136, %c0_137] : memref<16x8x128xf32, #tpu.memory_space<vmem>>, vector<1x8x128xf32>
    %570 = vector.shape_cast %569 : vector<1x8x128xf32> to vector<8x128xf32>
    %571 = vector.extract_strided_slice %567 {offsets = [0, 0], sizes = [8, 128], strides = [1, 1]} : vector<8x256xf32> to vector<8x128xf32>
    %572 = arith.addf %570, %571 : vector<8x128xf32>
    %c15_i32_138 = arith.constant 15 : i32
    %573 = arith.subi %c15_i32_138, %c10_i32 : i32
    %574 = arith.index_cast %573 : i32 to index
    %c0_139 = arith.constant 0 : index
    %c0_140 = arith.constant 0 : index
    %575 = vector.load %arg2[%574, %c0_139, %c0_140] : memref<16x8x128xf32, #tpu.memory_space<vmem>>, vector<1x8x128xf32>
    %576 = vector.shape_cast %575 : vector<1x8x128xf32> to vector<8x128xf32>
    %577 = vector.extract_strided_slice %567 {offsets = [0, 128], sizes = [8, 128], strides = [1, 1]} : vector<8x256xf32> to vector<8x128xf32>
    %578 = arith.addf %576, %577 : vector<8x128xf32>
    %579 = arith.negf %572 : vector<8x128xf32>
    %580 = math.exp %579 : vector<8x128xf32>
    %cst_141 = arith.constant 1.000000e+00 : f32
    %581 = vector.broadcast %cst_141 : f32 to vector<8x128xf32>
    %582 = arith.addf %581, %580 : vector<8x128xf32>
    %583 = arith.divf %581, %582 : vector<8x128xf32>
    %584 = math.tanh %572 : vector<8x128xf32>
    %585 = vector.extract_strided_slice %565 {offsets = [0, 0], sizes = [8, 32], strides = [1, 1]} : vector<8x64xf32> to vector<8x32xf32>
    %586 = vector.extract_strided_slice %583 {offsets = [0, 0], sizes = [8, 32], strides = [1, 1]} : vector<8x128xf32> to vector<8x32xf32>
    %587 = vector.extract_strided_slice %583 {offsets = [0, 32], sizes = [8, 32], strides = [1, 1]} : vector<8x128xf32> to vector<8x32xf32>
    %588 = vector.extract_strided_slice %584 {offsets = [0, 64], sizes = [8, 32], strides = [1, 1]} : vector<8x128xf32> to vector<8x32xf32>
    %589 = vector.extract_strided_slice %583 {offsets = [0, 96], sizes = [8, 32], strides = [1, 1]} : vector<8x128xf32> to vector<8x32xf32>
    %590 = arith.mulf %587, %585 : vector<8x32xf32>
    %591 = arith.mulf %586, %588 : vector<8x32xf32>
    %592 = arith.addf %590, %591 : vector<8x32xf32>
    %593 = math.tanh %592 : vector<8x32xf32>
    %594 = arith.mulf %589, %593 : vector<8x32xf32>
    %595 = arith.negf %578 : vector<8x128xf32>
    %596 = math.exp %595 : vector<8x128xf32>
    %cst_142 = arith.constant 1.000000e+00 : f32
    %597 = vector.broadcast %cst_142 : f32 to vector<8x128xf32>
    %598 = arith.addf %597, %596 : vector<8x128xf32>
    %599 = arith.divf %597, %598 : vector<8x128xf32>
    %600 = math.tanh %578 : vector<8x128xf32>
    %601 = vector.extract_strided_slice %565 {offsets = [0, 32], sizes = [8, 32], strides = [1, 1]} : vector<8x64xf32> to vector<8x32xf32>
    %602 = vector.extract_strided_slice %599 {offsets = [0, 0], sizes = [8, 32], strides = [1, 1]} : vector<8x128xf32> to vector<8x32xf32>
    %603 = vector.extract_strided_slice %599 {offsets = [0, 32], sizes = [8, 32], strides = [1, 1]} : vector<8x128xf32> to vector<8x32xf32>
    %604 = vector.extract_strided_slice %600 {offsets = [0, 64], sizes = [8, 32], strides = [1, 1]} : vector<8x128xf32> to vector<8x32xf32>
    %605 = vector.extract_strided_slice %599 {offsets = [0, 96], sizes = [8, 32], strides = [1, 1]} : vector<8x128xf32> to vector<8x32xf32>
    %606 = arith.mulf %603, %601 : vector<8x32xf32>
    %607 = arith.mulf %602, %604 : vector<8x32xf32>
    %608 = arith.addf %606, %607 : vector<8x32xf32>
    %609 = math.tanh %608 : vector<8x32xf32>
    %610 = arith.mulf %605, %609 : vector<8x32xf32>
    %611 = arith.index_cast %c10_i32 : i32 to index
    %c0_143 = arith.constant 0 : index
    %c0_144 = arith.constant 0 : index
    %612 = vector.load %arg4[%611, %c0_143, %c0_144] : memref<16x8x32xf32, #tpu.memory_space<vmem>>, vector<1x8x32xf32>
    %613 = vector.shape_cast %612 : vector<1x8x32xf32> to vector<8x32xf32>
    %614 = vector.shape_cast %594 : vector<8x32xf32> to vector<1x8x32xf32>
    tpu.vector_store %arg4[%611, %c0_143, %c0_144], %614 {strides = array<i32>} : memref<16x8x32xf32, #tpu.memory_space<vmem>>, vector<1x8x32xf32>,
    %c15_i32_145 = arith.constant 15 : i32
    %615 = arith.subi %c15_i32_145, %c10_i32 : i32
    %616 = arith.index_cast %615 : i32 to index
    %c0_146 = arith.constant 0 : index
    %c0_147 = arith.constant 0 : index
    %617 = vector.load %arg5[%616, %c0_146, %c0_147] : memref<16x8x32xf32, #tpu.memory_space<vmem>>, vector<1x8x32xf32>
    %618 = vector.shape_cast %617 : vector<1x8x32xf32> to vector<8x32xf32>
    %619 = vector.shape_cast %610 : vector<8x32xf32> to vector<1x8x32xf32>
    tpu.vector_store %arg5[%616, %c0_146, %c0_147], %619 {strides = array<i32>} : memref<16x8x32xf32, #tpu.memory_space<vmem>>, vector<1x8x32xf32>,
    %620 = tpu.concatenate %594, %610 in 1 : vector<8x32xf32>, vector<8x32xf32> -> vector<8x64xf32>
    %621 = tpu.concatenate %592, %608 in 1 : vector<8x32xf32>, vector<8x32xf32> -> vector<8x64xf32>
    %c11_i32 = arith.constant 11 : i32
    %622 = arith.truncf %620 : vector<8x64xf32> to vector<8x64xbf16>
    %cst_148 = arith.constant dense<0.000000e+00> : vector<8x256xf32>
    %623 = tpu.matmul %622, %3, %cst_148 {dimension_numbers = #tpu.dot_dimension_numbers<[1], [0], [0], [1], [0, 0, 1, 1], [], []>} : vector<8x64xbf16>, vector<64x256xbf16>, vector<8x256xf32> -> vector<8x256xf32>
    %624 = arith.index_cast %c11_i32 : i32 to index
    %c0_149 = arith.constant 0 : index
    %c0_150 = arith.constant 0 : index
    %625 = vector.load %arg1[%624, %c0_149, %c0_150] : memref<16x8x128xf32, #tpu.memory_space<vmem>>, vector<1x8x128xf32>
    %626 = vector.shape_cast %625 : vector<1x8x128xf32> to vector<8x128xf32>
    %627 = vector.extract_strided_slice %623 {offsets = [0, 0], sizes = [8, 128], strides = [1, 1]} : vector<8x256xf32> to vector<8x128xf32>
    %628 = arith.addf %626, %627 : vector<8x128xf32>
    %c15_i32_151 = arith.constant 15 : i32
    %629 = arith.subi %c15_i32_151, %c11_i32 : i32
    %630 = arith.index_cast %629 : i32 to index
    %c0_152 = arith.constant 0 : index
    %c0_153 = arith.constant 0 : index
    %631 = vector.load %arg2[%630, %c0_152, %c0_153] : memref<16x8x128xf32, #tpu.memory_space<vmem>>, vector<1x8x128xf32>
    %632 = vector.shape_cast %631 : vector<1x8x128xf32> to vector<8x128xf32>
    %633 = vector.extract_strided_slice %623 {offsets = [0, 128], sizes = [8, 128], strides = [1, 1]} : vector<8x256xf32> to vector<8x128xf32>
    %634 = arith.addf %632, %633 : vector<8x128xf32>
    %635 = arith.negf %628 : vector<8x128xf32>
    %636 = math.exp %635 : vector<8x128xf32>
    %cst_154 = arith.constant 1.000000e+00 : f32
    %637 = vector.broadcast %cst_154 : f32 to vector<8x128xf32>
    %638 = arith.addf %637, %636 : vector<8x128xf32>
    %639 = arith.divf %637, %638 : vector<8x128xf32>
    %640 = math.tanh %628 : vector<8x128xf32>
    %641 = vector.extract_strided_slice %621 {offsets = [0, 0], sizes = [8, 32], strides = [1, 1]} : vector<8x64xf32> to vector<8x32xf32>
    %642 = vector.extract_strided_slice %639 {offsets = [0, 0], sizes = [8, 32], strides = [1, 1]} : vector<8x128xf32> to vector<8x32xf32>
    %643 = vector.extract_strided_slice %639 {offsets = [0, 32], sizes = [8, 32], strides = [1, 1]} : vector<8x128xf32> to vector<8x32xf32>
    %644 = vector.extract_strided_slice %640 {offsets = [0, 64], sizes = [8, 32], strides = [1, 1]} : vector<8x128xf32> to vector<8x32xf32>
    %645 = vector.extract_strided_slice %639 {offsets = [0, 96], sizes = [8, 32], strides = [1, 1]} : vector<8x128xf32> to vector<8x32xf32>
    %646 = arith.mulf %643, %641 : vector<8x32xf32>
    %647 = arith.mulf %642, %644 : vector<8x32xf32>
    %648 = arith.addf %646, %647 : vector<8x32xf32>
    %649 = math.tanh %648 : vector<8x32xf32>
    %650 = arith.mulf %645, %649 : vector<8x32xf32>
    %651 = arith.negf %634 : vector<8x128xf32>
    %652 = math.exp %651 : vector<8x128xf32>
    %cst_155 = arith.constant 1.000000e+00 : f32
    %653 = vector.broadcast %cst_155 : f32 to vector<8x128xf32>
    %654 = arith.addf %653, %652 : vector<8x128xf32>
    %655 = arith.divf %653, %654 : vector<8x128xf32>
    %656 = math.tanh %634 : vector<8x128xf32>
    %657 = vector.extract_strided_slice %621 {offsets = [0, 32], sizes = [8, 32], strides = [1, 1]} : vector<8x64xf32> to vector<8x32xf32>
    %658 = vector.extract_strided_slice %655 {offsets = [0, 0], sizes = [8, 32], strides = [1, 1]} : vector<8x128xf32> to vector<8x32xf32>
    %659 = vector.extract_strided_slice %655 {offsets = [0, 32], sizes = [8, 32], strides = [1, 1]} : vector<8x128xf32> to vector<8x32xf32>
    %660 = vector.extract_strided_slice %656 {offsets = [0, 64], sizes = [8, 32], strides = [1, 1]} : vector<8x128xf32> to vector<8x32xf32>
    %661 = vector.extract_strided_slice %655 {offsets = [0, 96], sizes = [8, 32], strides = [1, 1]} : vector<8x128xf32> to vector<8x32xf32>
    %662 = arith.mulf %659, %657 : vector<8x32xf32>
    %663 = arith.mulf %658, %660 : vector<8x32xf32>
    %664 = arith.addf %662, %663 : vector<8x32xf32>
    %665 = math.tanh %664 : vector<8x32xf32>
    %666 = arith.mulf %661, %665 : vector<8x32xf32>
    %667 = arith.index_cast %c11_i32 : i32 to index
    %c0_156 = arith.constant 0 : index
    %c0_157 = arith.constant 0 : index
    %668 = vector.load %arg4[%667, %c0_156, %c0_157] : memref<16x8x32xf32, #tpu.memory_space<vmem>>, vector<1x8x32xf32>
    %669 = vector.shape_cast %668 : vector<1x8x32xf32> to vector<8x32xf32>
    %670 = vector.shape_cast %650 : vector<8x32xf32> to vector<1x8x32xf32>
    tpu.vector_store %arg4[%667, %c0_156, %c0_157], %670 {strides = array<i32>} : memref<16x8x32xf32, #tpu.memory_space<vmem>>, vector<1x8x32xf32>,
    %c15_i32_158 = arith.constant 15 : i32
    %671 = arith.subi %c15_i32_158, %c11_i32 : i32
    %672 = arith.index_cast %671 : i32 to index
    %c0_159 = arith.constant 0 : index
    %c0_160 = arith.constant 0 : index
    %673 = vector.load %arg5[%672, %c0_159, %c0_160] : memref<16x8x32xf32, #tpu.memory_space<vmem>>, vector<1x8x32xf32>
    %674 = vector.shape_cast %673 : vector<1x8x32xf32> to vector<8x32xf32>
    %675 = vector.shape_cast %666 : vector<8x32xf32> to vector<1x8x32xf32>
    tpu.vector_store %arg5[%672, %c0_159, %c0_160], %675 {strides = array<i32>} : memref<16x8x32xf32, #tpu.memory_space<vmem>>, vector<1x8x32xf32>,
    %676 = tpu.concatenate %650, %666 in 1 : vector<8x32xf32>, vector<8x32xf32> -> vector<8x64xf32>
    %677 = tpu.concatenate %648, %664 in 1 : vector<8x32xf32>, vector<8x32xf32> -> vector<8x64xf32>
    %c12_i32 = arith.constant 12 : i32
    %678 = arith.truncf %676 : vector<8x64xf32> to vector<8x64xbf16>
    %cst_161 = arith.constant dense<0.000000e+00> : vector<8x256xf32>
    %679 = tpu.matmul %678, %3, %cst_161 {dimension_numbers = #tpu.dot_dimension_numbers<[1], [0], [0], [1], [0, 0, 1, 1], [], []>} : vector<8x64xbf16>, vector<64x256xbf16>, vector<8x256xf32> -> vector<8x256xf32>
    %680 = arith.index_cast %c12_i32 : i32 to index
    %c0_162 = arith.constant 0 : index
    %c0_163 = arith.constant 0 : index
    %681 = vector.load %arg1[%680, %c0_162, %c0_163] : memref<16x8x128xf32, #tpu.memory_space<vmem>>, vector<1x8x128xf32>
    %682 = vector.shape_cast %681 : vector<1x8x128xf32> to vector<8x128xf32>
    %683 = vector.extract_strided_slice %679 {offsets = [0, 0], sizes = [8, 128], strides = [1, 1]} : vector<8x256xf32> to vector<8x128xf32>
    %684 = arith.addf %682, %683 : vector<8x128xf32>
    %c15_i32_164 = arith.constant 15 : i32
    %685 = arith.subi %c15_i32_164, %c12_i32 : i32
    %686 = arith.index_cast %685 : i32 to index
    %c0_165 = arith.constant 0 : index
    %c0_166 = arith.constant 0 : index
    %687 = vector.load %arg2[%686, %c0_165, %c0_166] : memref<16x8x128xf32, #tpu.memory_space<vmem>>, vector<1x8x128xf32>
    %688 = vector.shape_cast %687 : vector<1x8x128xf32> to vector<8x128xf32>
    %689 = vector.extract_strided_slice %679 {offsets = [0, 128], sizes = [8, 128], strides = [1, 1]} : vector<8x256xf32> to vector<8x128xf32>
    %690 = arith.addf %688, %689 : vector<8x128xf32>
    %691 = arith.negf %684 : vector<8x128xf32>
    %692 = math.exp %691 : vector<8x128xf32>
    %cst_167 = arith.constant 1.000000e+00 : f32
    %693 = vector.broadcast %cst_167 : f32 to vector<8x128xf32>
    %694 = arith.addf %693, %692 : vector<8x128xf32>
    %695 = arith.divf %693, %694 : vector<8x128xf32>
    %696 = math.tanh %684 : vector<8x128xf32>
    %697 = vector.extract_strided_slice %677 {offsets = [0, 0], sizes = [8, 32], strides = [1, 1]} : vector<8x64xf32> to vector<8x32xf32>
    %698 = vector.extract_strided_slice %695 {offsets = [0, 0], sizes = [8, 32], strides = [1, 1]} : vector<8x128xf32> to vector<8x32xf32>
    %699 = vector.extract_strided_slice %695 {offsets = [0, 32], sizes = [8, 32], strides = [1, 1]} : vector<8x128xf32> to vector<8x32xf32>
    %700 = vector.extract_strided_slice %696 {offsets = [0, 64], sizes = [8, 32], strides = [1, 1]} : vector<8x128xf32> to vector<8x32xf32>
    %701 = vector.extract_strided_slice %695 {offsets = [0, 96], sizes = [8, 32], strides = [1, 1]} : vector<8x128xf32> to vector<8x32xf32>
    %702 = arith.mulf %699, %697 : vector<8x32xf32>
    %703 = arith.mulf %698, %700 : vector<8x32xf32>
    %704 = arith.addf %702, %703 : vector<8x32xf32>
    %705 = math.tanh %704 : vector<8x32xf32>
    %706 = arith.mulf %701, %705 : vector<8x32xf32>
    %707 = arith.negf %690 : vector<8x128xf32>
    %708 = math.exp %707 : vector<8x128xf32>
    %cst_168 = arith.constant 1.000000e+00 : f32
    %709 = vector.broadcast %cst_168 : f32 to vector<8x128xf32>
    %710 = arith.addf %709, %708 : vector<8x128xf32>
    %711 = arith.divf %709, %710 : vector<8x128xf32>
    %712 = math.tanh %690 : vector<8x128xf32>
    %713 = vector.extract_strided_slice %677 {offsets = [0, 32], sizes = [8, 32], strides = [1, 1]} : vector<8x64xf32> to vector<8x32xf32>
    %714 = vector.extract_strided_slice %711 {offsets = [0, 0], sizes = [8, 32], strides = [1, 1]} : vector<8x128xf32> to vector<8x32xf32>
    %715 = vector.extract_strided_slice %711 {offsets = [0, 32], sizes = [8, 32], strides = [1, 1]} : vector<8x128xf32> to vector<8x32xf32>
    %716 = vector.extract_strided_slice %712 {offsets = [0, 64], sizes = [8, 32], strides = [1, 1]} : vector<8x128xf32> to vector<8x32xf32>
    %717 = vector.extract_strided_slice %711 {offsets = [0, 96], sizes = [8, 32], strides = [1, 1]} : vector<8x128xf32> to vector<8x32xf32>
    %718 = arith.mulf %715, %713 : vector<8x32xf32>
    %719 = arith.mulf %714, %716 : vector<8x32xf32>
    %720 = arith.addf %718, %719 : vector<8x32xf32>
    %721 = math.tanh %720 : vector<8x32xf32>
    %722 = arith.mulf %717, %721 : vector<8x32xf32>
    %723 = arith.index_cast %c12_i32 : i32 to index
    %c0_169 = arith.constant 0 : index
    %c0_170 = arith.constant 0 : index
    %724 = vector.load %arg4[%723, %c0_169, %c0_170] : memref<16x8x32xf32, #tpu.memory_space<vmem>>, vector<1x8x32xf32>
    %725 = vector.shape_cast %724 : vector<1x8x32xf32> to vector<8x32xf32>
    %726 = vector.shape_cast %706 : vector<8x32xf32> to vector<1x8x32xf32>
    tpu.vector_store %arg4[%723, %c0_169, %c0_170], %726 {strides = array<i32>} : memref<16x8x32xf32, #tpu.memory_space<vmem>>, vector<1x8x32xf32>,
    %c15_i32_171 = arith.constant 15 : i32
    %727 = arith.subi %c15_i32_171, %c12_i32 : i32
    %728 = arith.index_cast %727 : i32 to index
    %c0_172 = arith.constant 0 : index
    %c0_173 = arith.constant 0 : index
    %729 = vector.load %arg5[%728, %c0_172, %c0_173] : memref<16x8x32xf32, #tpu.memory_space<vmem>>, vector<1x8x32xf32>
    %730 = vector.shape_cast %729 : vector<1x8x32xf32> to vector<8x32xf32>
    %731 = vector.shape_cast %722 : vector<8x32xf32> to vector<1x8x32xf32>
    tpu.vector_store %arg5[%728, %c0_172, %c0_173], %731 {strides = array<i32>} : memref<16x8x32xf32, #tpu.memory_space<vmem>>, vector<1x8x32xf32>,
    %732 = tpu.concatenate %706, %722 in 1 : vector<8x32xf32>, vector<8x32xf32> -> vector<8x64xf32>
    %733 = tpu.concatenate %704, %720 in 1 : vector<8x32xf32>, vector<8x32xf32> -> vector<8x64xf32>
    %c13_i32 = arith.constant 13 : i32
    %734 = arith.truncf %732 : vector<8x64xf32> to vector<8x64xbf16>
    %cst_174 = arith.constant dense<0.000000e+00> : vector<8x256xf32>
    %735 = tpu.matmul %734, %3, %cst_174 {dimension_numbers = #tpu.dot_dimension_numbers<[1], [0], [0], [1], [0, 0, 1, 1], [], []>} : vector<8x64xbf16>, vector<64x256xbf16>, vector<8x256xf32> -> vector<8x256xf32>
    %736 = arith.index_cast %c13_i32 : i32 to index
    %c0_175 = arith.constant 0 : index
    %c0_176 = arith.constant 0 : index
    %737 = vector.load %arg1[%736, %c0_175, %c0_176] : memref<16x8x128xf32, #tpu.memory_space<vmem>>, vector<1x8x128xf32>
    %738 = vector.shape_cast %737 : vector<1x8x128xf32> to vector<8x128xf32>
    %739 = vector.extract_strided_slice %735 {offsets = [0, 0], sizes = [8, 128], strides = [1, 1]} : vector<8x256xf32> to vector<8x128xf32>
    %740 = arith.addf %738, %739 : vector<8x128xf32>
    %c15_i32_177 = arith.constant 15 : i32
    %741 = arith.subi %c15_i32_177, %c13_i32 : i32
    %742 = arith.index_cast %741 : i32 to index
    %c0_178 = arith.constant 0 : index
    %c0_179 = arith.constant 0 : index
    %743 = vector.load %arg2[%742, %c0_178, %c0_179] : memref<16x8x128xf32, #tpu.memory_space<vmem>>, vector<1x8x128xf32>
    %744 = vector.shape_cast %743 : vector<1x8x128xf32> to vector<8x128xf32>
    %745 = vector.extract_strided_slice %735 {offsets = [0, 128], sizes = [8, 128], strides = [1, 1]} : vector<8x256xf32> to vector<8x128xf32>
    %746 = arith.addf %744, %745 : vector<8x128xf32>
    %747 = arith.negf %740 : vector<8x128xf32>
    %748 = math.exp %747 : vector<8x128xf32>
    %cst_180 = arith.constant 1.000000e+00 : f32
    %749 = vector.broadcast %cst_180 : f32 to vector<8x128xf32>
    %750 = arith.addf %749, %748 : vector<8x128xf32>
    %751 = arith.divf %749, %750 : vector<8x128xf32>
    %752 = math.tanh %740 : vector<8x128xf32>
    %753 = vector.extract_strided_slice %733 {offsets = [0, 0], sizes = [8, 32], strides = [1, 1]} : vector<8x64xf32> to vector<8x32xf32>
    %754 = vector.extract_strided_slice %751 {offsets = [0, 0], sizes = [8, 32], strides = [1, 1]} : vector<8x128xf32> to vector<8x32xf32>
    %755 = vector.extract_strided_slice %751 {offsets = [0, 32], sizes = [8, 32], strides = [1, 1]} : vector<8x128xf32> to vector<8x32xf32>
    %756 = vector.extract_strided_slice %752 {offsets = [0, 64], sizes = [8, 32], strides = [1, 1]} : vector<8x128xf32> to vector<8x32xf32>
    %757 = vector.extract_strided_slice %751 {offsets = [0, 96], sizes = [8, 32], strides = [1, 1]} : vector<8x128xf32> to vector<8x32xf32>
    %758 = arith.mulf %755, %753 : vector<8x32xf32>
    %759 = arith.mulf %754, %756 : vector<8x32xf32>
    %760 = arith.addf %758, %759 : vector<8x32xf32>
    %761 = math.tanh %760 : vector<8x32xf32>
    %762 = arith.mulf %757, %761 : vector<8x32xf32>
    %763 = arith.negf %746 : vector<8x128xf32>
    %764 = math.exp %763 : vector<8x128xf32>
    %cst_181 = arith.constant 1.000000e+00 : f32
    %765 = vector.broadcast %cst_181 : f32 to vector<8x128xf32>
    %766 = arith.addf %765, %764 : vector<8x128xf32>
    %767 = arith.divf %765, %766 : vector<8x128xf32>
    %768 = math.tanh %746 : vector<8x128xf32>
    %769 = vector.extract_strided_slice %733 {offsets = [0, 32], sizes = [8, 32], strides = [1, 1]} : vector<8x64xf32> to vector<8x32xf32>
    %770 = vector.extract_strided_slice %767 {offsets = [0, 0], sizes = [8, 32], strides = [1, 1]} : vector<8x128xf32> to vector<8x32xf32>
    %771 = vector.extract_strided_slice %767 {offsets = [0, 32], sizes = [8, 32], strides = [1, 1]} : vector<8x128xf32> to vector<8x32xf32>
    %772 = vector.extract_strided_slice %768 {offsets = [0, 64], sizes = [8, 32], strides = [1, 1]} : vector<8x128xf32> to vector<8x32xf32>
    %773 = vector.extract_strided_slice %767 {offsets = [0, 96], sizes = [8, 32], strides = [1, 1]} : vector<8x128xf32> to vector<8x32xf32>
    %774 = arith.mulf %771, %769 : vector<8x32xf32>
    %775 = arith.mulf %770, %772 : vector<8x32xf32>
    %776 = arith.addf %774, %775 : vector<8x32xf32>
    %777 = math.tanh %776 : vector<8x32xf32>
    %778 = arith.mulf %773, %777 : vector<8x32xf32>
    %779 = arith.index_cast %c13_i32 : i32 to index
    %c0_182 = arith.constant 0 : index
    %c0_183 = arith.constant 0 : index
    %780 = vector.load %arg4[%779, %c0_182, %c0_183] : memref<16x8x32xf32, #tpu.memory_space<vmem>>, vector<1x8x32xf32>
    %781 = vector.shape_cast %780 : vector<1x8x32xf32> to vector<8x32xf32>
    %782 = vector.shape_cast %762 : vector<8x32xf32> to vector<1x8x32xf32>
    tpu.vector_store %arg4[%779, %c0_182, %c0_183], %782 {strides = array<i32>} : memref<16x8x32xf32, #tpu.memory_space<vmem>>, vector<1x8x32xf32>,
    %c15_i32_184 = arith.constant 15 : i32
    %783 = arith.subi %c15_i32_184, %c13_i32 : i32
    %784 = arith.index_cast %783 : i32 to index
    %c0_185 = arith.constant 0 : index
    %c0_186 = arith.constant 0 : index
    %785 = vector.load %arg5[%784, %c0_185, %c0_186] : memref<16x8x32xf32, #tpu.memory_space<vmem>>, vector<1x8x32xf32>
    %786 = vector.shape_cast %785 : vector<1x8x32xf32> to vector<8x32xf32>
    %787 = vector.shape_cast %778 : vector<8x32xf32> to vector<1x8x32xf32>
    tpu.vector_store %arg5[%784, %c0_185, %c0_186], %787 {strides = array<i32>} : memref<16x8x32xf32, #tpu.memory_space<vmem>>, vector<1x8x32xf32>,
    %788 = tpu.concatenate %762, %778 in 1 : vector<8x32xf32>, vector<8x32xf32> -> vector<8x64xf32>
    %789 = tpu.concatenate %760, %776 in 1 : vector<8x32xf32>, vector<8x32xf32> -> vector<8x64xf32>
    %c14_i32 = arith.constant 14 : i32
    %790 = arith.truncf %788 : vector<8x64xf32> to vector<8x64xbf16>
    %cst_187 = arith.constant dense<0.000000e+00> : vector<8x256xf32>
    %791 = tpu.matmul %790, %3, %cst_187 {dimension_numbers = #tpu.dot_dimension_numbers<[1], [0], [0], [1], [0, 0, 1, 1], [], []>} : vector<8x64xbf16>, vector<64x256xbf16>, vector<8x256xf32> -> vector<8x256xf32>
    %792 = arith.index_cast %c14_i32 : i32 to index
    %c0_188 = arith.constant 0 : index
    %c0_189 = arith.constant 0 : index
    %793 = vector.load %arg1[%792, %c0_188, %c0_189] : memref<16x8x128xf32, #tpu.memory_space<vmem>>, vector<1x8x128xf32>
    %794 = vector.shape_cast %793 : vector<1x8x128xf32> to vector<8x128xf32>
    %795 = vector.extract_strided_slice %791 {offsets = [0, 0], sizes = [8, 128], strides = [1, 1]} : vector<8x256xf32> to vector<8x128xf32>
    %796 = arith.addf %794, %795 : vector<8x128xf32>
    %c15_i32_190 = arith.constant 15 : i32
    %797 = arith.subi %c15_i32_190, %c14_i32 : i32
    %798 = arith.index_cast %797 : i32 to index
    %c0_191 = arith.constant 0 : index
    %c0_192 = arith.constant 0 : index
    %799 = vector.load %arg2[%798, %c0_191, %c0_192] : memref<16x8x128xf32, #tpu.memory_space<vmem>>, vector<1x8x128xf32>
    %800 = vector.shape_cast %799 : vector<1x8x128xf32> to vector<8x128xf32>
    %801 = vector.extract_strided_slice %791 {offsets = [0, 128], sizes = [8, 128], strides = [1, 1]} : vector<8x256xf32> to vector<8x128xf32>
    %802 = arith.addf %800, %801 : vector<8x128xf32>
    %803 = arith.negf %796 : vector<8x128xf32>
    %804 = math.exp %803 : vector<8x128xf32>
    %cst_193 = arith.constant 1.000000e+00 : f32
    %805 = vector.broadcast %cst_193 : f32 to vector<8x128xf32>
    %806 = arith.addf %805, %804 : vector<8x128xf32>
    %807 = arith.divf %805, %806 : vector<8x128xf32>
    %808 = math.tanh %796 : vector<8x128xf32>
    %809 = vector.extract_strided_slice %789 {offsets = [0, 0], sizes = [8, 32], strides = [1, 1]} : vector<8x64xf32> to vector<8x32xf32>
    %810 = vector.extract_strided_slice %807 {offsets = [0, 0], sizes = [8, 32], strides = [1, 1]} : vector<8x128xf32> to vector<8x32xf32>
    %811 = vector.extract_strided_slice %807 {offsets = [0, 32], sizes = [8, 32], strides = [1, 1]} : vector<8x128xf32> to vector<8x32xf32>
    %812 = vector.extract_strided_slice %808 {offsets = [0, 64], sizes = [8, 32], strides = [1, 1]} : vector<8x128xf32> to vector<8x32xf32>
    %813 = vector.extract_strided_slice %807 {offsets = [0, 96], sizes = [8, 32], strides = [1, 1]} : vector<8x128xf32> to vector<8x32xf32>
    %814 = arith.mulf %811, %809 : vector<8x32xf32>
    %815 = arith.mulf %810, %812 : vector<8x32xf32>
    %816 = arith.addf %814, %815 : vector<8x32xf32>
    %817 = math.tanh %816 : vector<8x32xf32>
    %818 = arith.mulf %813, %817 : vector<8x32xf32>
    %819 = arith.negf %802 : vector<8x128xf32>
    %820 = math.exp %819 : vector<8x128xf32>
    %cst_194 = arith.constant 1.000000e+00 : f32
    %821 = vector.broadcast %cst_194 : f32 to vector<8x128xf32>
    %822 = arith.addf %821, %820 : vector<8x128xf32>
    %823 = arith.divf %821, %822 : vector<8x128xf32>
    %824 = math.tanh %802 : vector<8x128xf32>
    %825 = vector.extract_strided_slice %789 {offsets = [0, 32], sizes = [8, 32], strides = [1, 1]} : vector<8x64xf32> to vector<8x32xf32>
    %826 = vector.extract_strided_slice %823 {offsets = [0, 0], sizes = [8, 32], strides = [1, 1]} : vector<8x128xf32> to vector<8x32xf32>
    %827 = vector.extract_strided_slice %823 {offsets = [0, 32], sizes = [8, 32], strides = [1, 1]} : vector<8x128xf32> to vector<8x32xf32>
    %828 = vector.extract_strided_slice %824 {offsets = [0, 64], sizes = [8, 32], strides = [1, 1]} : vector<8x128xf32> to vector<8x32xf32>
    %829 = vector.extract_strided_slice %823 {offsets = [0, 96], sizes = [8, 32], strides = [1, 1]} : vector<8x128xf32> to vector<8x32xf32>
    %830 = arith.mulf %827, %825 : vector<8x32xf32>
    %831 = arith.mulf %826, %828 : vector<8x32xf32>
    %832 = arith.addf %830, %831 : vector<8x32xf32>
    %833 = math.tanh %832 : vector<8x32xf32>
    %834 = arith.mulf %829, %833 : vector<8x32xf32>
    %835 = arith.index_cast %c14_i32 : i32 to index
    %c0_195 = arith.constant 0 : index
    %c0_196 = arith.constant 0 : index
    %836 = vector.load %arg4[%835, %c0_195, %c0_196] : memref<16x8x32xf32, #tpu.memory_space<vmem>>, vector<1x8x32xf32>
    %837 = vector.shape_cast %836 : vector<1x8x32xf32> to vector<8x32xf32>
    %838 = vector.shape_cast %818 : vector<8x32xf32> to vector<1x8x32xf32>
    tpu.vector_store %arg4[%835, %c0_195, %c0_196], %838 {strides = array<i32>} : memref<16x8x32xf32, #tpu.memory_space<vmem>>, vector<1x8x32xf32>,
    %c15_i32_197 = arith.constant 15 : i32
    %839 = arith.subi %c15_i32_197, %c14_i32 : i32
    %840 = arith.index_cast %839 : i32 to index
    %c0_198 = arith.constant 0 : index
    %c0_199 = arith.constant 0 : index
    %841 = vector.load %arg5[%840, %c0_198, %c0_199] : memref<16x8x32xf32, #tpu.memory_space<vmem>>, vector<1x8x32xf32>
    %842 = vector.shape_cast %841 : vector<1x8x32xf32> to vector<8x32xf32>
    %843 = vector.shape_cast %834 : vector<8x32xf32> to vector<1x8x32xf32>
    tpu.vector_store %arg5[%840, %c0_198, %c0_199], %843 {strides = array<i32>} : memref<16x8x32xf32, #tpu.memory_space<vmem>>, vector<1x8x32xf32>,
    %844 = tpu.concatenate %818, %834 in 1 : vector<8x32xf32>, vector<8x32xf32> -> vector<8x64xf32>
    %845 = tpu.concatenate %816, %832 in 1 : vector<8x32xf32>, vector<8x32xf32> -> vector<8x64xf32>
    %c15_i32_200 = arith.constant 15 : i32
    %846 = arith.truncf %844 : vector<8x64xf32> to vector<8x64xbf16>
    %cst_201 = arith.constant dense<0.000000e+00> : vector<8x256xf32>
    %847 = tpu.matmul %846, %3, %cst_201 {dimension_numbers = #tpu.dot_dimension_numbers<[1], [0], [0], [1], [0, 0, 1, 1], [], []>} : vector<8x64xbf16>, vector<64x256xbf16>, vector<8x256xf32> -> vector<8x256xf32>
    %848 = arith.index_cast %c15_i32_200 : i32 to index
    %c0_202 = arith.constant 0 : index
    %c0_203 = arith.constant 0 : index
    %849 = vector.load %arg1[%848, %c0_202, %c0_203] : memref<16x8x128xf32, #tpu.memory_space<vmem>>, vector<1x8x128xf32>
    %850 = vector.shape_cast %849 : vector<1x8x128xf32> to vector<8x128xf32>
    %851 = vector.extract_strided_slice %847 {offsets = [0, 0], sizes = [8, 128], strides = [1, 1]} : vector<8x256xf32> to vector<8x128xf32>
    %852 = arith.addf %850, %851 : vector<8x128xf32>
    %c15_i32_204 = arith.constant 15 : i32
    %853 = arith.subi %c15_i32_204, %c15_i32_200 : i32
    %854 = arith.index_cast %853 : i32 to index
    %c0_205 = arith.constant 0 : index
    %c0_206 = arith.constant 0 : index
    %855 = vector.load %arg2[%854, %c0_205, %c0_206] : memref<16x8x128xf32, #tpu.memory_space<vmem>>, vector<1x8x128xf32>
    %856 = vector.shape_cast %855 : vector<1x8x128xf32> to vector<8x128xf32>
    %857 = vector.extract_strided_slice %847 {offsets = [0, 128], sizes = [8, 128], strides = [1, 1]} : vector<8x256xf32> to vector<8x128xf32>
    %858 = arith.addf %856, %857 : vector<8x128xf32>
    %859 = arith.negf %852 : vector<8x128xf32>
    %860 = math.exp %859 : vector<8x128xf32>
    %cst_207 = arith.constant 1.000000e+00 : f32
    %861 = vector.broadcast %cst_207 : f32 to vector<8x128xf32>
    %862 = arith.addf %861, %860 : vector<8x128xf32>
    %863 = arith.divf %861, %862 : vector<8x128xf32>
    %864 = math.tanh %852 : vector<8x128xf32>
    %865 = vector.extract_strided_slice %845 {offsets = [0, 0], sizes = [8, 32], strides = [1, 1]} : vector<8x64xf32> to vector<8x32xf32>
    %866 = vector.extract_strided_slice %863 {offsets = [0, 0], sizes = [8, 32], strides = [1, 1]} : vector<8x128xf32> to vector<8x32xf32>
    %867 = vector.extract_strided_slice %863 {offsets = [0, 32], sizes = [8, 32], strides = [1, 1]} : vector<8x128xf32> to vector<8x32xf32>
    %868 = vector.extract_strided_slice %864 {offsets = [0, 64], sizes = [8, 32], strides = [1, 1]} : vector<8x128xf32> to vector<8x32xf32>
    %869 = vector.extract_strided_slice %863 {offsets = [0, 96], sizes = [8, 32], strides = [1, 1]} : vector<8x128xf32> to vector<8x32xf32>
    %870 = arith.mulf %867, %865 : vector<8x32xf32>
    %871 = arith.mulf %866, %868 : vector<8x32xf32>
    %872 = arith.addf %870, %871 : vector<8x32xf32>
    %873 = math.tanh %872 : vector<8x32xf32>
    %874 = arith.mulf %869, %873 : vector<8x32xf32>
    %875 = arith.negf %858 : vector<8x128xf32>
    %876 = math.exp %875 : vector<8x128xf32>
    %cst_208 = arith.constant 1.000000e+00 : f32
    %877 = vector.broadcast %cst_208 : f32 to vector<8x128xf32>
    %878 = arith.addf %877, %876 : vector<8x128xf32>
    %879 = arith.divf %877, %878 : vector<8x128xf32>
    %880 = math.tanh %858 : vector<8x128xf32>
    %881 = vector.extract_strided_slice %845 {offsets = [0, 32], sizes = [8, 32], strides = [1, 1]} : vector<8x64xf32> to vector<8x32xf32>
    %882 = vector.extract_strided_slice %879 {offsets = [0, 0], sizes = [8, 32], strides = [1, 1]} : vector<8x128xf32> to vector<8x32xf32>
    %883 = vector.extract_strided_slice %879 {offsets = [0, 32], sizes = [8, 32], strides = [1, 1]} : vector<8x128xf32> to vector<8x32xf32>
    %884 = vector.extract_strided_slice %880 {offsets = [0, 64], sizes = [8, 32], strides = [1, 1]} : vector<8x128xf32> to vector<8x32xf32>
    %885 = vector.extract_strided_slice %879 {offsets = [0, 96], sizes = [8, 32], strides = [1, 1]} : vector<8x128xf32> to vector<8x32xf32>
    %886 = arith.mulf %883, %881 : vector<8x32xf32>
    %887 = arith.mulf %882, %884 : vector<8x32xf32>
    %888 = arith.addf %886, %887 : vector<8x32xf32>
    %889 = math.tanh %888 : vector<8x32xf32>
    %890 = arith.mulf %885, %889 : vector<8x32xf32>
    %891 = arith.index_cast %c15_i32_200 : i32 to index
    %c0_209 = arith.constant 0 : index
    %c0_210 = arith.constant 0 : index
    %892 = vector.load %arg4[%891, %c0_209, %c0_210] : memref<16x8x32xf32, #tpu.memory_space<vmem>>, vector<1x8x32xf32>
    %893 = vector.shape_cast %892 : vector<1x8x32xf32> to vector<8x32xf32>
    %894 = vector.shape_cast %874 : vector<8x32xf32> to vector<1x8x32xf32>
    tpu.vector_store %arg4[%891, %c0_209, %c0_210], %894 {strides = array<i32>} : memref<16x8x32xf32, #tpu.memory_space<vmem>>, vector<1x8x32xf32>,
    %c15_i32_211 = arith.constant 15 : i32
    %895 = arith.subi %c15_i32_211, %c15_i32_200 : i32
    %896 = arith.index_cast %895 : i32 to index
    %c0_212 = arith.constant 0 : index
    %c0_213 = arith.constant 0 : index
    %897 = vector.load %arg5[%896, %c0_212, %c0_213] : memref<16x8x32xf32, #tpu.memory_space<vmem>>, vector<1x8x32xf32>
    %898 = vector.shape_cast %897 : vector<1x8x32xf32> to vector<8x32xf32>
    %899 = vector.shape_cast %890 : vector<8x32xf32> to vector<1x8x32xf32>
    tpu.vector_store %arg5[%896, %c0_212, %c0_213], %899 {strides = array<i32>} : memref<16x8x32xf32, #tpu.memory_space<vmem>>, vector<1x8x32xf32>,
    %900 = tpu.concatenate %874, %890 in 1 : vector<8x32xf32>, vector<8x32xf32> -> vector<8x64xf32>
    %901 = tpu.concatenate %872, %888 in 1 : vector<8x32xf32>, vector<8x32xf32> -> vector<8x64xf32>
    %c16_i32 = arith.constant 16 : i32
    %c0_214 = arith.constant 0 : index
    %c0_215 = arith.constant 0 : index
    %902 = vector.load %arg7[%c0_214, %c0_215] : memref<8x64xf32, #tpu.memory_space<vmem>>, vector<8x64xf32>
    tpu.vector_store %arg7[%c0_214, %c0_215], %900 {strides = array<i32>} : memref<8x64xf32, #tpu.memory_space<vmem>>, vector<8x64xf32>,
    %c0_216 = arith.constant 0 : index
    %c0_217 = arith.constant 0 : index
    %903 = vector.load %arg8[%c0_216, %c0_217] : memref<8x64xf32, #tpu.memory_space<vmem>>, vector<8x64xf32>
    tpu.vector_store %arg8[%c0_216, %c0_217], %901 {strides = array<i32>} : memref<8x64xf32, #tpu.memory_space<vmem>>, vector<8x64xf32>,
    %c0_i32_218 = arith.constant 0 : i32
    %904 = arith.cmpi eq, %arg0, %c0_i32_218 : i32
    %905 = arith.extui %904 : i1 to i32
    %c0_i32_219 = arith.constant 0 : i32
    %906 = arith.cmpi ne, %905, %c0_i32_219 : i32
    scf.if %906 {
      %c0_220 = arith.constant 0 : index
      %c0_221 = arith.constant 0 : index
      %907 = vector.load %arg6[%c0_220, %c0_221] : memref<8x64xf32, #tpu.memory_space<vmem>>, vector<8x64xf32>
      tpu.vector_store %arg6[%c0_220, %c0_221], %901 {strides = array<i32>} : memref<8x64xf32, #tpu.memory_space<vmem>>, vector<8x64xf32>,
    } else {
    }
    return
  }
  func.func @transform_0(%arg0: i32) -> (i32, i32, i32) {
    %c0_i32 = arith.constant 0 : i32
    %c0_i32_0 = arith.constant 0 : i32
    %c0_i32_1 = arith.constant 0 : i32
    return %arg0, %c0_i32, %c0_i32_0 : i32, i32, i32
  }
  func.func @transform_1(%arg0: i32) -> (i32, i32, i32) {
    %c0_i32 = arith.constant 0 : i32
    %0 = arith.subi %c0_i32, %arg0 : i32
    %c0_i32_0 = arith.constant 0 : i32
    %c0_i32_1 = arith.constant 0 : i32
    %c0_i32_2 = arith.constant 0 : i32
    return %0, %c0_i32_0, %c0_i32_1 : i32, i32, i32
  }
  func.func @transform_2(%arg0: i32) -> (i32, i32) {
    %c0_i32 = arith.constant 0 : i32
    %c0_i32_0 = arith.constant 0 : i32
    %c0_i32_1 = arith.constant 0 : i32
    return %c0_i32, %c0_i32_0 : i32, i32
  }
  func.func @transform_3(%arg0: i32) -> (i32, i32, i32) {
    %c0_i32 = arith.constant 0 : i32
    %c0_i32_0 = arith.constant 0 : i32
    %c0_i32_1 = arith.constant 0 : i32
    return %arg0, %c0_i32, %c0_i32_0 : i32, i32, i32
  }
  func.func @transform_4(%arg0: i32) -> (i32, i32, i32) {
    %c0_i32 = arith.constant 0 : i32
    %0 = arith.subi %c0_i32, %arg0 : i32
    %c0_i32_0 = arith.constant 0 : i32
    %c0_i32_1 = arith.constant 0 : i32
    %c0_i32_2 = arith.constant 0 : i32
    return %0, %c0_i32_0, %c0_i32_1 : i32, i32, i32
  }
  func.func @transform_5(%arg0: i32) -> (i32, i32) {
    %c0_i32 = arith.constant 0 : i32
    %c0_i32_0 = arith.constant 0 : i32
    %c0_i32_1 = arith.constant 0 : i32
    return %c0_i32, %c0_i32_0 : i32, i32
  }
}

</mosaic_0001>

<llo_original>
// kernel: encoder_forward.2
$region0: #{encoder_forward.2}
  #allocation0 [shape = 'u32[]', space=smem, size = 0x4, offset = 0x4, fixed_abs, tag = 'smem constant byte address 0x4 - core index']
  #allocation1 [shape = 'u32[144,128]{1,0:T(1,128)}', space=vmem, size = 0x12000, scoped, tag = 'internal scratch']
  #allocation2 [shape = 'f32[8,64]{1,0:T(8,128)}', space=vmem, size = 0x1000, scoped, tag = 'scratch operand']
  #allocation3 [shape = 'f32[8,64]{1,0:T(8,128)}', space=vmem, size = 0x1000, scoped, tag = 'scratch operand']
  %s0 = inlined_call_operand.vmem [shape: f32[16,8,128], index: 0, kind: input, shape index: {}]
  %s1 = inlined_call_operand.vmem [shape: f32[16,8,128], index: 1, kind: input, shape index: {}]
  %s2 = inlined_call_operand.vmem [shape: bf16[64,256], index: 2, kind: input, shape index: {}]
  %s3 = inlined_call_operand.vmem [shape: f32[16,8,32], index: 3, kind: output, shape index: {0}]
  %s4 = inlined_call_operand.vmem [shape: f32[16,8,32], index: 4, kind: output, shape index: {1}]
  %s5 = inlined_call_operand.vmem [shape: f32[8,64], index: 5, kind: output, shape index: {2}]
  %6 = xla_tuple %s3, %s4, %s5
  %s7 = sld [smem:[#allocation0]]
  $region46: #{encoder_forward.2} parent=0
    _
  %s9 = ssub.s32 1, %s7
  %s10 = scalar_select 0, %s9, %s7
  // Predicated region
  $region2: #{encoder_forward.2} parent=0 // pred_check
    _
  $region3: #{encoder_forward.2} parent=0 // pred_check_branch
    %12 = sbr.rel (0) target = $region5
  $region4: #{encoder_forward.2} parent=0 // pred_region
    _
  $region5: #{encoder_forward.2} parent=0 // pred_fallthru
    _
  // Predicated region
  $region6: #{encoder_forward.2} parent=0 // pred_check
    _
  $region7: #{encoder_forward.2} parent=0 // pred_check_branch
    %14 = sbr.rel (0) target = $region9
  $region8: #{encoder_forward.2} parent=0 // pred_region
    %s15 = ssub.s32 0, 0
    %s16 = smul.u32 16, %s15
    %p17 = scmp.lt.s32.totalorder %s16, 15
    %s18 = scalar_select %p17, %s16, 15
    %s19 = smul.addr %s18, 8
    %s20 = scalar_lea.vmem %s1, %s19
    %s21 = ssub.s32 0, 0
    %s22 = smul.u32 16, %s21
  $region9: #{encoder_forward.2} parent=0 // pred_fallthru
    _
  // Predicated region
  $region10: #{encoder_forward.2} parent=0 // pred_check
    _
  $region11: #{encoder_forward.2} parent=0 // pred_check_branch
    %24 = sbr.rel (0) target = $region13
  $region12: #{encoder_forward.2} parent=0 // pred_region
    _
  $region13: #{encoder_forward.2} parent=0 // pred_fallthru
    _
  %s25 = ssub.s32 0, 0
  %s26 = smul.u32 16, %s25
  %p27 = scmp.lt.s32.totalorder %s26, 15
  %s28 = scalar_select %p27, %s26, 15
  %s29 = smul.addr %s28, 8
  %s30 = scalar_lea.vmem %s1, %s29
  %s31 = ssub.s32 0, 0
  %s32 = smul.u32 16, %s31
  %p33 = scmp.lt.s32.totalorder %s32, 15
  %s34 = scalar_select %p33, %s32, 15
  %s35 = smul.addr %s34, 8
  %s36 = scalar_lea.vmem %s4, %s35
  %s37 = ssub.s32 0, 0
  %s38 = smul.u32 16, %s37
  %p39 = scmp.lt.s32.totalorder %s38, 15
  %s40 = scalar_select %p39, %s38, 15
  %s41 = smul.addr %s40, 8
  %s42 = scalar_lea.vmem %s1, %s41
  %s43 = ssub.s32 0, 0
  %s44 = smul.u32 16, %s43
  %s45 = ssub.s32 0, 0
  %s46 = smul.u32 16, %s45
  %p47 = scmp.lt.s32.totalorder %s46, 15
  %s48 = scalar_select %p47, %s46, 15
  %s49 = smul.addr %s48, 8
  %s50 = scalar_lea.vmem %s4, %s49
  %s51 = ssub.s32 0, 0
  %s52 = smul.u32 16, %s51
  %p54 = scmp.eq.s32.totalorder 0, 0
  // Predicated region
  $region14: #{encoder_forward.2} parent=0 // pred_check
    %p55 = pneg %p54
  $region15: #{encoder_forward.2} parent=0 // pred_check_branch
    %57 = sbr.rel (%p55) target = $region17
  $region16: #{encoder_forward.2} parent=0 // pred_region
    %vm58 = vcmask 523264
    %59 = vst.msk [vmem:[#allocation2] sm:$0xff] %vm58, 0.0
    %60 = vst.msk [vmem:[#allocation3] sm:$0xff] %vm58, 0.0
  $region17: #{encoder_forward.2} parent=0 // pred_fallthru
    _
  %v61 = vld [vmem:[%s2] sm:$0xff]
  %v62 = vld [vmem:[%s2 + $0x8] sm:$0xff]
  %v63 = vld [vmem:[%s2 + $0x10] sm:$0xff]
  %v64 = vld [vmem:[%s2 + $0x18] sm:$0xff]
  %v65 = vld [vmem:[%s2 + $0x20] sm:$0xff]
  %v66 = vld [vmem:[%s2 + $0x28] sm:$0xff]
  %v67 = vld [vmem:[%s2 + $0x30] sm:$0xff]
  %v68 = vld [vmem:[%s2 + $0x38] sm:$0xff]
  %v69 = vld [vmem:[#allocation2] sm:$0xff]
  %v70 = vld [vmem:[#allocation3] sm:$0xff]
  %v71 = vpack.c.bf16 %v69, %v69
  %v80 = vunpack.c.l.b16 %v61
  %v81 = vunpack.c.h.b16 %v61
  %v82 = vunpack.c.l.b16 %v62
  %v83 = vunpack.c.h.b16 %v62
  %v84 = vunpack.c.l.b16 %v63
  %v85 = vunpack.c.h.b16 %v63
  %v86 = vunpack.c.l.b16 %v64
  %v87 = vunpack.c.h.b16 %v64
  %v88 = vunpack.c.l.b16 %v65
  %v89 = vunpack.c.h.b16 %v65
  %v90 = vunpack.c.l.b16 %v66
  %v91 = vunpack.c.h.b16 %v66
  %v92 = vunpack.c.l.b16 %v67
  %v93 = vunpack.c.h.b16 %v67
  %v94 = vunpack.c.l.b16 %v68
  %v95 = vunpack.c.h.b16 %v68
  %v96 = vpack.c.b16 %v82, %v80
  %v97 = vpack.c.b16 %v83, %v81
  %v98 = vpack.c.b16 %v86, %v84
  %v99 = vpack.c.b16 %v87, %v85
  %v100 = vpack.c.b16 %v90, %v88
  %v101 = vpack.c.b16 %v91, %v89
  %v102 = vpack.c.b16 %v94, %v92
  %v103 = vpack.c.b16 %v95, %v93
  %vm112 = vcmask 523264
  %v114 = vsel %vm112, %v71, 0
  %116 = vmatprep.subr.bf16.mxu0 %v97
  %117 = vmatpush1.bf16.msra.mxu0 %v96
  %118 = vmatprep.subr.bf16.mxu0 %v99
  %119 = vmatpush1.bf16.msra.mxu0 %v98
  %120 = vmatprep.subr.bf16.mxu0 %v101
  %121 = vmatpush1.bf16.msra.mxu0 %v100
  %122 = vmatprep.subr.bf16.mxu0 %v103
  %123 = vmatpush1.bf16.msra.mxu0 %v102
  %124 = vmatprep.subr.bf16.mxu0 0
  %125 = vmatpush1.bf16.msra.mxu0 0
  %126 = vmatprep.subr.bf16.mxu0 0
  %127 = vmatpush1.bf16.msra.mxu0 0
  %128 = vmatprep.subr.bf16.mxu0 0
  %129 = vmatpush1.bf16.msra.mxu0 0
  %130 = vmatprep.subr.bf16.mxu0 0
  %131 = vmatpush1.bf16.msra.mxu0 0
  %132 = vmatprep.subr.bf16.mxu0 0
  %133 = vmatpush1.bf16.msra.mxu0 0
  %134 = vmatprep.subr.bf16.mxu0 0
  %135 = vmatpush1.bf16.msra.mxu0 0
  %136 = vmatprep.subr.bf16.mxu0 0
  %137 = vmatpush1.bf16.msra.mxu0 0
  %138 = vmatprep.subr.bf16.mxu0 0
  %139 = vmatpush1.bf16.msra.mxu0 0
  %140 = vmatprep.subr.bf16.mxu0 0
  %141 = vmatpush1.bf16.msra.mxu0 0
  %142 = vmatprep.subr.bf16.mxu0 0
  %143 = vmatpush1.bf16.msra.mxu0 0
  %144 = vmatprep.subr.bf16.mxu0 0
  %145 = vmatpush1.bf16.msra.mxu0 0
  %146 = vmatprep.subr.bf16.mxu0 0
  %147 = vmatpush1.bf16.msra.mxu0 0
  %148 = vmatprep.mubr.bf16.mxu0 0
  %149 = vmatmul.mubr.bf16.gmra.mrb[0].mxu0 %v114
  %v150 = vpop.f32.mrb[0].mxu0
  %v151 = vadd.f32 0.0, %v150
  %v152 = vpop.f32.mrb[0].mxu0
  %v153 = vadd.f32 0.0, %v152
  %v154 = vpop.f32.mrb[0].mxu0
  %v155 = vpop.f32.mrb[0].mxu0
  %156 = vdwg.mxu0
  %v157 = vld [vmem:[%s0] sm:$0xff]
  %v158 = vadd.f32 %v157, %v151
  %s159 = scalar_lea.vmem %s42, 120
  %v160 = vld [vmem:[%s159] sm:$0xff]
  %v161 = vadd.f32 %v160, %v153
  %v162 = vxor.u32 %v158, 2147483648
  %v163 = vmul.f32 %v162, 1.442695
  %v164 = vpow.pop %v163
  %v165 = vadd.f32 %v164, 1.0
  %v166 = vrcp.pop %v165
  %v167 = vmul.f32 1.0, %v166
  %v168 = vtanh.pop %v158
  %170 = vrot.lane.b32.xlu0 %v70, 32
  %v171 = vpop.permute.xlu0 %170
  %v173 = vmul.f32 %v167, %v171
  %175 = vrot.lane.b32.xlu0 %v168, 64
  %v176 = vpop.permute.xlu0 %175
  %v178 = vmul.f32 %v167, %v176
  %180 = vrot.lane.b32.xlu0 %v178, 32
  %v181 = vpop.permute.xlu0 %180
  %v183 = vadd.f32 %v173, %v181
  %v184 = vtanh.pop %v183
  %186 = vrot.lane.b32.xlu0 %v184, 64
  %v187 = vpop.permute.xlu0 %186
  %v189 = vmul.f32 %v167, %v187
  %v190 = vxor.u32 %v161, 2147483648
  %v191 = vmul.f32 %v190, 1.442695
  %v192 = vpow.pop %v191
  %v193 = vadd.f32 %v192, 1.0
  %v194 = vrcp.pop %v193
  %v195 = vmul.f32 1.0, %v194
  %v196 = vtanh.pop %v161
  %v197 = vmul.f32 %v195, %v70
  %199 = vrot.lane.b32.xlu0 %v196, 64
  %v200 = vpop.permute.xlu0 %199
  %v202 = vmul.f32 %v195, %v200
  %204 = vrot.lane.b32.xlu0 %v202, 32
  %v205 = vpop.permute.xlu0 %204
  %v207 = vadd.f32 %v197, %v205
  %v208 = vtanh.pop %v207
  %210 = vrot.lane.b32.xlu0 %v208, 64
  %v211 = vpop.permute.xlu0 %210
  %v213 = vmul.f32 %v195, %v211
  %215 = vrot.lane.b32.xlu0 %v189, 32
  %v216 = vpop.permute.xlu0 %215
  %vm218 = vcmask 261120
  %219 = vst.msk [vmem:[%s3] sm:$0xff] %vm218, %v216
  %221 = vrot.lane.b32.xlu0 %v213, 32
  %v222 = vpop.permute.xlu0 %221
  %s224 = scalar_lea.vmem %s50, 120
  %225 = vst.msk [vmem:[%s224] sm:$0xff] %vm218, %v222
  %226 = vrot.lane.b32.xlu0 %v213, 64
  %v227 = vpop.permute.xlu0 %226
  %v229 = vsel %vm218, %v216, %v227
  %231 = vrot.lane.b32.xlu0 %v183, 96
  %v232 = vpop.permute.xlu0 %231
  %v234 = vsel %vm218, %v232, %v207
  %v235 = vpack.c.bf16 %v229, %v229
  %v237 = vsel %vm112, %v235, 0
  %239 = vmatprep.subr.bf16.mxu0 %v97
  %240 = vmatpush1.bf16.msra.mxu0 %v96
  %241 = vmatprep.subr.bf16.mxu0 %v99
  %242 = vmatpush1.bf16.msra.mxu0 %v98
  %243 = vmatprep.subr.bf16.mxu0 %v101
  %244 = vmatpush1.bf16.msra.mxu0 %v100
  %245 = vmatprep.subr.bf16.mxu0 %v103
  %246 = vmatpush1.bf16.msra.mxu0 %v102
  %247 = vmatprep.subr.bf16.mxu0 0
  %248 = vmatpush1.bf16.msra.mxu0 0
  %249 = vmatprep.subr.bf16.mxu0 0
  %250 = vmatpush1.bf16.msra.mxu0 0
  %251 = vmatprep.subr.bf16.mxu0 0
  %252 = vmatpush1.bf16.msra.mxu0 0
  %253 = vmatprep.subr.bf16.mxu0 0
  %254 = vmatpush1.bf16.msra.mxu0 0
  %255 = vmatprep.subr.bf16.mxu0 0
  %256 = vmatpush1.bf16.msra.mxu0 0
  %257 = vmatprep.subr.bf16.mxu0 0
  %258 = vmatpush1.bf16.msra.mxu0 0
  %259 = vmatprep.subr.bf16.mxu0 0
  %260 = vmatpush1.bf16.msra.mxu0 0
  %261 = vmatprep.subr.bf16.mxu0 0
  %262 = vmatpush1.bf16.msra.mxu0 0
  %263 = vmatprep.subr.bf16.mxu0 0
  %264 = vmatpush1.bf16.msra.mxu0 0
  %265 = vmatprep.subr.bf16.mxu0 0
  %266 = vmatpush1.bf16.msra.mxu0 0
  %267 = vmatprep.subr.bf16.mxu0 0
  %268 = vmatpush1.bf16.msra.mxu0 0
  %269 = vmatprep.subr.bf16.mxu0 0
  %270 = vmatpush1.bf16.msra.mxu0 0
  %271 = vmatprep.mubr.bf16.mxu0 0
  %272 = vmatmul.mubr.bf16.gmra.mrb[0].mxu0 %v237
  %v273 = vpop.f32.mrb[0].mxu0
  %v274 = vadd.f32 0.0, %v273
  %v275 = vpop.f32.mrb[0].mxu0
  %v276 = vadd.f32 0.0, %v275
  %v277 = vpop.f32.mrb[0].mxu0
  %v278 = vpop.f32.mrb[0].mxu0
  %279 = vdwg.mxu0
  %s280 = scalar_lea.vmem %s0, 8
  %v281 = vld [vmem:[%s280] sm:$0xff]
  %v282 = vadd.f32 %v281, %v274
  %s283 = scalar_lea.vmem %s42, 112
  %v284 = vld [vmem:[%s283] sm:$0xff]
  %v285 = vadd.f32 %v284, %v276
  %v286 = vxor.u32 %v282, 2147483648
  %v287 = vmul.f32 %v286, 1.442695
  %v288 = vpow.pop %v287
  %v289 = vadd.f32 %v288, 1.0
  %v290 = vrcp.pop %v289
  %v291 = vmul.f32 1.0, %v290
  %v292 = vtanh.pop %v282
  %294 = vrot.lane.b32.xlu0 %v234, 32
  %v295 = vpop.permute.xlu0 %294
  %v297 = vmul.f32 %v291, %v295
  %299 = vrot.lane.b32.xlu0 %v292, 64
  %v300 = vpop.permute.xlu0 %299
  %v302 = vmul.f32 %v291, %v300
  %304 = vrot.lane.b32.xlu0 %v302, 32
  %v305 = vpop.permute.xlu0 %304
  %v307 = vadd.f32 %v297, %v305
  %v308 = vtanh.pop %v307
  %310 = vrot.lane.b32.xlu0 %v308, 64
  %v311 = vpop.permute.xlu0 %310
  %v313 = vmul.f32 %v291, %v311
  %v314 = vxor.u32 %v285, 2147483648
  %v315 = vmul.f32 %v314, 1.442695
  %v316 = vpow.pop %v315
  %v317 = vadd.f32 %v316, 1.0
  %v318 = vrcp.pop %v317
  %v319 = vmul.f32 1.0, %v318
  %v320 = vtanh.pop %v285
  %v321 = vmul.f32 %v319, %v234
  %323 = vrot.lane.b32.xlu0 %v320, 64
  %v324 = vpop.permute.xlu0 %323
  %v326 = vmul.f32 %v319, %v324
  %328 = vrot.lane.b32.xlu0 %v326, 32
  %v329 = vpop.permute.xlu0 %328
  %v331 = vadd.f32 %v321, %v329
  %v332 = vtanh.pop %v331
  %334 = vrot.lane.b32.xlu0 %v332, 64
  %v335 = vpop.permute.xlu0 %334
  %v337 = vmul.f32 %v319, %v335
  %339 = vrot.lane.b32.xlu0 %v313, 32
  %v340 = vpop.permute.xlu0 %339
  %s342 = scalar_lea.vmem %s3, 8
  %343 = vst.msk [vmem:[%s342] sm:$0xff] %vm218, %v340
  %345 = vrot.lane.b32.xlu0 %v337, 32
  %v346 = vpop.permute.xlu0 %345
  %s348 = scalar_lea.vmem %s50, 112
  %349 = vst.msk [vmem:[%s348] sm:$0xff] %vm218, %v346
  %350 = vrot.lane.b32.xlu0 %v337, 64
  %v351 = vpop.permute.xlu0 %350
  %v353 = vsel %vm218, %v340, %v351
  %355 = vrot.lane.b32.xlu0 %v307, 96
  %v356 = vpop.permute.xlu0 %355
  %v358 = vsel %vm218, %v356, %v331
  %v359 = vpack.c.bf16 %v353, %v353
  %v361 = vsel %vm112, %v359, 0
  %363 = vmatprep.subr.bf16.mxu0 %v97
  %364 = vmatpush1.bf16.msra.mxu0 %v96
  %365 = vmatprep.subr.bf16.mxu0 %v99
  %366 = vmatpush1.bf16.msra.mxu0 %v98
  %367 = vmatprep.subr.bf16.mxu0 %v101
  %368 = vmatpush1.bf16.msra.mxu0 %v100
  %369 = vmatprep.subr.bf16.mxu0 %v103
  %370 = vmatpush1.bf16.msra.mxu0 %v102
  %371 = vmatprep.subr.bf16.mxu0 0
  %372 = vmatpush1.bf16.msra.mxu0 0
  %373 = vmatprep.subr.bf16.mxu0 0
  %374 = vmatpush1.bf16.msra.mxu0 0
  %375 = vmatprep.subr.bf16.mxu0 0
  %376 = vmatpush1.bf16.msra.mxu0 0
  %377 = vmatprep.subr.bf16.mxu0 0
  %378 = vmatpush1.bf16.msra.mxu0 0
  %379 = vmatprep.subr.bf16.mxu0 0
  %380 = vmatpush1.bf16.msra.mxu0 0
  %381 = vmatprep.subr.bf16.mxu0 0
  %382 = vmatpush1.bf16.msra.mxu0 0
  %383 = vmatprep.subr.bf16.mxu0 0
  %384 = vmatpush1.bf16.msra.mxu0 0
  %385 = vmatprep.subr.bf16.mxu0 0
  %386 = vmatpush1.bf16.msra.mxu0 0
  %387 = vmatprep.subr.bf16.mxu0 0
  %388 = vmatpush1.bf16.msra.mxu0 0
  %389 = vmatprep.subr.bf16.mxu0 0
  %390 = vmatpush1.bf16.msra.mxu0 0
  %391 = vmatprep.subr.bf16.mxu0 0
  %392 = vmatpush1.bf16.msra.mxu0 0
  %393 = vmatprep.subr.bf16.mxu0 0
  %394 = vmatpush1.bf16.msra.mxu0 0
  %395 = vmatprep.mubr.bf16.mxu0 0
  %396 = vmatmul.mubr.bf16.gmra.mrb[0].mxu0 %v361
  %v397 = vpop.f32.mrb[0].mxu0
  %v398 = vadd.f32 0.0, %v397
  %v399 = vpop.f32.mrb[0].mxu0
  %v400 = vadd.f32 0.0, %v399
  %v401 = vpop.f32.mrb[0].mxu0
  %v402 = vpop.f32.mrb[0].mxu0
  %403 = vdwg.mxu0
  %s404 = scalar_lea.vmem %s0, 16
  %v405 = vld [vmem:[%s404] sm:$0xff]
  %v406 = vadd.f32 %v405, %v398
  %s407 = scalar_lea.vmem %s42, 104
  %v408 = vld [vmem:[%s407] sm:$0xff]
  %v409 = vadd.f32 %v408, %v400
  %v410 = vxor.u32 %v406, 2147483648
  %v411 = vmul.f32 %v410, 1.442695
  %v412 = vpow.pop %v411
  %v413 = vadd.f32 %v412, 1.0
  %v414 = vrcp.pop %v413
  %v415 = vmul.f32 1.0, %v414
  %v416 = vtanh.pop %v406
  %418 = vrot.lane.b32.xlu0 %v358, 32
  %v419 = vpop.permute.xlu0 %418
  %v421 = vmul.f32 %v415, %v419
  %423 = vrot.lane.b32.xlu0 %v416, 64
  %v424 = vpop.permute.xlu0 %423
  %v426 = vmul.f32 %v415, %v424
  %428 = vrot.lane.b32.xlu0 %v426, 32
  %v429 = vpop.permute.xlu0 %428
  %v431 = vadd.f32 %v421, %v429
  %v432 = vtanh.pop %v431
  %434 = vrot.lane.b32.xlu0 %v432, 64
  %v435 = vpop.permute.xlu0 %434
  %v437 = vmul.f32 %v415, %v435
  %v438 = vxor.u32 %v409, 2147483648
  %v439 = vmul.f32 %v438, 1.442695
  %v440 = vpow.pop %v439
  %v441 = vadd.f32 %v440, 1.0
  %v442 = vrcp.pop %v441
  %v443 = vmul.f32 1.0, %v442
  %v444 = vtanh.pop %v409
  %v445 = vmul.f32 %v443, %v358
  %447 = vrot.lane.b32.xlu0 %v444, 64
  %v448 = vpop.permute.xlu0 %447
  %v450 = vmul.f32 %v443, %v448
  %452 = vrot.lane.b32.xlu0 %v450, 32
  %v453 = vpop.permute.xlu0 %452
  %v455 = vadd.f32 %v445, %v453
  %v456 = vtanh.pop %v455
  %458 = vrot.lane.b32.xlu0 %v456, 64
  %v459 = vpop.permute.xlu0 %458
  %v461 = vmul.f32 %v443, %v459
  %463 = vrot.lane.b32.xlu0 %v437, 32
  %v464 = vpop.permute.xlu0 %463
  %s466 = scalar_lea.vmem %s3, 16
  %467 = vst.msk [vmem:[%s466] sm:$0xff] %vm218, %v464
  %469 = vrot.lane.b32.xlu0 %v461, 32
  %v470 = vpop.permute.xlu0 %469
  %s472 = scalar_lea.vmem %s50, 104
  %473 = vst.msk [vmem:[%s472] sm:$0xff] %vm218, %v470
  %474 = vrot.lane.b32.xlu0 %v461, 64
  %v475 = vpop.permute.xlu0 %474
  %v477 = vsel %vm218, %v464, %v475
  %479 = vrot.lane.b32.xlu0 %v431, 96
  %v480 = vpop.permute.xlu0 %479
  %v482 = vsel %vm218, %v480, %v455
  %v483 = vpack.c.bf16 %v477, %v477
  %v485 = vsel %vm112, %v483, 0
  %487 = vmatprep.subr.bf16.mxu0 %v97
  %488 = vmatpush1.bf16.msra.mxu0 %v96
  %489 = vmatprep.subr.bf16.mxu0 %v99
  %490 = vmatpush1.bf16.msra.mxu0 %v98
  %491 = vmatprep.subr.bf16.mxu0 %v101
  %492 = vmatpush1.bf16.msra.mxu0 %v100
  %493 = vmatprep.subr.bf16.mxu0 %v103
  %494 = vmatpush1.bf16.msra.mxu0 %v102
  %495 = vmatprep.subr.bf16.mxu0 0
  %496 = vmatpush1.bf16.msra.mxu0 0
  %497 = vmatprep.subr.bf16.mxu0 0
  %498 = vmatpush1.bf16.msra.mxu0 0
  %499 = vmatprep.subr.bf16.mxu0 0
  %500 = vmatpush1.bf16.msra.mxu0 0
  %501 = vmatprep.subr.bf16.mxu0 0
  %502 = vmatpush1.bf16.msra.mxu0 0
  %503 = vmatprep.subr.bf16.mxu0 0
  %504 = vmatpush1.bf16.msra.mxu0 0
  %505 = vmatprep.subr.bf16.mxu0 0
  %506 = vmatpush1.bf16.msra.mxu0 0
  %507 = vmatprep.subr.bf16.mxu0 0
  %508 = vmatpush1.bf16.msra.mxu0 0
  %509 = vmatprep.subr.bf16.mxu0 0
  %510 = vmatpush1.bf16.msra.mxu0 0
  %511 = vmatprep.subr.bf16.mxu0 0
  %512 = vmatpush1.bf16.msra.mxu0 0
  %513 = vmatprep.subr.bf16.mxu0 0
  %514 = vmatpush1.bf16.msra.mxu0 0
  %515 = vmatprep.subr.bf16.mxu0 0
  %516 = vmatpush1.bf16.msra.mxu0 0
  %517 = vmatprep.subr.bf16.mxu0 0
  %518 = vmatpush1.bf16.msra.mxu0 0
  %519 = vmatprep.mubr.bf16.mxu0 0
  %520 = vmatmul.mubr.bf16.gmra.mrb[0].mxu0 %v485
  %v521 = vpop.f32.mrb[0].mxu0
  %v522 = vadd.f32 0.0, %v521
  %v523 = vpop.f32.mrb[0].mxu0
  %v524 = vadd.f32 0.0, %v523
  %v525 = vpop.f32.mrb[0].mxu0
  %v526 = vpop.f32.mrb[0].mxu0
  %527 = vdwg.mxu0
  %s528 = scalar_lea.vmem %s0, 24
  %v529 = vld [vmem:[%s528] sm:$0xff]
  %v530 = vadd.f32 %v529, %v522
  %s531 = scalar_lea.vmem %s42, 96
  %v532 = vld [vmem:[%s531] sm:$0xff]
  %v533 = vadd.f32 %v532, %v524
  %v534 = vxor.u32 %v530, 2147483648
  %v535 = vmul.f32 %v534, 1.442695
  %v536 = vpow.pop %v535
  %v537 = vadd.f32 %v536, 1.0
  %v538 = vrcp.pop %v537
  %v539 = vmul.f32 1.0, %v538
  %v540 = vtanh.pop %v530
  %542 = vrot.lane.b32.xlu0 %v482, 32
  %v543 = vpop.permute.xlu0 %542
  %v545 = vmul.f32 %v539, %v543
  %547 = vrot.lane.b32.xlu0 %v540, 64
  %v548 = vpop.permute.xlu0 %547
  %v550 = vmul.f32 %v539, %v548
  %552 = vrot.lane.b32.xlu0 %v550, 32
  %v553 = vpop.permute.xlu0 %552
  %v555 = vadd.f32 %v545, %v553
  %v556 = vtanh.pop %v555
  %558 = vrot.lane.b32.xlu0 %v556, 64
  %v559 = vpop.permute.xlu0 %558
  %v561 = vmul.f32 %v539, %v559
  %v562 = vxor.u32 %v533, 2147483648
  %v563 = vmul.f32 %v562, 1.442695
  %v564 = vpow.pop %v563
  %v565 = vadd.f32 %v564, 1.0
  %v566 = vrcp.pop %v565
  %v567 = vmul.f32 1.0, %v566
  %v568 = vtanh.pop %v533
  %v569 = vmul.f32 %v567, %v482
  %571 = vrot.lane.b32.xlu0 %v568, 64
  %v572 = vpop.permute.xlu0 %571
  %v574 = vmul.f32 %v567, %v572
  %576 = vrot.lane.b32.xlu0 %v574, 32
  %v577 = vpop.permute.xlu0 %576
  %v579 = vadd.f32 %v569, %v577
  %v580 = vtanh.pop %v579
  %582 = vrot.lane.b32.xlu0 %v580, 64
  %v583 = vpop.permute.xlu0 %582
  %v585 = vmul.f32 %v567, %v583
  %587 = vrot.lane.b32.xlu0 %v561, 32
  %v588 = vpop.permute.xlu0 %587
  %s590 = scalar_lea.vmem %s3, 24
  %591 = vst.msk [vmem:[%s590] sm:$0xff] %vm218, %v588
  %593 = vrot.lane.b32.xlu0 %v585, 32
  %v594 = vpop.permute.xlu0 %593
  %s596 = scalar_lea.vmem %s50, 96
  %597 = vst.msk [vmem:[%s596] sm:$0xff] %vm218, %v594
  %598 = vrot.lane.b32.xlu0 %v585, 64
  %v599 = vpop.permute.xlu0 %598
  %v601 = vsel %vm218, %v588, %v599
  %603 = vrot.lane.b32.xlu0 %v555, 96
  %v604 = vpop.permute.xlu0 %603
  %v606 = vsel %vm218, %v604, %v579
  %v607 = vpack.c.bf16 %v601, %v601
  %v609 = vsel %vm112, %v607, 0
  %611 = vmatprep.subr.bf16.mxu0 %v97
  %612 = vmatpush1.bf16.msra.mxu0 %v96
  %613 = vmatprep.subr.bf16.mxu0 %v99
  %614 = vmatpush1.bf16.msra.mxu0 %v98
  %615 = vmatprep.subr.bf16.mxu0 %v101
  %616 = vmatpush1.bf16.msra.mxu0 %v100
  %617 = vmatprep.subr.bf16.mxu0 %v103
  %618 = vmatpush1.bf16.msra.mxu0 %v102
  %619 = vmatprep.subr.bf16.mxu0 0
  %620 = vmatpush1.bf16.msra.mxu0 0
  %621 = vmatprep.subr.bf16.mxu0 0
  %622 = vmatpush1.bf16.msra.mxu0 0
  %623 = vmatprep.subr.bf16.mxu0 0
  %624 = vmatpush1.bf16.msra.mxu0 0
  %625 = vmatprep.subr.bf16.mxu0 0
  %626 = vmatpush1.bf16.msra.mxu0 0
  %627 = vmatprep.subr.bf16.mxu0 0
  %628 = vmatpush1.bf16.msra.mxu0 0
  %629 = vmatprep.subr.bf16.mxu0 0
  %630 = vmatpush1.bf16.msra.mxu0 0
  %631 = vmatprep.subr.bf16.mxu0 0
  %632 = vmatpush1.bf16.msra.mxu0 0
  %633 = vmatprep.subr.bf16.mxu0 0
  %634 = vmatpush1.bf16.msra.mxu0 0
  %635 = vmatprep.subr.bf16.mxu0 0
  %636 = vmatpush1.bf16.msra.mxu0 0
  %637 = vmatprep.subr.bf16.mxu0 0
  %638 = vmatpush1.bf16.msra.mxu0 0
  %639 = vmatprep.subr.bf16.mxu0 0
  %640 = vmatpush1.bf16.msra.mxu0 0
  %641 = vmatprep.subr.bf16.mxu0 0
  %642 = vmatpush1.bf16.msra.mxu0 0
  %643 = vmatprep.mubr.bf16.mxu0 0
  %644 = vmatmul.mubr.bf16.gmra.mrb[0].mxu0 %v609
  %v645 = vpop.f32.mrb[0].mxu0
  %v646 = vadd.f32 0.0, %v645
  %v647 = vpop.f32.mrb[0].mxu0
  %v648 = vadd.f32 0.0, %v647
  %v649 = vpop.f32.mrb[0].mxu0
  %v650 = vpop.f32.mrb[0].mxu0
  %651 = vdwg.mxu0
  %s652 = scalar_lea.vmem %s0, 32
  %v653 = vld [vmem:[%s652] sm:$0xff]
  %v654 = vadd.f32 %v653, %v646
  %s655 = scalar_lea.vmem %s42, 88
  %v656 = vld [vmem:[%s655] sm:$0xff]
  %v657 = vadd.f32 %v656, %v648
  %v658 = vxor.u32 %v654, 2147483648
  %v659 = vmul.f32 %v658, 1.442695
  %v660 = vpow.pop %v659
  %v661 = vadd.f32 %v660, 1.0
  %v662 = vrcp.pop %v661
  %v663 = vmul.f32 1.0, %v662
  %v664 = vtanh.pop %v654
  %666 = vrot.lane.b32.xlu0 %v606, 32
  %v667 = vpop.permute.xlu0 %666
  %v669 = vmul.f32 %v663, %v667
  %671 = vrot.lane.b32.xlu0 %v664, 64
  %v672 = vpop.permute.xlu0 %671
  %v674 = vmul.f32 %v663, %v672
  %676 = vrot.lane.b32.xlu0 %v674, 32
  %v677 = vpop.permute.xlu0 %676
  %v679 = vadd.f32 %v669, %v677
  %v680 = vtanh.pop %v679
  %682 = vrot.lane.b32.xlu0 %v680, 64
  %v683 = vpop.permute.xlu0 %682
  %v685 = vmul.f32 %v663, %v683
  %v686 = vxor.u32 %v657, 2147483648
  %v687 = vmul.f32 %v686, 1.442695
  %v688 = vpow.pop %v687
  %v689 = vadd.f32 %v688, 1.0
  %v690 = vrcp.pop %v689
  %v691 = vmul.f32 1.0, %v690
  %v692 = vtanh.pop %v657
  %v693 = vmul.f32 %v691, %v606
  %695 = vrot.lane.b32.xlu0 %v692, 64
  %v696 = vpop.permute.xlu0 %695
  %v698 = vmul.f32 %v691, %v696
  %700 = vrot.lane.b32.xlu0 %v698, 32
  %v701 = vpop.permute.xlu0 %700
  %v703 = vadd.f32 %v693, %v701
  %v704 = vtanh.pop %v703
  %706 = vrot.lane.b32.xlu0 %v704, 64
  %v707 = vpop.permute.xlu0 %706
  %v709 = vmul.f32 %v691, %v707
  %711 = vrot.lane.b32.xlu0 %v685, 32
  %v712 = vpop.permute.xlu0 %711
  %s714 = scalar_lea.vmem %s3, 32
  %715 = vst.msk [vmem:[%s714] sm:$0xff] %vm218, %v712
  %717 = vrot.lane.b32.xlu0 %v709, 32
  %v718 = vpop.permute.xlu0 %717
  %s720 = scalar_lea.vmem %s50, 88
  %721 = vst.msk [vmem:[%s720] sm:$0xff] %vm218, %v718
  %722 = vrot.lane.b32.xlu0 %v709, 64
  %v723 = vpop.permute.xlu0 %722
  %v725 = vsel %vm218, %v712, %v723
  %727 = vrot.lane.b32.xlu0 %v679, 96
  %v728 = vpop.permute.xlu0 %727
  %v730 = vsel %vm218, %v728, %v703
  %v731 = vpack.c.bf16 %v725, %v725
  %v733 = vsel %vm112, %v731, 0
  %735 = vmatprep.subr.bf16.mxu0 %v97
  %736 = vmatpush1.bf16.msra.mxu0 %v96
  %737 = vmatprep.subr.bf16.mxu0 %v99
  %738 = vmatpush1.bf16.msra.mxu0 %v98
  %739 = vmatprep.subr.bf16.mxu0 %v101
  %740 = vmatpush1.bf16.msra.mxu0 %v100
  %741 = vmatprep.subr.bf16.mxu0 %v103
  %742 = vmatpush1.bf16.msra.mxu0 %v102
  %743 = vmatprep.subr.bf16.mxu0 0
  %744 = vmatpush1.bf16.msra.mxu0 0
  %745 = vmatprep.subr.bf16.mxu0 0
  %746 = vmatpush1.bf16.msra.mxu0 0
  %747 = vmatprep.subr.bf16.mxu0 0
  %748 = vmatpush1.bf16.msra.mxu0 0
  %749 = vmatprep.subr.bf16.mxu0 0
  %750 = vmatpush1.bf16.msra.mxu0 0
  %751 = vmatprep.subr.bf16.mxu0 0
  %752 = vmatpush1.bf16.msra.mxu0 0
  %753 = vmatprep.subr.bf16.mxu0 0
  %754 = vmatpush1.bf16.msra.mxu0 0
  %755 = vmatprep.subr.bf16.mxu0 0
  %756 = vmatpush1.bf16.msra.mxu0 0
  %757 = vmatprep.subr.bf16.mxu0 0
  %758 = vmatpush1.bf16.msra.mxu0 0
  %759 = vmatprep.subr.bf16.mxu0 0
  %760 = vmatpush1.bf16.msra.mxu0 0
  %761 = vmatprep.subr.bf16.mxu0 0
  %762 = vmatpush1.bf16.msra.mxu0 0
  %763 = vmatprep.subr.bf16.mxu0 0
  %764 = vmatpush1.bf16.msra.mxu0 0
  %765 = vmatprep.subr.bf16.mxu0 0
  %766 = vmatpush1.bf16.msra.mxu0 0
  %767 = vmatprep.mubr.bf16.mxu0 0
  %768 = vmatmul.mubr.bf16.gmra.mrb[0].mxu0 %v733
  %v769 = vpop.f32.mrb[0].mxu0
  %v770 = vadd.f32 0.0, %v769
  %v771 = vpop.f32.mrb[0].mxu0
  %v772 = vadd.f32 0.0, %v771
  %v773 = vpop.f32.mrb[0].mxu0
  %v774 = vpop.f32.mrb[0].mxu0
  %775 = vdwg.mxu0
  %s776 = scalar_lea.vmem %s0, 40
  %v777 = vld [vmem:[%s776] sm:$0xff]
  %v778 = vadd.f32 %v777, %v770
  %s779 = scalar_lea.vmem %s42, 80
  %v780 = vld [vmem:[%s779] sm:$0xff]
  %v781 = vadd.f32 %v780, %v772
  %v782 = vxor.u32 %v778, 2147483648
  %v783 = vmul.f32 %v782, 1.442695
  %v784 = vpow.pop %v783
  %v785 = vadd.f32 %v784, 1.0
  %v786 = vrcp.pop %v785
  %v787 = vmul.f32 1.0, %v786
  %v788 = vtanh.pop %v778
  %790 = vrot.lane.b32.xlu0 %v730, 32
  %v791 = vpop.permute.xlu0 %790
  %v793 = vmul.f32 %v787, %v791
  %795 = vrot.lane.b32.xlu0 %v788, 64
  %v796 = vpop.permute.xlu0 %795
  %v798 = vmul.f32 %v787, %v796
  %800 = vrot.lane.b32.xlu0 %v798, 32
  %v801 = vpop.permute.xlu0 %800
  %v803 = vadd.f32 %v793, %v801
  %v804 = vtanh.pop %v803
  %806 = vrot.lane.b32.xlu0 %v804, 64
  %v807 = vpop.permute.xlu0 %806
  %v809 = vmul.f32 %v787, %v807
  %v810 = vxor.u32 %v781, 2147483648
  %v811 = vmul.f32 %v810, 1.442695
  %v812 = vpow.pop %v811
  %v813 = vadd.f32 %v812, 1.0
  %v814 = vrcp.pop %v813
  %v815 = vmul.f32 1.0, %v814
  %v816 = vtanh.pop %v781
  %v817 = vmul.f32 %v815, %v730
  %819 = vrot.lane.b32.xlu0 %v816, 64
  %v820 = vpop.permute.xlu0 %819
  %v822 = vmul.f32 %v815, %v820
  %824 = vrot.lane.b32.xlu0 %v822, 32
  %v825 = vpop.permute.xlu0 %824
  %v827 = vadd.f32 %v817, %v825
  %v828 = vtanh.pop %v827
  %830 = vrot.lane.b32.xlu0 %v828, 64
  %v831 = vpop.permute.xlu0 %830
  %v833 = vmul.f32 %v815, %v831
  %835 = vrot.lane.b32.xlu0 %v809, 32
  %v836 = vpop.permute.xlu0 %835
  %s838 = scalar_lea.vmem %s3, 40
  %839 = vst.msk [vmem:[%s838] sm:$0xff] %vm218, %v836
  %841 = vrot.lane.b32.xlu0 %v833, 32
  %v842 = vpop.permute.xlu0 %841
  %s844 = scalar_lea.vmem %s50, 80
  %845 = vst.msk [vmem:[%s844] sm:$0xff] %vm218, %v842
  %846 = vrot.lane.b32.xlu0 %v833, 64
  %v847 = vpop.permute.xlu0 %846
  %v849 = vsel %vm218, %v836, %v847
  %851 = vrot.lane.b32.xlu0 %v803, 96
  %v852 = vpop.permute.xlu0 %851
  %v854 = vsel %vm218, %v852, %v827
  %v855 = vpack.c.bf16 %v849, %v849
  %v857 = vsel %vm112, %v855, 0
  %859 = vmatprep.subr.bf16.mxu0 %v97
  %860 = vmatpush1.bf16.msra.mxu0 %v96
  %861 = vmatprep.subr.bf16.mxu0 %v99
  %862 = vmatpush1.bf16.msra.mxu0 %v98
  %863 = vmatprep.subr.bf16.mxu0 %v101
  %864 = vmatpush1.bf16.msra.mxu0 %v100
  %865 = vmatprep.subr.bf16.mxu0 %v103
  %866 = vmatpush1.bf16.msra.mxu0 %v102
  %867 = vmatprep.subr.bf16.mxu0 0
  %868 = vmatpush1.bf16.msra.mxu0 0
  %869 = vmatprep.subr.bf16.mxu0 0
  %870 = vmatpush1.bf16.msra.mxu0 0
  %871 = vmatprep.subr.bf16.mxu0 0
  %872 = vmatpush1.bf16.msra.mxu0 0
  %873 = vmatprep.subr.bf16.mxu0 0
  %874 = vmatpush1.bf16.msra.mxu0 0
  %875 = vmatprep.subr.bf16.mxu0 0
  %876 = vmatpush1.bf16.msra.mxu0 0
  %877 = vmatprep.subr.bf16.mxu0 0
  %878 = vmatpush1.bf16.msra.mxu0 0
  %879 = vmatprep.subr.bf16.mxu0 0
  %880 = vmatpush1.bf16.msra.mxu0 0
  %881 = vmatprep.subr.bf16.mxu0 0
  %882 = vmatpush1.bf16.msra.mxu0 0
  %883 = vmatprep.subr.bf16.mxu0 0
  %884 = vmatpush1.bf16.msra.mxu0 0
  %885 = vmatprep.subr.bf16.mxu0 0
  %886 = vmatpush1.bf16.msra.mxu0 0
  %887 = vmatprep.subr.bf16.mxu0 0
  %888 = vmatpush1.bf16.msra.mxu0 0
  %889 = vmatprep.subr.bf16.mxu0 0
  %890 = vmatpush1.bf16.msra.mxu0 0
  %891 = vmatprep.mubr.bf16.mxu0 0
  %892 = vmatmul.mubr.bf16.gmra.mrb[0].mxu0 %v857
  %v893 = vpop.f32.mrb[0].mxu0
  %v894 = vadd.f32 0.0, %v893
  %v895 = vpop.f32.mrb[0].mxu0
  %v896 = vadd.f32 0.0, %v895
  %v897 = vpop.f32.mrb[0].mxu0
  %v898 = vpop.f32.mrb[0].mxu0
  %899 = vdwg.mxu0
  %s900 = scalar_lea.vmem %s0, 48
  %v901 = vld [vmem:[%s900] sm:$0xff]
  %v902 = vadd.f32 %v901, %v894
  %s903 = scalar_lea.vmem %s42, 72
  %v904 = vld [vmem:[%s903] sm:$0xff]
  %v905 = vadd.f32 %v904, %v896
  %v906 = vxor.u32 %v902, 2147483648
  %v907 = vmul.f32 %v906, 1.442695
  %v908 = vpow.pop %v907
  %v909 = vadd.f32 %v908, 1.0
  %v910 = vrcp.pop %v909
  %v911 = vmul.f32 1.0, %v910
  %v912 = vtanh.pop %v902
  %914 = vrot.lane.b32.xlu0 %v854, 32
  %v915 = vpop.permute.xlu0 %914
  %v917 = vmul.f32 %v911, %v915
  %919 = vrot.lane.b32.xlu0 %v912, 64
  %v920 = vpop.permute.xlu0 %919
  %v922 = vmul.f32 %v911, %v920
  %924 = vrot.lane.b32.xlu0 %v922, 32
  %v925 = vpop.permute.xlu0 %924
  %v927 = vadd.f32 %v917, %v925
  %v928 = vtanh.pop %v927
  %930 = vrot.lane.b32.xlu0 %v928, 64
  %v931 = vpop.permute.xlu0 %930
  %v933 = vmul.f32 %v911, %v931
  %v934 = vxor.u32 %v905, 2147483648
  %v935 = vmul.f32 %v934, 1.442695
  %v936 = vpow.pop %v935
  %v937 = vadd.f32 %v936, 1.0
  %v938 = vrcp.pop %v937
  %v939 = vmul.f32 1.0, %v938
  %v940 = vtanh.pop %v905
  %v941 = vmul.f32 %v939, %v854
  %943 = vrot.lane.b32.xlu0 %v940, 64
  %v944 = vpop.permute.xlu0 %943
  %v946 = vmul.f32 %v939, %v944
  %948 = vrot.lane.b32.xlu0 %v946, 32
  %v949 = vpop.permute.xlu0 %948
  %v951 = vadd.f32 %v941, %v949
  %v952 = vtanh.pop %v951
  %954 = vrot.lane.b32.xlu0 %v952, 64
  %v955 = vpop.permute.xlu0 %954
  %v957 = vmul.f32 %v939, %v955
  %959 = vrot.lane.b32.xlu0 %v933, 32
  %v960 = vpop.permute.xlu0 %959
  %s962 = scalar_lea.vmem %s3, 48
  %963 = vst.msk [vmem:[%s962] sm:$0xff] %vm218, %v960
  %965 = vrot.lane.b32.xlu0 %v957, 32
  %v966 = vpop.permute.xlu0 %965
  %s968 = scalar_lea.vmem %s50, 72
  %969 = vst.msk [vmem:[%s968] sm:$0xff] %vm218, %v966
  %970 = vrot.lane.b32.xlu0 %v957, 64
  %v971 = vpop.permute.xlu0 %970
  %v973 = vsel %vm218, %v960, %v971
  %975 = vrot.lane.b32.xlu0 %v927, 96
  %v976 = vpop.permute.xlu0 %975
  %v978 = vsel %vm218, %v976, %v951
  %v979 = vpack.c.bf16 %v973, %v973
  %v981 = vsel %vm112, %v979, 0
  %983 = vmatprep.subr.bf16.mxu0 %v97
  %984 = vmatpush1.bf16.msra.mxu0 %v96
  %985 = vmatprep.subr.bf16.mxu0 %v99
  %986 = vmatpush1.bf16.msra.mxu0 %v98
  %987 = vmatprep.subr.bf16.mxu0 %v101
  %988 = vmatpush1.bf16.msra.mxu0 %v100
  %989 = vmatprep.subr.bf16.mxu0 %v103
  %990 = vmatpush1.bf16.msra.mxu0 %v102
  %991 = vmatprep.subr.bf16.mxu0 0
  %992 = vmatpush1.bf16.msra.mxu0 0
  %993 = vmatprep.subr.bf16.mxu0 0
  %994 = vmatpush1.bf16.msra.mxu0 0
  %995 = vmatprep.subr.bf16.mxu0 0
  %996 = vmatpush1.bf16.msra.mxu0 0
  %997 = vmatprep.subr.bf16.mxu0 0
  %998 = vmatpush1.bf16.msra.mxu0 0
  %999 = vmatprep.subr.bf16.mxu0 0
  %1000 = vmatpush1.bf16.msra.mxu0 0
  %1001 = vmatprep.subr.bf16.mxu0 0
  %1002 = vmatpush1.bf16.msra.mxu0 0
  %1003 = vmatprep.subr.bf16.mxu0 0
  %1004 = vmatpush1.bf16.msra.mxu0 0
  %1005 = vmatprep.subr.bf16.mxu0 0
  %1006 = vmatpush1.bf16.msra.mxu0 0
  %1007 = vmatprep.subr.bf16.mxu0 0
  %1008 = vmatpush1.bf16.msra.mxu0 0
  %1009 = vmatprep.subr.bf16.mxu0 0
  %1010 = vmatpush1.bf16.msra.mxu0 0
  %1011 = vmatprep.subr.bf16.mxu0 0
  %1012 = vmatpush1.bf16.msra.mxu0 0
  %1013 = vmatprep.subr.bf16.mxu0 0
  %1014 = vmatpush1.bf16.msra.mxu0 0
  %1015 = vmatprep.mubr.bf16.mxu0 0
  %1016 = vmatmul.mubr.bf16.gmra.mrb[0].mxu0 %v981
  %v1017 = vpop.f32.mrb[0].mxu0
  %v1018 = vadd.f32 0.0, %v1017
  %v1019 = vpop.f32.mrb[0].mxu0
  %v1020 = vadd.f32 0.0, %v1019
  %v1021 = vpop.f32.mrb[0].mxu0
  %v1022 = vpop.f32.mrb[0].mxu0
  %1023 = vdwg.mxu0
  %s1024 = scalar_lea.vmem %s0, 56
  %v1025 = vld [vmem:[%s1024] sm:$0xff]
  %v1026 = vadd.f32 %v1025, %v1018
  %s1027 = scalar_lea.vmem %s42, 64
  %v1028 = vld [vmem:[%s1027] sm:$0xff]
  %v1029 = vadd.f32 %v1028, %v1020
  %v1030 = vxor.u32 %v1026, 2147483648
  %v1031 = vmul.f32 %v1030, 1.442695
  %v1032 = vpow.pop %v1031
  %v1033 = vadd.f32 %v1032, 1.0
  %v1034 = vrcp.pop %v1033
  %v1035 = vmul.f32 1.0, %v1034
  %v1036 = vtanh.pop %v1026
  %1038 = vrot.lane.b32.xlu0 %v978, 32
  %v1039 = vpop.permute.xlu0 %1038
  %v1041 = vmul.f32 %v1035, %v1039
  %1043 = vrot.lane.b32.xlu0 %v1036, 64
  %v1044 = vpop.permute.xlu0 %1043
  %v1046 = vmul.f32 %v1035, %v1044
  %1048 = vrot.lane.b32.xlu0 %v1046, 32
  %v1049 = vpop.permute.xlu0 %1048
  %v1051 = vadd.f32 %v1041, %v1049
  %v1052 = vtanh.pop %v1051
  %1054 = vrot.lane.b32.xlu0 %v1052, 64
  %v1055 = vpop.permute.xlu0 %1054
  %v1057 = vmul.f32 %v1035, %v1055
  %v1058 = vxor.u32 %v1029, 2147483648
  %v1059 = vmul.f32 %v1058, 1.442695
  %v1060 = vpow.pop %v1059
  %v1061 = vadd.f32 %v1060, 1.0
  %v1062 = vrcp.pop %v1061
  %v1063 = vmul.f32 1.0, %v1062
  %v1064 = vtanh.pop %v1029
  %v1065 = vmul.f32 %v1063, %v978
  %1067 = vrot.lane.b32.xlu0 %v1064, 64
  %v1068 = vpop.permute.xlu0 %1067
  %v1070 = vmul.f32 %v1063, %v1068
  %1072 = vrot.lane.b32.xlu0 %v1070, 32
  %v1073 = vpop.permute.xlu0 %1072
  %v1075 = vadd.f32 %v1065, %v1073
  %v1076 = vtanh.pop %v1075
  %1078 = vrot.lane.b32.xlu0 %v1076, 64
  %v1079 = vpop.permute.xlu0 %1078
  %v1081 = vmul.f32 %v1063, %v1079
  %1083 = vrot.lane.b32.xlu0 %v1057, 32
  %v1084 = vpop.permute.xlu0 %1083
  %s1086 = scalar_lea.vmem %s3, 56
  %1087 = vst.msk [vmem:[%s1086] sm:$0xff] %vm218, %v1084
  %1089 = vrot.lane.b32.xlu0 %v1081, 32
  %v1090 = vpop.permute.xlu0 %1089
  %s1092 = scalar_lea.vmem %s50, 64
  %1093 = vst.msk [vmem:[%s1092] sm:$0xff] %vm218, %v1090
  %1094 = vrot.lane.b32.xlu0 %v1081, 64
  %v1095 = vpop.permute.xlu0 %1094
  %v1097 = vsel %vm218, %v1084, %v1095
  %1099 = vrot.lane.b32.xlu0 %v1051, 96
  %v1100 = vpop.permute.xlu0 %1099
  %v1102 = vsel %vm218, %v1100, %v1075
  %v1103 = vpack.c.bf16 %v1097, %v1097
  %v1105 = vsel %vm112, %v1103, 0
  %1107 = vmatprep.subr.bf16.mxu0 %v97
  %1108 = vmatpush1.bf16.msra.mxu0 %v96
  %1109 = vmatprep.subr.bf16.mxu0 %v99
  %1110 = vmatpush1.bf16.msra.mxu0 %v98
  %1111 = vmatprep.subr.bf16.mxu0 %v101
  %1112 = vmatpush1.bf16.msra.mxu0 %v100
  %1113 = vmatprep.subr.bf16.mxu0 %v103
  %1114 = vmatpush1.bf16.msra.mxu0 %v102
  %1115 = vmatprep.subr.bf16.mxu0 0
  %1116 = vmatpush1.bf16.msra.mxu0 0
  %1117 = vmatprep.subr.bf16.mxu0 0
  %1118 = vmatpush1.bf16.msra.mxu0 0
  %1119 = vmatprep.subr.bf16.mxu0 0
  %1120 = vmatpush1.bf16.msra.mxu0 0
  %1121 = vmatprep.subr.bf16.mxu0 0
  %1122 = vmatpush1.bf16.msra.mxu0 0
  %1123 = vmatprep.subr.bf16.mxu0 0
  %1124 = vmatpush1.bf16.msra.mxu0 0
  %1125 = vmatprep.subr.bf16.mxu0 0
  %1126 = vmatpush1.bf16.msra.mxu0 0
  %1127 = vmatprep.subr.bf16.mxu0 0
  %1128 = vmatpush1.bf16.msra.mxu0 0
  %1129 = vmatprep.subr.bf16.mxu0 0
  %1130 = vmatpush1.bf16.msra.mxu0 0
  %1131 = vmatprep.subr.bf16.mxu0 0
  %1132 = vmatpush1.bf16.msra.mxu0 0
  %1133 = vmatprep.subr.bf16.mxu0 0
  %1134 = vmatpush1.bf16.msra.mxu0 0
  %1135 = vmatprep.subr.bf16.mxu0 0
  %1136 = vmatpush1.bf16.msra.mxu0 0
  %1137 = vmatprep.subr.bf16.mxu0 0
  %1138 = vmatpush1.bf16.msra.mxu0 0
  %1139 = vmatprep.mubr.bf16.mxu0 0
  %1140 = vmatmul.mubr.bf16.gmra.mrb[0].mxu0 %v1105
  %v1141 = vpop.f32.mrb[0].mxu0
  %v1142 = vadd.f32 0.0, %v1141
  %v1143 = vpop.f32.mrb[0].mxu0
  %v1144 = vadd.f32 0.0, %v1143
  %v1145 = vpop.f32.mrb[0].mxu0
  %v1146 = vpop.f32.mrb[0].mxu0
  %1147 = vdwg.mxu0
  %s1148 = scalar_lea.vmem %s0, 64
  %v1149 = vld [vmem:[%s1148] sm:$0xff]
  %v1150 = vadd.f32 %v1149, %v1142
  %s1151 = scalar_lea.vmem %s42, 56
  %v1152 = vld [vmem:[%s1151] sm:$0xff]
  %v1153 = vadd.f32 %v1152, %v1144
  %v1154 = vxor.u32 %v1150, 2147483648
  %v1155 = vmul.f32 %v1154, 1.442695
  %v1156 = vpow.pop %v1155
  %v1157 = vadd.f32 %v1156, 1.0
  %v1158 = vrcp.pop %v1157
  %v1159 = vmul.f32 1.0, %v1158
  %v1160 = vtanh.pop %v1150
  %1162 = vrot.lane.b32.xlu0 %v1102, 32
  %v1163 = vpop.permute.xlu0 %1162
  %v1165 = vmul.f32 %v1159, %v1163
  %1167 = vrot.lane.b32.xlu0 %v1160, 64
  %v1168 = vpop.permute.xlu0 %1167
  %v1170 = vmul.f32 %v1159, %v1168
  %1172 = vrot.lane.b32.xlu0 %v1170, 32
  %v1173 = vpop.permute.xlu0 %1172
  %v1175 = vadd.f32 %v1165, %v1173
  %v1176 = vtanh.pop %v1175
  %1178 = vrot.lane.b32.xlu0 %v1176, 64
  %v1179 = vpop.permute.xlu0 %1178
  %v1181 = vmul.f32 %v1159, %v1179
  %v1182 = vxor.u32 %v1153, 2147483648
  %v1183 = vmul.f32 %v1182, 1.442695
  %v1184 = vpow.pop %v1183
  %v1185 = vadd.f32 %v1184, 1.0
  %v1186 = vrcp.pop %v1185
  %v1187 = vmul.f32 1.0, %v1186
  %v1188 = vtanh.pop %v1153
  %v1189 = vmul.f32 %v1187, %v1102
  %1191 = vrot.lane.b32.xlu0 %v1188, 64
  %v1192 = vpop.permute.xlu0 %1191
  %v1194 = vmul.f32 %v1187, %v1192
  %1196 = vrot.lane.b32.xlu0 %v1194, 32
  %v1197 = vpop.permute.xlu0 %1196
  %v1199 = vadd.f32 %v1189, %v1197
  %v1200 = vtanh.pop %v1199
  %1202 = vrot.lane.b32.xlu0 %v1200, 64
  %v1203 = vpop.permute.xlu0 %1202
  %v1205 = vmul.f32 %v1187, %v1203
  %1207 = vrot.lane.b32.xlu0 %v1181, 32
  %v1208 = vpop.permute.xlu0 %1207
  %s1210 = scalar_lea.vmem %s3, 64
  %1211 = vst.msk [vmem:[%s1210] sm:$0xff] %vm218, %v1208
  %1213 = vrot.lane.b32.xlu0 %v1205, 32
  %v1214 = vpop.permute.xlu0 %1213
  %s1216 = scalar_lea.vmem %s50, 56
  %1217 = vst.msk [vmem:[%s1216] sm:$0xff] %vm218, %v1214
  %1218 = vrot.lane.b32.xlu0 %v1205, 64
  %v1219 = vpop.permute.xlu0 %1218
  %v1221 = vsel %vm218, %v1208, %v1219
  %1223 = vrot.lane.b32.xlu0 %v1175, 96
  %v1224 = vpop.permute.xlu0 %1223
  %v1226 = vsel %vm218, %v1224, %v1199
  %v1227 = vpack.c.bf16 %v1221, %v1221
  %v1229 = vsel %vm112, %v1227, 0
  %1231 = vmatprep.subr.bf16.mxu0 %v97
  %1232 = vmatpush1.bf16.msra.mxu0 %v96
  %1233 = vmatprep.subr.bf16.mxu0 %v99
  %1234 = vmatpush1.bf16.msra.mxu0 %v98
  %1235 = vmatprep.subr.bf16.mxu0 %v101
  %1236 = vmatpush1.bf16.msra.mxu0 %v100
  %1237 = vmatprep.subr.bf16.mxu0 %v103
  %1238 = vmatpush1.bf16.msra.mxu0 %v102
  %1239 = vmatprep.subr.bf16.mxu0 0
  %1240 = vmatpush1.bf16.msra.mxu0 0
  %1241 = vmatprep.subr.bf16.mxu0 0
  %1242 = vmatpush1.bf16.msra.mxu0 0
  %1243 = vmatprep.subr.bf16.mxu0 0
  %1244 = vmatpush1.bf16.msra.mxu0 0
  %1245 = vmatprep.subr.bf16.mxu0 0
  %1246 = vmatpush1.bf16.msra.mxu0 0
  %1247 = vmatprep.subr.bf16.mxu0 0
  %1248 = vmatpush1.bf16.msra.mxu0 0
  %1249 = vmatprep.subr.bf16.mxu0 0
  %1250 = vmatpush1.bf16.msra.mxu0 0
  %1251 = vmatprep.subr.bf16.mxu0 0
  %1252 = vmatpush1.bf16.msra.mxu0 0
  %1253 = vmatprep.subr.bf16.mxu0 0
  %1254 = vmatpush1.bf16.msra.mxu0 0
  %1255 = vmatprep.subr.bf16.mxu0 0
  %1256 = vmatpush1.bf16.msra.mxu0 0
  %1257 = vmatprep.subr.bf16.mxu0 0
  %1258 = vmatpush1.bf16.msra.mxu0 0
  %1259 = vmatprep.subr.bf16.mxu0 0
  %1260 = vmatpush1.bf16.msra.mxu0 0
  %1261 = vmatprep.subr.bf16.mxu0 0
  %1262 = vmatpush1.bf16.msra.mxu0 0
  %1263 = vmatprep.mubr.bf16.mxu0 0
  %1264 = vmatmul.mubr.bf16.gmra.mrb[0].mxu0 %v1229
  %v1265 = vpop.f32.mrb[0].mxu0
  %v1266 = vadd.f32 0.0, %v1265
  %v1267 = vpop.f32.mrb[0].mxu0
  %v1268 = vadd.f32 0.0, %v1267
  %v1269 = vpop.f32.mrb[0].mxu0
  %v1270 = vpop.f32.mrb[0].mxu0
  %1271 = vdwg.mxu0
  %s1272 = scalar_lea.vmem %s0, 72
  %v1273 = vld [vmem:[%s1272] sm:$0xff]
  %v1274 = vadd.f32 %v1273, %v1266
  %s1275 = scalar_lea.vmem %s42, 48
  %v1276 = vld [vmem:[%s1275] sm:$0xff]
  %v1277 = vadd.f32 %v1276, %v1268
  %v1278 = vxor.u32 %v1274, 2147483648
  %v1279 = vmul.f32 %v1278, 1.442695
  %v1280 = vpow.pop %v1279
  %v1281 = vadd.f32 %v1280, 1.0
  %v1282 = vrcp.pop %v1281
  %v1283 = vmul.f32 1.0, %v1282
  %v1284 = vtanh.pop %v1274
  %1286 = vrot.lane.b32.xlu0 %v1226, 32
  %v1287 = vpop.permute.xlu0 %1286
  %v1289 = vmul.f32 %v1283, %v1287
  %1291 = vrot.lane.b32.xlu0 %v1284, 64
  %v1292 = vpop.permute.xlu0 %1291
  %v1294 = vmul.f32 %v1283, %v1292
  %1296 = vrot.lane.b32.xlu0 %v1294, 32
  %v1297 = vpop.permute.xlu0 %1296
  %v1299 = vadd.f32 %v1289, %v1297
  %v1300 = vtanh.pop %v1299
  %1302 = vrot.lane.b32.xlu0 %v1300, 64
  %v1303 = vpop.permute.xlu0 %1302
  %v1305 = vmul.f32 %v1283, %v1303
  %v1306 = vxor.u32 %v1277, 2147483648
  %v1307 = vmul.f32 %v1306, 1.442695
  %v1308 = vpow.pop %v1307
  %v1309 = vadd.f32 %v1308, 1.0
  %v1310 = vrcp.pop %v1309
  %v1311 = vmul.f32 1.0, %v1310
  %v1312 = vtanh.pop %v1277
  %v1313 = vmul.f32 %v1311, %v1226
  %1315 = vrot.lane.b32.xlu0 %v1312, 64
  %v1316 = vpop.permute.xlu0 %1315
  %v1318 = vmul.f32 %v1311, %v1316
  %1320 = vrot.lane.b32.xlu0 %v1318, 32
  %v1321 = vpop.permute.xlu0 %1320
  %v1323 = vadd.f32 %v1313, %v1321
  %v1324 = vtanh.pop %v1323
  %1326 = vrot.lane.b32.xlu0 %v1324, 64
  %v1327 = vpop.permute.xlu0 %1326
  %v1329 = vmul.f32 %v1311, %v1327
  %1331 = vrot.lane.b32.xlu0 %v1305, 32
  %v1332 = vpop.permute.xlu0 %1331
  %s1334 = scalar_lea.vmem %s3, 72
  %1335 = vst.msk [vmem:[%s1334] sm:$0xff] %vm218, %v1332
  %1337 = vrot.lane.b32.xlu0 %v1329, 32
  %v1338 = vpop.permute.xlu0 %1337
  %s1340 = scalar_lea.vmem %s50, 48
  %1341 = vst.msk [vmem:[%s1340] sm:$0xff] %vm218, %v1338
  %1342 = vrot.lane.b32.xlu0 %v1329, 64
  %v1343 = vpop.permute.xlu0 %1342
  %v1345 = vsel %vm218, %v1332, %v1343
  %1347 = vrot.lane.b32.xlu0 %v1299, 96
  %v1348 = vpop.permute.xlu0 %1347
  %v1350 = vsel %vm218, %v1348, %v1323
  %v1351 = vpack.c.bf16 %v1345, %v1345
  %v1353 = vsel %vm112, %v1351, 0
  %1355 = vmatprep.subr.bf16.mxu0 %v97
  %1356 = vmatpush1.bf16.msra.mxu0 %v96
  %1357 = vmatprep.subr.bf16.mxu0 %v99
  %1358 = vmatpush1.bf16.msra.mxu0 %v98
  %1359 = vmatprep.subr.bf16.mxu0 %v101
  %1360 = vmatpush1.bf16.msra.mxu0 %v100
  %1361 = vmatprep.subr.bf16.mxu0 %v103
  %1362 = vmatpush1.bf16.msra.mxu0 %v102
  %1363 = vmatprep.subr.bf16.mxu0 0
  %1364 = vmatpush1.bf16.msra.mxu0 0
  %1365 = vmatprep.subr.bf16.mxu0 0
  %1366 = vmatpush1.bf16.msra.mxu0 0
  %1367 = vmatprep.subr.bf16.mxu0 0
  %1368 = vmatpush1.bf16.msra.mxu0 0
  %1369 = vmatprep.subr.bf16.mxu0 0
  %1370 = vmatpush1.bf16.msra.mxu0 0
  %1371 = vmatprep.subr.bf16.mxu0 0
  %1372 = vmatpush1.bf16.msra.mxu0 0
  %1373 = vmatprep.subr.bf16.mxu0 0
  %1374 = vmatpush1.bf16.msra.mxu0 0
  %1375 = vmatprep.subr.bf16.mxu0 0
  %1376 = vmatpush1.bf16.msra.mxu0 0
  %1377 = vmatprep.subr.bf16.mxu0 0
  %1378 = vmatpush1.bf16.msra.mxu0 0
  %1379 = vmatprep.subr.bf16.mxu0 0
  %1380 = vmatpush1.bf16.msra.mxu0 0
  %1381 = vmatprep.subr.bf16.mxu0 0
  %1382 = vmatpush1.bf16.msra.mxu0 0
  %1383 = vmatprep.subr.bf16.mxu0 0
  %1384 = vmatpush1.bf16.msra.mxu0 0
  %1385 = vmatprep.subr.bf16.mxu0 0
  %1386 = vmatpush1.bf16.msra.mxu0 0
  %1387 = vmatprep.mubr.bf16.mxu0 0
  %1388 = vmatmul.mubr.bf16.gmra.mrb[0].mxu0 %v1353
  %v1389 = vpop.f32.mrb[0].mxu0
  %v1390 = vadd.f32 0.0, %v1389
  %v1391 = vpop.f32.mrb[0].mxu0
  %v1392 = vadd.f32 0.0, %v1391
  %v1393 = vpop.f32.mrb[0].mxu0
  %v1394 = vpop.f32.mrb[0].mxu0
  %1395 = vdwg.mxu0
  %s1396 = scalar_lea.vmem %s0, 80
  %v1397 = vld [vmem:[%s1396] sm:$0xff]
  %v1398 = vadd.f32 %v1397, %v1390
  %s1399 = scalar_lea.vmem %s42, 40
  %v1400 = vld [vmem:[%s1399] sm:$0xff]
  %v1401 = vadd.f32 %v1400, %v1392
  %v1402 = vxor.u32 %v1398, 2147483648
  %v1403 = vmul.f32 %v1402, 1.442695
  %v1404 = vpow.pop %v1403
  %v1405 = vadd.f32 %v1404, 1.0
  %v1406 = vrcp.pop %v1405
  %v1407 = vmul.f32 1.0, %v1406
  %v1408 = vtanh.pop %v1398
  %1410 = vrot.lane.b32.xlu0 %v1350, 32
  %v1411 = vpop.permute.xlu0 %1410
  %v1413 = vmul.f32 %v1407, %v1411
  %1415 = vrot.lane.b32.xlu0 %v1408, 64
  %v1416 = vpop.permute.xlu0 %1415
  %v1418 = vmul.f32 %v1407, %v1416
  %1420 = vrot.lane.b32.xlu0 %v1418, 32
  %v1421 = vpop.permute.xlu0 %1420
  %v1423 = vadd.f32 %v1413, %v1421
  %v1424 = vtanh.pop %v1423
  %1426 = vrot.lane.b32.xlu0 %v1424, 64
  %v1427 = vpop.permute.xlu0 %1426
  %v1429 = vmul.f32 %v1407, %v1427
  %v1430 = vxor.u32 %v1401, 2147483648
  %v1431 = vmul.f32 %v1430, 1.442695
  %v1432 = vpow.pop %v1431
  %v1433 = vadd.f32 %v1432, 1.0
  %v1434 = vrcp.pop %v1433
  %v1435 = vmul.f32 1.0, %v1434
  %v1436 = vtanh.pop %v1401
  %v1437 = vmul.f32 %v1435, %v1350
  %1439 = vrot.lane.b32.xlu0 %v1436, 64
  %v1440 = vpop.permute.xlu0 %1439
  %v1442 = vmul.f32 %v1435, %v1440
  %1444 = vrot.lane.b32.xlu0 %v1442, 32
  %v1445 = vpop.permute.xlu0 %1444
  %v1447 = vadd.f32 %v1437, %v1445
  %v1448 = vtanh.pop %v1447
  %1450 = vrot.lane.b32.xlu0 %v1448, 64
  %v1451 = vpop.permute.xlu0 %1450
  %v1453 = vmul.f32 %v1435, %v1451
  %1455 = vrot.lane.b32.xlu0 %v1429, 32
  %v1456 = vpop.permute.xlu0 %1455
  %s1458 = scalar_lea.vmem %s3, 80
  %1459 = vst.msk [vmem:[%s1458] sm:$0xff] %vm218, %v1456
  %1461 = vrot.lane.b32.xlu0 %v1453, 32
  %v1462 = vpop.permute.xlu0 %1461
  %s1464 = scalar_lea.vmem %s50, 40
  %1465 = vst.msk [vmem:[%s1464] sm:$0xff] %vm218, %v1462
  %1466 = vrot.lane.b32.xlu0 %v1453, 64
  %v1467 = vpop.permute.xlu0 %1466
  %v1469 = vsel %vm218, %v1456, %v1467
  %1471 = vrot.lane.b32.xlu0 %v1423, 96
  %v1472 = vpop.permute.xlu0 %1471
  %v1474 = vsel %vm218, %v1472, %v1447
  %v1475 = vpack.c.bf16 %v1469, %v1469
  %v1477 = vsel %vm112, %v1475, 0
  %1479 = vmatprep.subr.bf16.mxu0 %v97
  %1480 = vmatpush1.bf16.msra.mxu0 %v96
  %1481 = vmatprep.subr.bf16.mxu0 %v99
  %1482 = vmatpush1.bf16.msra.mxu0 %v98
  %1483 = vmatprep.subr.bf16.mxu0 %v101
  %1484 = vmatpush1.bf16.msra.mxu0 %v100
  %1485 = vmatprep.subr.bf16.mxu0 %v103
  %1486 = vmatpush1.bf16.msra.mxu0 %v102
  %1487 = vmatprep.subr.bf16.mxu0 0
  %1488 = vmatpush1.bf16.msra.mxu0 0
  %1489 = vmatprep.subr.bf16.mxu0 0
  %1490 = vmatpush1.bf16.msra.mxu0 0
  %1491 = vmatprep.subr.bf16.mxu0 0
  %1492 = vmatpush1.bf16.msra.mxu0 0
  %1493 = vmatprep.subr.bf16.mxu0 0
  %1494 = vmatpush1.bf16.msra.mxu0 0
  %1495 = vmatprep.subr.bf16.mxu0 0
  %1496 = vmatpush1.bf16.msra.mxu0 0
  %1497 = vmatprep.subr.bf16.mxu0 0
  %1498 = vmatpush1.bf16.msra.mxu0 0
  %1499 = vmatprep.subr.bf16.mxu0 0
  %1500 = vmatpush1.bf16.msra.mxu0 0
  %1501 = vmatprep.subr.bf16.mxu0 0
  %1502 = vmatpush1.bf16.msra.mxu0 0
  %1503 = vmatprep.subr.bf16.mxu0 0
  %1504 = vmatpush1.bf16.msra.mxu0 0
  %1505 = vmatprep.subr.bf16.mxu0 0
  %1506 = vmatpush1.bf16.msra.mxu0 0
  %1507 = vmatprep.subr.bf16.mxu0 0
  %1508 = vmatpush1.bf16.msra.mxu0 0
  %1509 = vmatprep.subr.bf16.mxu0 0
  %1510 = vmatpush1.bf16.msra.mxu0 0
  %1511 = vmatprep.mubr.bf16.mxu0 0
  %1512 = vmatmul.mubr.bf16.gmra.mrb[0].mxu0 %v1477
  %v1513 = vpop.f32.mrb[0].mxu0
  %v1514 = vadd.f32 0.0, %v1513
  %v1515 = vpop.f32.mrb[0].mxu0
  %v1516 = vadd.f32 0.0, %v1515
  %v1517 = vpop.f32.mrb[0].mxu0
  %v1518 = vpop.f32.mrb[0].mxu0
  %1519 = vdwg.mxu0
  %s1520 = scalar_lea.vmem %s0, 88
  %v1521 = vld [vmem:[%s1520] sm:$0xff]
  %v1522 = vadd.f32 %v1521, %v1514
  %s1523 = scalar_lea.vmem %s42, 32
  %v1524 = vld [vmem:[%s1523] sm:$0xff]
  %v1525 = vadd.f32 %v1524, %v1516
  %v1526 = vxor.u32 %v1522, 2147483648
  %v1527 = vmul.f32 %v1526, 1.442695
  %v1528 = vpow.pop %v1527
  %v1529 = vadd.f32 %v1528, 1.0
  %v1530 = vrcp.pop %v1529
  %v1531 = vmul.f32 1.0, %v1530
  %v1532 = vtanh.pop %v1522
  %1534 = vrot.lane.b32.xlu0 %v1474, 32
  %v1535 = vpop.permute.xlu0 %1534
  %v1537 = vmul.f32 %v1531, %v1535
  %1539 = vrot.lane.b32.xlu0 %v1532, 64
  %v1540 = vpop.permute.xlu0 %1539
  %v1542 = vmul.f32 %v1531, %v1540
  %1544 = vrot.lane.b32.xlu0 %v1542, 32
  %v1545 = vpop.permute.xlu0 %1544
  %v1547 = vadd.f32 %v1537, %v1545
  %v1548 = vtanh.pop %v1547
  %1550 = vrot.lane.b32.xlu0 %v1548, 64
  %v1551 = vpop.permute.xlu0 %1550
  %v1553 = vmul.f32 %v1531, %v1551
  %v1554 = vxor.u32 %v1525, 2147483648
  %v1555 = vmul.f32 %v1554, 1.442695
  %v1556 = vpow.pop %v1555
  %v1557 = vadd.f32 %v1556, 1.0
  %v1558 = vrcp.pop %v1557
  %v1559 = vmul.f32 1.0, %v1558
  %v1560 = vtanh.pop %v1525
  %v1561 = vmul.f32 %v1559, %v1474
  %1563 = vrot.lane.b32.xlu0 %v1560, 64
  %v1564 = vpop.permute.xlu0 %1563
  %v1566 = vmul.f32 %v1559, %v1564
  %1568 = vrot.lane.b32.xlu0 %v1566, 32
  %v1569 = vpop.permute.xlu0 %1568
  %v1571 = vadd.f32 %v1561, %v1569
  %v1572 = vtanh.pop %v1571
  %1574 = vrot.lane.b32.xlu0 %v1572, 64
  %v1575 = vpop.permute.xlu0 %1574
  %v1577 = vmul.f32 %v1559, %v1575
  %1579 = vrot.lane.b32.xlu0 %v1553, 32
  %v1580 = vpop.permute.xlu0 %1579
  %s1582 = scalar_lea.vmem %s3, 88
  %1583 = vst.msk [vmem:[%s1582] sm:$0xff] %vm218, %v1580
  %1585 = vrot.lane.b32.xlu0 %v1577, 32
  %v1586 = vpop.permute.xlu0 %1585
  %s1588 = scalar_lea.vmem %s50, 32
  %1589 = vst.msk [vmem:[%s1588] sm:$0xff] %vm218, %v1586
  %1590 = vrot.lane.b32.xlu0 %v1577, 64
  %v1591 = vpop.permute.xlu0 %1590
  %v1593 = vsel %vm218, %v1580, %v1591
  %1595 = vrot.lane.b32.xlu0 %v1547, 96
  %v1596 = vpop.permute.xlu0 %1595
  %v1598 = vsel %vm218, %v1596, %v1571
  %v1599 = vpack.c.bf16 %v1593, %v1593
  %v1601 = vsel %vm112, %v1599, 0
  %1603 = vmatprep.subr.bf16.mxu0 %v97
  %1604 = vmatpush1.bf16.msra.mxu0 %v96
  %1605 = vmatprep.subr.bf16.mxu0 %v99
  %1606 = vmatpush1.bf16.msra.mxu0 %v98
  %1607 = vmatprep.subr.bf16.mxu0 %v101
  %1608 = vmatpush1.bf16.msra.mxu0 %v100
  %1609 = vmatprep.subr.bf16.mxu0 %v103
  %1610 = vmatpush1.bf16.msra.mxu0 %v102
  %1611 = vmatprep.subr.bf16.mxu0 0
  %1612 = vmatpush1.bf16.msra.mxu0 0
  %1613 = vmatprep.subr.bf16.mxu0 0
  %1614 = vmatpush1.bf16.msra.mxu0 0
  %1615 = vmatprep.subr.bf16.mxu0 0
  %1616 = vmatpush1.bf16.msra.mxu0 0
  %1617 = vmatprep.subr.bf16.mxu0 0
  %1618 = vmatpush1.bf16.msra.mxu0 0
  %1619 = vmatprep.subr.bf16.mxu0 0
  %1620 = vmatpush1.bf16.msra.mxu0 0
  %1621 = vmatprep.subr.bf16.mxu0 0
  %1622 = vmatpush1.bf16.msra.mxu0 0
  %1623 = vmatprep.subr.bf16.mxu0 0
  %1624 = vmatpush1.bf16.msra.mxu0 0
  %1625 = vmatprep.subr.bf16.mxu0 0
  %1626 = vmatpush1.bf16.msra.mxu0 0
  %1627 = vmatprep.subr.bf16.mxu0 0
  %1628 = vmatpush1.bf16.msra.mxu0 0
  %1629 = vmatprep.subr.bf16.mxu0 0
  %1630 = vmatpush1.bf16.msra.mxu0 0
  %1631 = vmatprep.subr.bf16.mxu0 0
  %1632 = vmatpush1.bf16.msra.mxu0 0
  %1633 = vmatprep.subr.bf16.mxu0 0
  %1634 = vmatpush1.bf16.msra.mxu0 0
  %1635 = vmatprep.mubr.bf16.mxu0 0
  %1636 = vmatmul.mubr.bf16.gmra.mrb[0].mxu0 %v1601
  %v1637 = vpop.f32.mrb[0].mxu0
  %v1638 = vadd.f32 0.0, %v1637
  %v1639 = vpop.f32.mrb[0].mxu0
  %v1640 = vadd.f32 0.0, %v1639
  %v1641 = vpop.f32.mrb[0].mxu0
  %v1642 = vpop.f32.mrb[0].mxu0
  %1643 = vdwg.mxu0
  %s1644 = scalar_lea.vmem %s0, 96
  %v1645 = vld [vmem:[%s1644] sm:$0xff]
  %v1646 = vadd.f32 %v1645, %v1638
  %s1647 = scalar_lea.vmem %s42, 24
  %v1648 = vld [vmem:[%s1647] sm:$0xff]
  %v1649 = vadd.f32 %v1648, %v1640
  %v1650 = vxor.u32 %v1646, 2147483648
  %v1651 = vmul.f32 %v1650, 1.442695
  %v1652 = vpow.pop %v1651
  %v1653 = vadd.f32 %v1652, 1.0
  %v1654 = vrcp.pop %v1653
  %v1655 = vmul.f32 1.0, %v1654
  %v1656 = vtanh.pop %v1646
  %1658 = vrot.lane.b32.xlu0 %v1598, 32
  %v1659 = vpop.permute.xlu0 %1658
  %v1661 = vmul.f32 %v1655, %v1659
  %1663 = vrot.lane.b32.xlu0 %v1656, 64
  %v1664 = vpop.permute.xlu0 %1663
  %v1666 = vmul.f32 %v1655, %v1664
  %1668 = vrot.lane.b32.xlu0 %v1666, 32
  %v1669 = vpop.permute.xlu0 %1668
  %v1671 = vadd.f32 %v1661, %v1669
  %v1672 = vtanh.pop %v1671
  %1674 = vrot.lane.b32.xlu0 %v1672, 64
  %v1675 = vpop.permute.xlu0 %1674
  %v1677 = vmul.f32 %v1655, %v1675
  %v1678 = vxor.u32 %v1649, 2147483648
  %v1679 = vmul.f32 %v1678, 1.442695
  %v1680 = vpow.pop %v1679
  %v1681 = vadd.f32 %v1680, 1.0
  %v1682 = vrcp.pop %v1681
  %v1683 = vmul.f32 1.0, %v1682
  %v1684 = vtanh.pop %v1649
  %v1685 = vmul.f32 %v1683, %v1598
  %1687 = vrot.lane.b32.xlu0 %v1684, 64
  %v1688 = vpop.permute.xlu0 %1687
  %v1690 = vmul.f32 %v1683, %v1688
  %1692 = vrot.lane.b32.xlu0 %v1690, 32
  %v1693 = vpop.permute.xlu0 %1692
  %v1695 = vadd.f32 %v1685, %v1693
  %v1696 = vtanh.pop %v1695
  %1698 = vrot.lane.b32.xlu0 %v1696, 64
  %v1699 = vpop.permute.xlu0 %1698
  %v1701 = vmul.f32 %v1683, %v1699
  %1703 = vrot.lane.b32.xlu0 %v1677, 32
  %v1704 = vpop.permute.xlu0 %1703
  %s1706 = scalar_lea.vmem %s3, 96
  %1707 = vst.msk [vmem:[%s1706] sm:$0xff] %vm218, %v1704
  %1709 = vrot.lane.b32.xlu0 %v1701, 32
  %v1710 = vpop.permute.xlu0 %1709
  %s1712 = scalar_lea.vmem %s50, 24
  %1713 = vst.msk [vmem:[%s1712] sm:$0xff] %vm218, %v1710
  %1714 = vrot.lane.b32.xlu0 %v1701, 64
  %v1715 = vpop.permute.xlu0 %1714
  %v1717 = vsel %vm218, %v1704, %v1715
  %1719 = vrot.lane.b32.xlu0 %v1671, 96
  %v1720 = vpop.permute.xlu0 %1719
  %v1722 = vsel %vm218, %v1720, %v1695
  %v1723 = vpack.c.bf16 %v1717, %v1717
  %v1725 = vsel %vm112, %v1723, 0
  %1727 = vmatprep.subr.bf16.mxu0 %v97
  %1728 = vmatpush1.bf16.msra.mxu0 %v96
  %1729 = vmatprep.subr.bf16.mxu0 %v99
  %1730 = vmatpush1.bf16.msra.mxu0 %v98
  %1731 = vmatprep.subr.bf16.mxu0 %v101
  %1732 = vmatpush1.bf16.msra.mxu0 %v100
  %1733 = vmatprep.subr.bf16.mxu0 %v103
  %1734 = vmatpush1.bf16.msra.mxu0 %v102
  %1735 = vmatprep.subr.bf16.mxu0 0
  %1736 = vmatpush1.bf16.msra.mxu0 0
  %1737 = vmatprep.subr.bf16.mxu0 0
  %1738 = vmatpush1.bf16.msra.mxu0 0
  %1739 = vmatprep.subr.bf16.mxu0 0
  %1740 = vmatpush1.bf16.msra.mxu0 0
  %1741 = vmatprep.subr.bf16.mxu0 0
  %1742 = vmatpush1.bf16.msra.mxu0 0
  %1743 = vmatprep.subr.bf16.mxu0 0
  %1744 = vmatpush1.bf16.msra.mxu0 0
  %1745 = vmatprep.subr.bf16.mxu0 0
  %1746 = vmatpush1.bf16.msra.mxu0 0
  %1747 = vmatprep.subr.bf16.mxu0 0
  %1748 = vmatpush1.bf16.msra.mxu0 0
  %1749 = vmatprep.subr.bf16.mxu0 0
  %1750 = vmatpush1.bf16.msra.mxu0 0
  %1751 = vmatprep.subr.bf16.mxu0 0
  %1752 = vmatpush1.bf16.msra.mxu0 0
  %1753 = vmatprep.subr.bf16.mxu0 0
  %1754 = vmatpush1.bf16.msra.mxu0 0
  %1755 = vmatprep.subr.bf16.mxu0 0
  %1756 = vmatpush1.bf16.msra.mxu0 0
  %1757 = vmatprep.subr.bf16.mxu0 0
  %1758 = vmatpush1.bf16.msra.mxu0 0
  %1759 = vmatprep.mubr.bf16.mxu0 0
  %1760 = vmatmul.mubr.bf16.gmra.mrb[0].mxu0 %v1725
  %v1761 = vpop.f32.mrb[0].mxu0
  %v1762 = vadd.f32 0.0, %v1761
  %v1763 = vpop.f32.mrb[0].mxu0
  %v1764 = vadd.f32 0.0, %v1763
  %v1765 = vpop.f32.mrb[0].mxu0
  %v1766 = vpop.f32.mrb[0].mxu0
  %1767 = vdwg.mxu0
  %s1768 = scalar_lea.vmem %s0, 104
  %v1769 = vld [vmem:[%s1768] sm:$0xff]
  %v1770 = vadd.f32 %v1769, %v1762
  %s1771 = scalar_lea.vmem %s42, 16
  %v1772 = vld [vmem:[%s1771] sm:$0xff]
  %v1773 = vadd.f32 %v1772, %v1764
  %v1774 = vxor.u32 %v1770, 2147483648
  %v1775 = vmul.f32 %v1774, 1.442695
  %v1776 = vpow.pop %v1775
  %v1777 = vadd.f32 %v1776, 1.0
  %v1778 = vrcp.pop %v1777
  %v1779 = vmul.f32 1.0, %v1778
  %v1780 = vtanh.pop %v1770
  %1782 = vrot.lane.b32.xlu0 %v1722, 32
  %v1783 = vpop.permute.xlu0 %1782
  %v1785 = vmul.f32 %v1779, %v1783
  %1787 = vrot.lane.b32.xlu0 %v1780, 64
  %v1788 = vpop.permute.xlu0 %1787
  %v1790 = vmul.f32 %v1779, %v1788
  %1792 = vrot.lane.b32.xlu0 %v1790, 32
  %v1793 = vpop.permute.xlu0 %1792
  %v1795 = vadd.f32 %v1785, %v1793
  %v1796 = vtanh.pop %v1795
  %1798 = vrot.lane.b32.xlu0 %v1796, 64
  %v1799 = vpop.permute.xlu0 %1798
  %v1801 = vmul.f32 %v1779, %v1799
  %v1802 = vxor.u32 %v1773, 2147483648
  %v1803 = vmul.f32 %v1802, 1.442695
  %v1804 = vpow.pop %v1803
  %v1805 = vadd.f32 %v1804, 1.0
  %v1806 = vrcp.pop %v1805
  %v1807 = vmul.f32 1.0, %v1806
  %v1808 = vtanh.pop %v1773
  %v1809 = vmul.f32 %v1807, %v1722
  %1811 = vrot.lane.b32.xlu0 %v1808, 64
  %v1812 = vpop.permute.xlu0 %1811
  %v1814 = vmul.f32 %v1807, %v1812
  %1816 = vrot.lane.b32.xlu0 %v1814, 32
  %v1817 = vpop.permute.xlu0 %1816
  %v1819 = vadd.f32 %v1809, %v1817
  %v1820 = vtanh.pop %v1819
  %1822 = vrot.lane.b32.xlu0 %v1820, 64
  %v1823 = vpop.permute.xlu0 %1822
  %v1825 = vmul.f32 %v1807, %v1823
  %1827 = vrot.lane.b32.xlu0 %v1801, 32
  %v1828 = vpop.permute.xlu0 %1827
  %s1830 = scalar_lea.vmem %s3, 104
  %1831 = vst.msk [vmem:[%s1830] sm:$0xff] %vm218, %v1828
  %1833 = vrot.lane.b32.xlu0 %v1825, 32
  %v1834 = vpop.permute.xlu0 %1833
  %s1836 = scalar_lea.vmem %s50, 16
  %1837 = vst.msk [vmem:[%s1836] sm:$0xff] %vm218, %v1834
  %1838 = vrot.lane.b32.xlu0 %v1825, 64
  %v1839 = vpop.permute.xlu0 %1838
  %v1841 = vsel %vm218, %v1828, %v1839
  %1843 = vrot.lane.b32.xlu0 %v1795, 96
  %v1844 = vpop.permute.xlu0 %1843
  %v1846 = vsel %vm218, %v1844, %v1819
  %v1847 = vpack.c.bf16 %v1841, %v1841
  %v1849 = vsel %vm112, %v1847, 0
  %1851 = vmatprep.subr.bf16.mxu0 %v97
  %1852 = vmatpush1.bf16.msra.mxu0 %v96
  %1853 = vmatprep.subr.bf16.mxu0 %v99
  %1854 = vmatpush1.bf16.msra.mxu0 %v98
  %1855 = vmatprep.subr.bf16.mxu0 %v101
  %1856 = vmatpush1.bf16.msra.mxu0 %v100
  %1857 = vmatprep.subr.bf16.mxu0 %v103
  %1858 = vmatpush1.bf16.msra.mxu0 %v102
  %1859 = vmatprep.subr.bf16.mxu0 0
  %1860 = vmatpush1.bf16.msra.mxu0 0
  %1861 = vmatprep.subr.bf16.mxu0 0
  %1862 = vmatpush1.bf16.msra.mxu0 0
  %1863 = vmatprep.subr.bf16.mxu0 0
  %1864 = vmatpush1.bf16.msra.mxu0 0
  %1865 = vmatprep.subr.bf16.mxu0 0
  %1866 = vmatpush1.bf16.msra.mxu0 0
  %1867 = vmatprep.subr.bf16.mxu0 0
  %1868 = vmatpush1.bf16.msra.mxu0 0
  %1869 = vmatprep.subr.bf16.mxu0 0
  %1870 = vmatpush1.bf16.msra.mxu0 0
  %1871 = vmatprep.subr.bf16.mxu0 0
  %1872 = vmatpush1.bf16.msra.mxu0 0
  %1873 = vmatprep.subr.bf16.mxu0 0
  %1874 = vmatpush1.bf16.msra.mxu0 0
  %1875 = vmatprep.subr.bf16.mxu0 0
  %1876 = vmatpush1.bf16.msra.mxu0 0
  %1877 = vmatprep.subr.bf16.mxu0 0
  %1878 = vmatpush1.bf16.msra.mxu0 0
  %1879 = vmatprep.subr.bf16.mxu0 0
  %1880 = vmatpush1.bf16.msra.mxu0 0
  %1881 = vmatprep.subr.bf16.mxu0 0
  %1882 = vmatpush1.bf16.msra.mxu0 0
  %1883 = vmatprep.mubr.bf16.mxu0 0
  %1884 = vmatmul.mubr.bf16.gmra.mrb[0].mxu0 %v1849
  %v1885 = vpop.f32.mrb[0].mxu0
  %v1886 = vadd.f32 0.0, %v1885
  %v1887 = vpop.f32.mrb[0].mxu0
  %v1888 = vadd.f32 0.0, %v1887
  %v1889 = vpop.f32.mrb[0].mxu0
  %v1890 = vpop.f32.mrb[0].mxu0
  %1891 = vdwg.mxu0
  %s1892 = scalar_lea.vmem %s0, 112
  %v1893 = vld [vmem:[%s1892] sm:$0xff]
  %v1894 = vadd.f32 %v1893, %v1886
  %s1895 = scalar_lea.vmem %s42, 8
  %v1896 = vld [vmem:[%s1895] sm:$0xff]
  %v1897 = vadd.f32 %v1896, %v1888
  %v1898 = vxor.u32 %v1894, 2147483648
  %v1899 = vmul.f32 %v1898, 1.442695
  %v1900 = vpow.pop %v1899
  %v1901 = vadd.f32 %v1900, 1.0
  %v1902 = vrcp.pop %v1901
  %v1903 = vmul.f32 1.0, %v1902
  %v1904 = vtanh.pop %v1894
  %1906 = vrot.lane.b32.xlu0 %v1846, 32
  %v1907 = vpop.permute.xlu0 %1906
  %v1909 = vmul.f32 %v1903, %v1907
  %1911 = vrot.lane.b32.xlu0 %v1904, 64
  %v1912 = vpop.permute.xlu0 %1911
  %v1914 = vmul.f32 %v1903, %v1912
  %1916 = vrot.lane.b32.xlu0 %v1914, 32
  %v1917 = vpop.permute.xlu0 %1916
  %v1919 = vadd.f32 %v1909, %v1917
  %v1920 = vtanh.pop %v1919
  %1922 = vrot.lane.b32.xlu0 %v1920, 64
  %v1923 = vpop.permute.xlu0 %1922
  %v1925 = vmul.f32 %v1903, %v1923
  %v1926 = vxor.u32 %v1897, 2147483648
  %v1927 = vmul.f32 %v1926, 1.442695
  %v1928 = vpow.pop %v1927
  %v1929 = vadd.f32 %v1928, 1.0
  %v1930 = vrcp.pop %v1929
  %v1931 = vmul.f32 1.0, %v1930
  %v1932 = vtanh.pop %v1897
  %v1933 = vmul.f32 %v1931, %v1846
  %1935 = vrot.lane.b32.xlu0 %v1932, 64
  %v1936 = vpop.permute.xlu0 %1935
  %v1938 = vmul.f32 %v1931, %v1936
  %1940 = vrot.lane.b32.xlu0 %v1938, 32
  %v1941 = vpop.permute.xlu0 %1940
  %v1943 = vadd.f32 %v1933, %v1941
  %v1944 = vtanh.pop %v1943
  %1946 = vrot.lane.b32.xlu0 %v1944, 64
  %v1947 = vpop.permute.xlu0 %1946
  %v1949 = vmul.f32 %v1931, %v1947
  %1951 = vrot.lane.b32.xlu0 %v1925, 32
  %v1952 = vpop.permute.xlu0 %1951
  %s1954 = scalar_lea.vmem %s3, 112
  %1955 = vst.msk [vmem:[%s1954] sm:$0xff] %vm218, %v1952
  %1957 = vrot.lane.b32.xlu0 %v1949, 32
  %v1958 = vpop.permute.xlu0 %1957
  %s1960 = scalar_lea.vmem %s50, 8
  %1961 = vst.msk [vmem:[%s1960] sm:$0xff] %vm218, %v1958
  %1962 = vrot.lane.b32.xlu0 %v1949, 64
  %v1963 = vpop.permute.xlu0 %1962
  %v1965 = vsel %vm218, %v1952, %v1963
  %1967 = vrot.lane.b32.xlu0 %v1919, 96
  %v1968 = vpop.permute.xlu0 %1967
  %v1970 = vsel %vm218, %v1968, %v1943
  %v1971 = vpack.c.bf16 %v1965, %v1965
  %v1973 = vsel %vm112, %v1971, 0
  %1975 = vmatprep.subr.bf16.mxu0 %v97
  %1976 = vmatpush1.bf16.msra.mxu0 %v96
  %1977 = vmatprep.subr.bf16.mxu0 %v99
  %1978 = vmatpush1.bf16.msra.mxu0 %v98
  %1979 = vmatprep.subr.bf16.mxu0 %v101
  %1980 = vmatpush1.bf16.msra.mxu0 %v100
  %1981 = vmatprep.subr.bf16.mxu0 %v103
  %1982 = vmatpush1.bf16.msra.mxu0 %v102
  %1983 = vmatprep.subr.bf16.mxu0 0
  %1984 = vmatpush1.bf16.msra.mxu0 0
  %1985 = vmatprep.subr.bf16.mxu0 0
  %1986 = vmatpush1.bf16.msra.mxu0 0
  %1987 = vmatprep.subr.bf16.mxu0 0
  %1988 = vmatpush1.bf16.msra.mxu0 0
  %1989 = vmatprep.subr.bf16.mxu0 0
  %1990 = vmatpush1.bf16.msra.mxu0 0
  %1991 = vmatprep.subr.bf16.mxu0 0
  %1992 = vmatpush1.bf16.msra.mxu0 0
  %1993 = vmatprep.subr.bf16.mxu0 0
  %1994 = vmatpush1.bf16.msra.mxu0 0
  %1995 = vmatprep.subr.bf16.mxu0 0
  %1996 = vmatpush1.bf16.msra.mxu0 0
  %1997 = vmatprep.subr.bf16.mxu0 0
  %1998 = vmatpush1.bf16.msra.mxu0 0
  %1999 = vmatprep.subr.bf16.mxu0 0
  %2000 = vmatpush1.bf16.msra.mxu0 0
  %2001 = vmatprep.subr.bf16.mxu0 0
  %2002 = vmatpush1.bf16.msra.mxu0 0
  %2003 = vmatprep.subr.bf16.mxu0 0
  %2004 = vmatpush1.bf16.msra.mxu0 0
  %2005 = vmatprep.subr.bf16.mxu0 0
  %2006 = vmatpush1.bf16.msra.mxu0 0
  %2007 = vmatprep.mubr.bf16.mxu0 0
  %2008 = vmatmul.mubr.bf16.gmra.mrb[0].mxu0 %v1973
  %v2009 = vpop.f32.mrb[0].mxu0
  %v2010 = vadd.f32 0.0, %v2009
  %v2011 = vpop.f32.mrb[0].mxu0
  %v2012 = vadd.f32 0.0, %v2011
  %v2013 = vpop.f32.mrb[0].mxu0
  %v2014 = vpop.f32.mrb[0].mxu0
  %2015 = vdwg.mxu0
  %s2016 = scalar_lea.vmem %s0, 120
  %v2017 = vld [vmem:[%s2016] sm:$0xff]
  %v2018 = vadd.f32 %v2017, %v2010
  %v2019 = vld [vmem:[%s42] sm:$0xff]
  %v2020 = vadd.f32 %v2019, %v2012
  %v2021 = vxor.u32 %v2018, 2147483648
  %v2022 = vmul.f32 %v2021, 1.442695
  %v2023 = vpow.pop %v2022
  %v2024 = vadd.f32 %v2023, 1.0
  %v2025 = vrcp.pop %v2024
  %v2026 = vmul.f32 1.0, %v2025
  %v2027 = vtanh.pop %v2018
  %2029 = vrot.lane.b32.xlu0 %v1970, 32
  %v2030 = vpop.permute.xlu0 %2029
  %v2032 = vmul.f32 %v2026, %v2030
  %2034 = vrot.lane.b32.xlu0 %v2027, 64
  %v2035 = vpop.permute.xlu0 %2034
  %v2037 = vmul.f32 %v2026, %v2035
  %2039 = vrot.lane.b32.xlu0 %v2037, 32
  %v2040 = vpop.permute.xlu0 %2039
  %v2042 = vadd.f32 %v2032, %v2040
  %v2043 = vtanh.pop %v2042
  %2045 = vrot.lane.b32.xlu0 %v2043, 64
  %v2046 = vpop.permute.xlu0 %2045
  %v2048 = vmul.f32 %v2026, %v2046
  %v2049 = vxor.u32 %v2020, 2147483648
  %v2050 = vmul.f32 %v2049, 1.442695
  %v2051 = vpow.pop %v2050
  %v2052 = vadd.f32 %v2051, 1.0
  %v2053 = vrcp.pop %v2052
  %v2054 = vmul.f32 1.0, %v2053
  %v2055 = vtanh.pop %v2020
  %v2056 = vmul.f32 %v2054, %v1970
  %2058 = vrot.lane.b32.xlu0 %v2055, 64
  %v2059 = vpop.permute.xlu0 %2058
  %v2061 = vmul.f32 %v2054, %v2059
  %2063 = vrot.lane.b32.xlu0 %v2061, 32
  %v2064 = vpop.permute.xlu0 %2063
  %v2066 = vadd.f32 %v2056, %v2064
  %v2067 = vtanh.pop %v2066
  %2069 = vrot.lane.b32.xlu0 %v2067, 64
  %v2070 = vpop.permute.xlu0 %2069
  %v2072 = vmul.f32 %v2054, %v2070
  %2074 = vrot.lane.b32.xlu0 %v2048, 32
  %v2075 = vpop.permute.xlu0 %2074
  %s2077 = scalar_lea.vmem %s3, 120
  %2078 = vst.msk [vmem:[%s2077] sm:$0xff] %vm218, %v2075
  %2080 = vrot.lane.b32.xlu0 %v2072, 32
  %v2081 = vpop.permute.xlu0 %2080
  %2083 = vst.msk [vmem:[%s50] sm:$0xff] %vm218, %v2081
  %2084 = vrot.lane.b32.xlu0 %v2072, 64
  %v2085 = vpop.permute.xlu0 %2084
  %v2087 = vsel %vm218, %v2075, %v2085
  %2089 = vrot.lane.b32.xlu0 %v2042, 96
  %v2090 = vpop.permute.xlu0 %2089
  %v2092 = vsel %vm218, %v2090, %v2066
  %2093 = vst.msk [vmem:[#allocation2] sm:$0xff] %vm112, %v2087
  %2094 = vst.msk [vmem:[#allocation3] sm:$0xff] %vm112, %v2092
  // Predicated region
  $region18: #{encoder_forward.2} parent=0 // pred_check
    %p2095 = pneg %p54
  $region19: #{encoder_forward.2} parent=0 // pred_check_branch
    %2097 = sbr.rel (%p2095) target = $region21
  $region20: #{encoder_forward.2} parent=0 // pred_region
    %2098 = vst.msk [vmem:[%s5] sm:$0xff] %vm112, %v2092
  $region21: #{encoder_forward.2} parent=0 // pred_fallthru
    _
  %s2099 = ssub.s32 0, 0
  %s2100 = smul.u32 16, %s2099
  %p2101 = scmp.lt.s32.totalorder %s2100, 15
  %s2102 = scalar_select %p2101, %s2100, 15
  %s2103 = smul.addr %s2102, 8
  %s2104 = scalar_lea.vmem %s4, %s2103
  // Predicated region
  $region22: #{encoder_forward.2} parent=0 // pred_check
    _
  $region23: #{encoder_forward.2} parent=0 // pred_check_branch
    %2106 = sbr.rel (0) target = $region25
  $region24: #{encoder_forward.2} parent=0 // pred_region
    _
  $region25: #{encoder_forward.2} parent=0 // pred_fallthru
    _
  // Predicated region
  $region26: #{encoder_forward.2} parent=0 // pred_check
    _
  $region27: #{encoder_forward.2} parent=0 // pred_check_branch
    %2108 = sbr.rel (0) target = $region29
  $region28: #{encoder_forward.2} parent=0 // pred_region
    %s2109 = ssub.s32 0, 0
    %s2110 = smul.u32 16, %s2109
  $region29: #{encoder_forward.2} parent=0 // pred_fallthru
    _
  // Predicated region
  $region30: #{encoder_forward.2} parent=0 // pred_check
    _
  $region31: #{encoder_forward.2} parent=0 // pred_check_branch
    %2112 = sbr.rel (0) target = $region33
  $region32: #{encoder_forward.2} parent=0 // pred_region
    _
  $region33: #{encoder_forward.2} parent=0 // pred_fallthru
    _
  // Predicated region
  $region34: #{encoder_forward.2} parent=0 // pred_check
    _
  $region35: #{encoder_forward.2} parent=0 // pred_check_branch
    %2114 = sbr.rel (0) target = $region37
  $region36: #{encoder_forward.2} parent=0 // pred_region
    _
  $region37: #{encoder_forward.2} parent=0 // pred_fallthru
    _
  // Predicated region
  $region38: #{encoder_forward.2} parent=0 // pred_check
    _
  $region39: #{encoder_forward.2} parent=0 // pred_check_branch
    %2116 = sbr.rel (0) target = $region41
  $region40: #{encoder_forward.2} parent=0 // pred_region
    %s2117 = ssub.s32 0, 0
    %s2118 = smul.u32 16, %s2117
    %p2119 = scmp.lt.s32.totalorder %s2118, 15
    %s2120 = scalar_select %p2119, %s2118, 15
    %s2121 = smul.addr %s2120, 8
    %s2122 = scalar_lea.vmem %s4, %s2121
  $region41: #{encoder_forward.2} parent=0 // pred_fallthru
    _
  // Predicated region
  $region42: #{encoder_forward.2} parent=0 // pred_check
    _
  $region43: #{encoder_forward.2} parent=0 // pred_check_branch
    %2124 = sbr.rel (0) target = $region45
  $region44: #{encoder_forward.2} parent=0 // pred_region
    _
  $region45: #{encoder_forward.2} parent=0 // pred_fallthru
    _

</llo_original>
